<compile_context>
chip_gen: v7x
topology: tpu7x:2x2x1
jax: 0.10.0
libtpu: 0.0.40
codegen_flags: <defaults>
</compile_context>

<pallas_src>
import functools

import jax
import jax.numpy as jnp
from jax import lax
from jax.experimental import pallas as pl
from jax.experimental.pallas import tpu as pltpu


def _round_up(x, m):
    return (x + m - 1) // m * m


def _choose_group(batch, n):
    """Graphs per grid step: fill the MXU M dim (>=128 rows) but keep >=2 grid
    steps when possible so both v7x TensorCores get work."""
    best = 1
    for g in range(1, batch + 1):
        if batch % g:
            continue
        if g * n > 512:          # keep the per-step row block modest
            break
        best = g
        if g * n >= 128 and batch // g >= 2:
            return g
    return best


def dge_kernel(
    adj_ref, feat_ref, noise_ref,
    w_fg_ref, b_fg_ref,                                   # fused [features_enc | gcn.linear1]
    w_ae_ref, b_ae_ref,                                   # adj_enc
    w_g2_ref, b_g2_ref,                                   # gcn.linear2
    w_mva_a_ref, w_mva_f_ref, w_mva_g_ref, b_mva_ref,     # fused mu|var (lane-padded)
    w_d1_ref, b_d1_ref,                                   # feat_dec[0]
    w_d2_ref, b_d2_ref,                                   # feat_dec[2] (lane-padded)
    packed_out,
    *, n, dim, hf, hd,
):
    f32, bf16 = jnp.float32, jnp.bfloat16
    g_graphs = adj_ref.shape[0]
    gn = g_graphs * n
    pack_w = packed_out.shape[-1]

    adj3 = adj_ref[...]                                   # bf16 (G, n, n)
    adj2 = adj3.reshape(gn, n)
    x = feat_ref[...].reshape(gn, dim)                    # bf16 (G*n, dim)
    noise = noise_ref[...].reshape(gn, hd)                # f32  (G*n, hd)

    # ---- encoder ---------------------------------------------------------
    # features_enc and GCN.linear1 share LHS x: one fused MXU op, lane-split.
    xw = jnp.dot(x, w_fg_ref[...], preferred_element_type=f32) + b_fg_ref[...]
    feat_h = jax.nn.sigmoid(xw[:, :hf])
    gcn = xw[:, hf:]                                      # linear1(x) + bias

    # adj_enc: contraction is only on adj's last dim -> flatten over graphs.
    adj_h = jax.nn.sigmoid(
        jnp.dot(adj2, w_ae_ref[...], preferred_element_type=f32) + b_ae_ref[...])

    # GCN propagation: per-graph adjacency matmuls (batched on the MXU).
    gcn = lax.dot_general(adj3, gcn.astype(bf16).reshape(g_graphs, n, hf),
                          (((2,), (1,)), ((0,), (0,))),
                          preferred_element_type=f32)
    gcn = jnp.maximum(gcn, 0.0).reshape(gn, hf)           # ReLU (dropout = identity)
    gcn = jnp.dot(gcn.astype(bf16), w_g2_ref[...],
                  preferred_element_type=f32) + b_g2_ref[...]
    gcn = lax.dot_general(adj3, gcn.astype(bf16).reshape(g_graphs, n, hf),
                          (((2,), (1,)), ((0,), (0,))),
                          preferred_element_type=f32)
    gcn_h = jax.nn.sigmoid(gcn.reshape(gn, hf))

    # Fused mu|var projection on h = [adj_h | feat_h | gcn_h]; weights were
    # lane-padded so [mu | var] land in lanes [0, 2*hd) of the slab.
    muva = (
        jnp.dot(adj_h.astype(bf16), w_mva_a_ref[...], preferred_element_type=f32)
        + jnp.dot(feat_h.astype(bf16), w_mva_f_ref[...], preferred_element_type=f32)
        + jnp.dot(gcn_h.astype(bf16), w_mva_g_ref[...], preferred_element_type=f32)
        + b_mva_ref[...]
    )                                                     # (gn, pack_w)

    mu = muva[:, :hd]
    raw_var = muva[:, hd:2 * hd]
    # Reference: var = 2*raw ; z = mu + exp(0.5*var)*eps  ==  mu + exp(raw)*eps.
    # The x2 on the *returned* var lanes is applied wrapper-side after slicing.
    z = mu + jnp.exp(raw_var) * noise
    zb = z.astype(bf16)

    # ---- decoder ---------------------------------------------------------
    # feat_dec; w_d2/b_d2 pre-padded so feat_logits land in lanes [2hd, 2hd+dim).
    d = jax.nn.sigmoid(
        jnp.dot(zb, w_d1_ref[...], preferred_element_type=f32) + b_d1_ref[...])
    dec_slab = (jnp.dot(d.astype(bf16), w_d2_ref[...], preferred_element_type=f32)
                + b_d2_ref[...])                          # (gn, pack_w)

    # adj_logit = z @ z.T per graph (contraction on last dims, no transpose).
    z3 = zb.reshape(g_graphs, n, hd)
    adj_logit = lax.dot_general(z3, z3, (((2,), (2,)), ((0,), (0,))),
                                preferred_element_type=f32).reshape(gn, n)

    # Fold adj_logit into lanes [2hd+dim, 2hd+dim+n) so the kernel performs a
    # single lane-dense (pack_w wide) store per row block.
    off = 2 * hd + dim
    tail = pack_w - off - n
    pieces = [jnp.zeros((gn, off), f32), adj_logit]
    if tail > 0:
        pieces.append(jnp.zeros((gn, tail), f32))
    adj_slab = jnp.concatenate(pieces, axis=-1)

    packed_out[...] = (muva + dec_slab + adj_slab).reshape(g_graphs, n, pack_w)


def dge_forward(adj, features, noise, params):
    """adj: [B, n, n], features: [B, n, dim], noise: [B, n, hd] (float32).
    Returns (mu, var, adj_logit, feat_logits) as in DGE.forward (B == 1
    reproduces the single-graph PyTorch module)."""
    B, n, dim = features.shape
    hd = noise.shape[-1]
    hf = params["w_fe"].shape[1]
    ha = params["w_ae"].shape[1]
    hdf = params["w_d1"].shape[1]

    off_dec = 2 * hd
    off_adj = 2 * hd + dim
    pack_w = _round_up(off_adj + n, 128)

    f32, bf16 = jnp.float32, jnp.bfloat16

    # ---- one-time wrapper-side weight packing -----------------------------
    # features_enc + gcn.linear1 fused along the output axis (shared LHS x).
    w_fg = jnp.concatenate([params["w_fe"], params["w_g1"]], axis=1).astype(bf16)
    b_fg = jnp.concatenate([params["b_fe"], params["b_g1"]], axis=1).astype(f32)

    # mu|var fused along the output axis, split by encoder-concat segment
    # (order: adj_h | feat_h | gcn_h), lane-padded to the slab width.
    w_mva = jnp.concatenate([params["w_mu"], params["w_va"]], axis=1)  # (ha+2hf, 2hd)
    b_mva = jnp.concatenate([params["b_mu"], params["b_va"]], axis=1)  # (1, 2hd)
    pad_mva = ((0, 0), (0, pack_w - 2 * hd))
    w_mva = jnp.pad(w_mva, pad_mva)
    b_mva = jnp.pad(b_mva, pad_mva).astype(f32)
    w_mva_a = w_mva[:ha].astype(bf16)
    w_mva_f = w_mva[ha:ha + hf].astype(bf16)
    w_mva_g = w_mva[ha + hf:].astype(bf16)

    # feat_dec[2] lane-padded so its output lands at slab offset 2*hd.
    pad_d2 = ((0, 0), (off_dec, pack_w - off_dec - dim))
    w_d2 = jnp.pad(params["w_d2"], pad_d2).astype(bf16)
    b_d2 = jnp.pad(params["b_d2"], pad_d2).astype(f32)

    data_inputs = (adj.astype(bf16), features.astype(bf16), noise.astype(f32))
    weight_inputs = (
        w_fg, b_fg,
        params["w_ae"].astype(bf16), params["b_ae"].astype(f32),
        params["w_g2"].astype(bf16), params["b_g2"].astype(f32),
        w_mva_a, w_mva_f, w_mva_g, b_mva,
        params["w_d1"].astype(bf16), params["b_d1"].astype(f32),
        w_d2, b_d2,
    )

    # ---- grid: G graphs per step (fills the MXU M dimension) --------------
    g = _choose_group(B, n)
    grid = (B // g,)

    data_specs = [
        pl.BlockSpec((g, n, n), lambda b: (b, 0, 0)),     # adj
        pl.BlockSpec((g, n, dim), lambda b: (b, 0, 0)),   # features
        pl.BlockSpec((g, n, hd), lambda b: (b, 0, 0)),    # noise
    ]
    # Weights: full-array blocks, constant index -> resident across grid steps.
    weight_specs = [pl.BlockSpec(w.shape, lambda b: (0, 0)) for w in weight_inputs]

    out_shape = jax.ShapeDtypeStruct((B, n, pack_w), f32)
    out_specs = pl.BlockSpec((g, n, pack_w), lambda b: (b, 0, 0))

    matmul_flops = 2 * B * n * (
        dim * 2 * hf + n * ha + n * hf + hf * hf + n * hf
        + (ha + 2 * hf) * 2 * hd + n * hd + hd * hdf + hdf * dim)
    transcendentals = B * n * (2 * hf + ha + hd + hdf)
    bytes_accessed = int(
        sum(int(a.size) * a.dtype.itemsize for a in data_inputs + weight_inputs)
        + B * n * pack_w * 4)

    kernel = functools.partial(dge_kernel, n=n, dim=dim, hf=hf, hd=hd)

    packed = pl.pallas_call(
        kernel,
        grid=grid,
        in_specs=data_specs + weight_specs,
        out_specs=out_specs,
        out_shape=out_shape,
        compiler_params=pltpu.CompilerParams(
            dimension_semantics=("parallel",)),
        cost_estimate=pl.CostEstimate(
            flops=int(matmul_flops),
            transcendentals=int(transcendentals),
            bytes_accessed=bytes_accessed),
    )(*data_inputs, *weight_inputs)

    mu = packed[..., :hd]
    var = packed[..., hd:2 * hd] * 2.0          # matches `var = var * 2`
    feat_logits = packed[..., off_dec:off_dec + dim]
    adj_logit = packed[..., off_adj:off_adj + n]
    return mu, var, adj_logit, feat_logits


def init_params(key, n, dim, hf, ha, hd, hdf):
    """PyTorch-Linear-style init: weights stored [in, out], biases [1, out]."""
    def linear(key, fan_in, fan_out):
        kw, kb = jax.random.split(key)
        bound = 1.0 / jnp.sqrt(fan_in)
        w = jax.random.uniform(kw, (fan_in, fan_out), jnp.float32, -bound, bound)
        b = jax.random.uniform(kb, (1, fan_out), jnp.float32, -bound, bound)
        return w, b

    keys = jax.random.split(key, 8)
    w_fe, b_fe = linear(keys[0], dim, hf)          # features_enc
    w_ae, b_ae = linear(keys[1], n, ha)            # adj_enc
    w_g1, b_g1 = linear(keys[2], dim, hf)          # gcn.linear1
    w_g2, b_g2 = linear(keys[3], hf, hf)           # gcn.linear2
    w_mu, b_mu = linear(keys[4], ha + 2 * hf, hd)  # mu_layer  (h = [adj|feat|gcn])
    w_va, b_va = linear(keys[5], ha + 2 * hf, hd)  # var_layer
    w_d1, b_d1 = linear(keys[6], hd, hdf)          # feat_dec[0]
    w_d2, b_d2 = linear(keys[7], hdf, dim)         # feat_dec[2]
    return dict(w_fe=w_fe, b_fe=b_fe, w_ae=w_ae, b_ae=b_ae,
                w_g1=w_g1, b_g1=b_g1, w_g2=w_g2, b_g2=b_g2,
                w_mu=w_mu, b_mu=b_mu, w_va=w_va, b_va=b_va,
                w_d1=w_d1, b_d1=b_d1, w_d2=w_d2, b_d2=b_d2)


def dge_reference(adj, features, noise, p):
    """Pure-JAX reference with the same bf16-matmul / f32-elementwise split."""
    f32, bf16 = jnp.float32, jnp.bfloat16

    def mm(a, b):
        return jnp.matmul(a.astype(bf16), b.astype(bf16), preferred_element_type=f32)

    feat_h = jax.nn.sigmoid(mm(features, p["w_fe"]) + p["b_fe"])
    adj_h = jax.nn.sigmoid(mm(adj, p["w_ae"]) + p["b_ae"])
    g = mm(features, p["w_g1"]) + p["b_g1"]
    g = mm(adj, g)
    g = jax.nn.relu(g)
    g = mm(g, p["w_g2"]) + p["b_g2"]
    g = mm(adj, g)
    gcn_h = jax.nn.sigmoid(g)
    h = jnp.concatenate([adj_h, feat_h, gcn_h], axis=-1)
    mu = mm(h, p["w_mu"]) + p["b_mu"]
    var = (mm(h, p["w_va"]) + p["b_va"]) * 2.0
    z = mu + jnp.exp(0.5 * var) * noise
    adj_logit = mm(z, jnp.swapaxes(z, -1, -2))
    d = jax.nn.sigmoid(mm(z, p["w_d1"]) + p["b_d1"])
    feat_logits = mm(d, p["w_d2"]) + p["b_d2"]
    return mu, var, adj_logit, feat_logits


if __name__ == "__main__":
    B = 16     # independent graphs per call (the original module is B == 1)
    n = 16     # nodes per graph
    dim = 32   # node-feature dim
    hf = 32    # args.hidden_dim_enc_feat
    ha = 16    # args.hidden_dim_enc_adj
    hd = 16    # args.hidden_dim
    hdf = 32   # args.hidden_dim_dec_feat

    key = jax.random.PRNGKey(0)
    k_adj, k_feat, k_noise, k_params = jax.random.split(key, 4)

    adj = jax.random.uniform(k_adj, (B, n, n), jnp.float32)
    adj = 0.5 * (adj + jnp.swapaxes(adj, -1, -2))          # symmetric-ish adjacency
    features = jax.random.normal(k_feat, (B, n, dim), jnp.float32)
    # TODO(synk): stands in for torch.randn_like(mu) (same distribution, different RNG stream).
    noise = jax.random.normal(k_noise, (B, n, hd), jnp.float32)

    params = init_params(k_params, n, dim, hf, ha, hd, hdf)

    mu, var, adj_logit, feat_logits = dge_forward(adj, features, noise, params)
    jax.block_until_ready((mu, var, adj_logit, feat_logits))

    assert mu.shape == (B, n, hd) and var.shape == (B, n, hd)
    assert adj_logit.shape == (B, n, n) and feat_logits.shape == (B, n, dim)

    r_mu, r_var, r_adj, r_feat = dge_reference(adj, features, noise, params)
    for got, ref in ((mu, r_mu), (var, r_var), (adj_logit, r_adj),
                     (feat_logits, r_feat)):
        assert bool(jnp.all(jnp.isfinite(got)))
        assert bool(jnp.allclose(got, ref, rtol=5e-2, atol=2e-1)), \
            float(jnp.max(jnp.abs(got - ref)))

    print("KERNEL_OK")
</pallas_src>

<mosaic_0001>
module attributes {stable_mosaic.version = 11 : i64} {
  func.func @dge_kernel(%arg0: i32, %arg1: memref<8x16x16xbf16, #tpu.memory_space<vmem>>, %arg2: memref<8x16x32xbf16, #tpu.memory_space<vmem>>, %arg3: memref<8x16x16xf32, #tpu.memory_space<vmem>>, %arg4: memref<32x64xbf16, #tpu.memory_space<vmem>>, %arg5: memref<1x64xf32, #tpu.memory_space<vmem>>, %arg6: memref<16x16xbf16, #tpu.memory_space<vmem>>, %arg7: memref<1x16xf32, #tpu.memory_space<vmem>>, %arg8: memref<32x32xbf16, #tpu.memory_space<vmem>>, %arg9: memref<1x32xf32, #tpu.memory_space<vmem>>, %arg10: memref<16x128xbf16, #tpu.memory_space<vmem>>, %arg11: memref<32x128xbf16, #tpu.memory_space<vmem>>, %arg12: memref<32x128xbf16, #tpu.memory_space<vmem>>, %arg13: memref<1x128xf32, #tpu.memory_space<vmem>>, %arg14: memref<16x32xbf16, #tpu.memory_space<vmem>>, %arg15: memref<1x32xf32, #tpu.memory_space<vmem>>, %arg16: memref<32x128xbf16, #tpu.memory_space<vmem>>, %arg17: memref<1x128xf32, #tpu.memory_space<vmem>>, %arg18: memref<8x16x128xf32, #tpu.memory_space<vmem>>) attributes {dimension_semantics = [#tpu.dimension_semantics<parallel>], iteration_bounds = array<i64: 2>, scalar_prefetch = 0 : i64, scratch_operands = 0 : i64, tpu.core_type = #tpu.core_type<tc>, window_params = [{transform_indices = @transform_0, window_bounds = array<i64: 8, 16, 16>}, {transform_indices = @transform_1, window_bounds = array<i64: 8, 16, 32>}, {transform_indices = @transform_2, window_bounds = array<i64: 8, 16, 16>}, {pipeline_mode = #tpu.pipeline_mode<synchronous>, transform_indices = @transform_3, window_bounds = array<i64: 32, 64>}, {pipeline_mode = #tpu.pipeline_mode<synchronous>, transform_indices = @transform_4, window_bounds = array<i64: 1, 64>}, {pipeline_mode = #tpu.pipeline_mode<synchronous>, transform_indices = @transform_5, window_bounds = array<i64: 16, 16>}, {pipeline_mode = #tpu.pipeline_mode<synchronous>, transform_indices = @transform_6, window_bounds = array<i64: 1, 16>}, {pipeline_mode = #tpu.pipeline_mode<synchronous>, transform_indices = @transform_7, window_bounds = array<i64: 32, 32>}, {pipeline_mode = #tpu.pipeline_mode<synchronous>, transform_indices = @transform_8, window_bounds = array<i64: 1, 32>}, {pipeline_mode = #tpu.pipeline_mode<synchronous>, transform_indices = @transform_9, window_bounds = array<i64: 16, 128>}, {pipeline_mode = #tpu.pipeline_mode<synchronous>, transform_indices = @transform_10, window_bounds = array<i64: 32, 128>}, {pipeline_mode = #tpu.pipeline_mode<synchronous>, transform_indices = @transform_11, window_bounds = array<i64: 32, 128>}, {pipeline_mode = #tpu.pipeline_mode<synchronous>, transform_indices = @transform_12, window_bounds = array<i64: 1, 128>}, {pipeline_mode = #tpu.pipeline_mode<synchronous>, transform_indices = @transform_13, window_bounds = array<i64: 16, 32>}, {pipeline_mode = #tpu.pipeline_mode<synchronous>, transform_indices = @transform_14, window_bounds = array<i64: 1, 32>}, {pipeline_mode = #tpu.pipeline_mode<synchronous>, transform_indices = @transform_15, window_bounds = array<i64: 32, 128>}, {pipeline_mode = #tpu.pipeline_mode<synchronous>, transform_indices = @transform_16, window_bounds = array<i64: 1, 128>}, {transform_indices = @transform_17, window_bounds = array<i64: 8, 16, 128>}]} {
    %c0 = arith.constant 0 : index
    %c0_0 = arith.constant 0 : index
    %c0_1 = arith.constant 0 : index
    %0 = vector.load %arg1[%c0, %c0_0, %c0_1] : memref<8x16x16xbf16, #tpu.memory_space<vmem>>, vector<8x16x16xbf16>
    %1 = vector.shape_cast %0 : vector<8x16x16xbf16> to vector<128x16xbf16>
    %c0_2 = arith.constant 0 : index
    %c0_3 = arith.constant 0 : index
    %c0_4 = arith.constant 0 : index
    %2 = vector.load %arg2[%c0_2, %c0_3, %c0_4] : memref<8x16x32xbf16, #tpu.memory_space<vmem>>, vector<8x16x32xbf16>
    %3 = vector.shape_cast %2 : vector<8x16x32xbf16> to vector<128x32xbf16>
    %c0_5 = arith.constant 0 : index
    %c0_6 = arith.constant 0 : index
    %c0_7 = arith.constant 0 : index
    %4 = vector.load %arg3[%c0_5, %c0_6, %c0_7] : memref<8x16x16xf32, #tpu.memory_space<vmem>>, vector<8x16x16xf32>
    %5 = vector.shape_cast %4 : vector<8x16x16xf32> to vector<128x16xf32>
    %c0_8 = arith.constant 0 : index
    %c0_9 = arith.constant 0 : index
    %6 = vector.load %arg4[%c0_8, %c0_9] : memref<32x64xbf16, #tpu.memory_space<vmem>>, vector<32x64xbf16>
    %cst = arith.constant dense<0.000000e+00> : vector<128x64xf32>
    %7 = tpu.matmul %3, %6, %cst {dimension_numbers = #tpu.dot_dimension_numbers<[1], [0], [0], [1], [0, 0, 1, 1], [], []>} : vector<128x32xbf16>, vector<32x64xbf16>, vector<128x64xf32> -> vector<128x64xf32>
    %c0_10 = arith.constant 0 : index
    %c0_11 = arith.constant 0 : index
    %8 = vector.load %arg5[%c0_10, %c0_11] : memref<1x64xf32, #tpu.memory_space<vmem>>, vector<1x64xf32>
    %9 = vector.broadcast %8 : vector<1x64xf32> to vector<128x64xf32>
    %10 = arith.addf %7, %9 : vector<128x64xf32>
    %11 = vector.extract_strided_slice %10 {offsets = [0, 0], sizes = [128, 32], strides = [1, 1]} : vector<128x64xf32> to vector<128x32xf32>
    %12 = arith.negf %11 : vector<128x32xf32>
    %13 = math.exp %12 : vector<128x32xf32>
    %cst_12 = arith.constant 1.000000e+00 : f32
    %14 = vector.broadcast %cst_12 : f32 to vector<128x32xf32>
    %15 = arith.addf %14, %13 : vector<128x32xf32>
    %16 = arith.divf %14, %15 : vector<128x32xf32>
    %17 = vector.extract_strided_slice %10 {offsets = [0, 32], sizes = [128, 32], strides = [1, 1]} : vector<128x64xf32> to vector<128x32xf32>
    %c0_13 = arith.constant 0 : index
    %c0_14 = arith.constant 0 : index
    %18 = vector.load %arg6[%c0_13, %c0_14] : memref<16x16xbf16, #tpu.memory_space<vmem>>, vector<16x16xbf16>
    %cst_15 = arith.constant dense<0.000000e+00> : vector<128x16xf32>
    %19 = tpu.matmul %1, %18, %cst_15 {dimension_numbers = #tpu.dot_dimension_numbers<[1], [0], [0], [1], [0, 0, 1, 1], [], []>} : vector<128x16xbf16>, vector<16x16xbf16>, vector<128x16xf32> -> vector<128x16xf32>
    %c0_16 = arith.constant 0 : index
    %c0_17 = arith.constant 0 : index
    %20 = vector.load %arg7[%c0_16, %c0_17] : memref<1x16xf32, #tpu.memory_space<vmem>>, vector<1x16xf32>
    %21 = vector.broadcast %20 : vector<1x16xf32> to vector<128x16xf32>
    %22 = arith.addf %19, %21 : vector<128x16xf32>
    %23 = arith.negf %22 : vector<128x16xf32>
    %24 = math.exp %23 : vector<128x16xf32>
    %cst_18 = arith.constant 1.000000e+00 : f32
    %25 = vector.broadcast %cst_18 : f32 to vector<128x16xf32>
    %26 = arith.addf %25, %24 : vector<128x16xf32>
    %27 = arith.divf %25, %26 : vector<128x16xf32>
    %28 = arith.truncf %17 : vector<128x32xf32> to vector<128x32xbf16>
    %29 = vector.shape_cast %28 : vector<128x32xbf16> to vector<8x16x32xbf16>
    %cst_19 = arith.constant dense<0.000000e+00> : vector<8x16x32xf32>
    %30 = tpu.matmul %0, %29, %cst_19 {dimension_numbers = #tpu.dot_dimension_numbers<[2], [1], [1], [2], [0, 0, 0, 1, 1, 2], [0], [0]>} : vector<8x16x16xbf16>, vector<8x16x32xbf16>, vector<8x16x32xf32> -> vector<8x16x32xf32>
    %cst_20 = arith.constant 0.000000e+00 : f32
    %31 = vector.broadcast %cst_20 : f32 to vector<8x16x32xf32>
    %32 = arith.maximumf %30, %31 : vector<8x16x32xf32>
    %33 = vector.shape_cast %32 : vector<8x16x32xf32> to vector<128x32xf32>
    %34 = arith.truncf %33 : vector<128x32xf32> to vector<128x32xbf16>
    %c0_21 = arith.constant 0 : index
    %c0_22 = arith.constant 0 : index
    %35 = vector.load %arg8[%c0_21, %c0_22] : memref<32x32xbf16, #tpu.memory_space<vmem>>, vector<32x32xbf16>
    %cst_23 = arith.constant dense<0.000000e+00> : vector<128x32xf32>
    %36 = tpu.matmul %34, %35, %cst_23 {dimension_numbers = #tpu.dot_dimension_numbers<[1], [0], [0], [1], [0, 0, 1, 1], [], []>} : vector<128x32xbf16>, vector<32x32xbf16>, vector<128x32xf32> -> vector<128x32xf32>
    %c0_24 = arith.constant 0 : index
    %c0_25 = arith.constant 0 : index
    %37 = vector.load %arg9[%c0_24, %c0_25] : memref<1x32xf32, #tpu.memory_space<vmem>>, vector<1x32xf32>
    %38 = vector.broadcast %37 : vector<1x32xf32> to vector<128x32xf32>
    %39 = arith.addf %36, %38 : vector<128x32xf32>
    %40 = arith.truncf %39 : vector<128x32xf32> to vector<128x32xbf16>
    %41 = vector.shape_cast %40 : vector<128x32xbf16> to vector<8x16x32xbf16>
    %cst_26 = arith.constant dense<0.000000e+00> : vector<8x16x32xf32>
    %42 = tpu.matmul %0, %41, %cst_26 {dimension_numbers = #tpu.dot_dimension_numbers<[2], [1], [1], [2], [0, 0, 0, 1, 1, 2], [0], [0]>} : vector<8x16x16xbf16>, vector<8x16x32xbf16>, vector<8x16x32xf32> -> vector<8x16x32xf32>
    %43 = vector.shape_cast %42 : vector<8x16x32xf32> to vector<128x32xf32>
    %44 = arith.negf %43 : vector<128x32xf32>
    %45 = math.exp %44 : vector<128x32xf32>
    %cst_27 = arith.constant 1.000000e+00 : f32
    %46 = vector.broadcast %cst_27 : f32 to vector<128x32xf32>
    %47 = arith.addf %46, %45 : vector<128x32xf32>
    %48 = arith.divf %46, %47 : vector<128x32xf32>
    %49 = arith.truncf %27 : vector<128x16xf32> to vector<128x16xbf16>
    %c0_28 = arith.constant 0 : index
    %c0_29 = arith.constant 0 : index
    %50 = vector.load %arg10[%c0_28, %c0_29] : memref<16x128xbf16, #tpu.memory_space<vmem>>, vector<16x128xbf16>
    %cst_30 = arith.constant dense<0.000000e+00> : vector<128x128xf32>
    %51 = tpu.matmul %49, %50, %cst_30 {dimension_numbers = #tpu.dot_dimension_numbers<[1], [0], [0], [1], [0, 0, 1, 1], [], []>} : vector<128x16xbf16>, vector<16x128xbf16>, vector<128x128xf32> -> vector<128x128xf32>
    %52 = arith.truncf %16 : vector<128x32xf32> to vector<128x32xbf16>
    %c0_31 = arith.constant 0 : index
    %c0_32 = arith.constant 0 : index
    %53 = vector.load %arg11[%c0_31, %c0_32] : memref<32x128xbf16, #tpu.memory_space<vmem>>, vector<32x128xbf16>
    %cst_33 = arith.constant dense<0.000000e+00> : vector<128x128xf32>
    %54 = tpu.matmul %52, %53, %cst_33 {dimension_numbers = #tpu.dot_dimension_numbers<[1], [0], [0], [1], [0, 0, 1, 1], [], []>} : vector<128x32xbf16>, vector<32x128xbf16>, vector<128x128xf32> -> vector<128x128xf32>
    %55 = arith.addf %51, %54 : vector<128x128xf32>
    %56 = arith.truncf %48 : vector<128x32xf32> to vector<128x32xbf16>
    %c0_34 = arith.constant 0 : index
    %c0_35 = arith.constant 0 : index
    %57 = vector.load %arg12[%c0_34, %c0_35] : memref<32x128xbf16, #tpu.memory_space<vmem>>, vector<32x128xbf16>
    %cst_36 = arith.constant dense<0.000000e+00> : vector<128x128xf32>
    %58 = tpu.matmul %56, %57, %cst_36 {dimension_numbers = #tpu.dot_dimension_numbers<[1], [0], [0], [1], [0, 0, 1, 1], [], []>} : vector<128x32xbf16>, vector<32x128xbf16>, vector<128x128xf32> -> vector<128x128xf32>
    %59 = arith.addf %55, %58 : vector<128x128xf32>
    %c0_37 = arith.constant 0 : index
    %c0_38 = arith.constant 0 : index
    %60 = vector.load %arg13[%c0_37, %c0_38] : memref<1x128xf32, #tpu.memory_space<vmem>>, vector<1x128xf32>
    %61 = vector.broadcast %60 : vector<1x128xf32> to vector<128x128xf32>
    %62 = arith.addf %59, %61 : vector<128x128xf32>
    %63 = vector.extract_strided_slice %62 {offsets = [0, 0], sizes = [128, 16], strides = [1, 1]} : vector<128x128xf32> to vector<128x16xf32>
    %64 = vector.extract_strided_slice %62 {offsets = [0, 16], sizes = [128, 16], strides = [1, 1]} : vector<128x128xf32> to vector<128x16xf32>
    %65 = math.exp %64 : vector<128x16xf32>
    %66 = arith.mulf %65, %5 : vector<128x16xf32>
    %67 = arith.addf %63, %66 : vector<128x16xf32>
    %68 = arith.truncf %67 : vector<128x16xf32> to vector<128x16xbf16>
    %c0_39 = arith.constant 0 : index
    %c0_40 = arith.constant 0 : index
    %69 = vector.load %arg14[%c0_39, %c0_40] : memref<16x32xbf16, #tpu.memory_space<vmem>>, vector<16x32xbf16>
    %cst_41 = arith.constant dense<0.000000e+00> : vector<128x32xf32>
    %70 = tpu.matmul %68, %69, %cst_41 {dimension_numbers = #tpu.dot_dimension_numbers<[1], [0], [0], [1], [0, 0, 1, 1], [], []>} : vector<128x16xbf16>, vector<16x32xbf16>, vector<128x32xf32> -> vector<128x32xf32>
    %c0_42 = arith.constant 0 : index
    %c0_43 = arith.constant 0 : index
    %71 = vector.load %arg15[%c0_42, %c0_43] : memref<1x32xf32, #tpu.memory_space<vmem>>, vector<1x32xf32>
    %72 = vector.broadcast %71 : vector<1x32xf32> to vector<128x32xf32>
    %73 = arith.addf %70, %72 : vector<128x32xf32>
    %74 = arith.negf %73 : vector<128x32xf32>
    %75 = math.exp %74 : vector<128x32xf32>
    %cst_44 = arith.constant 1.000000e+00 : f32
    %76 = vector.broadcast %cst_44 : f32 to vector<128x32xf32>
    %77 = arith.addf %76, %75 : vector<128x32xf32>
    %78 = arith.divf %76, %77 : vector<128x32xf32>
    %79 = arith.truncf %78 : vector<128x32xf32> to vector<128x32xbf16>
    %c0_45 = arith.constant 0 : index
    %c0_46 = arith.constant 0 : index
    %80 = vector.load %arg16[%c0_45, %c0_46] : memref<32x128xbf16, #tpu.memory_space<vmem>>, vector<32x128xbf16>
    %cst_47 = arith.constant dense<0.000000e+00> : vector<128x128xf32>
    %81 = tpu.matmul %79, %80, %cst_47 {dimension_numbers = #tpu.dot_dimension_numbers<[1], [0], [0], [1], [0, 0, 1, 1], [], []>} : vector<128x32xbf16>, vector<32x128xbf16>, vector<128x128xf32> -> vector<128x128xf32>
    %c0_48 = arith.constant 0 : index
    %c0_49 = arith.constant 0 : index
    %82 = vector.load %arg17[%c0_48, %c0_49] : memref<1x128xf32, #tpu.memory_space<vmem>>, vector<1x128xf32>
    %83 = vector.broadcast %82 : vector<1x128xf32> to vector<128x128xf32>
    %84 = arith.addf %81, %83 : vector<128x128xf32>
    %85 = vector.shape_cast %68 : vector<128x16xbf16> to vector<8x16x16xbf16>
    %cst_50 = arith.constant dense<0.000000e+00> : vector<8x16x16xf32>
    %86 = tpu.matmul %85, %85, %cst_50 {dimension_numbers = #tpu.dot_dimension_numbers<[2], [2], [1], [1], [0, 0, 0, 1, 1, 1], [0], [0]>} : vector<8x16x16xbf16>, vector<8x16x16xbf16>, vector<8x16x16xf32> -> vector<8x16x16xf32>
    %87 = vector.shape_cast %86 : vector<8x16x16xf32> to vector<128x16xf32>
    %cst_51 = arith.constant 0.000000e+00 : f32
    %88 = vector.broadcast %cst_51 : f32 to vector<128x64xf32>
    %cst_52 = arith.constant 0.000000e+00 : f32
    %89 = vector.broadcast %cst_52 : f32 to vector<128x48xf32>
    %90 = tpu.concatenate %88, %87, %89 in 1 : vector<128x64xf32>, vector<128x16xf32>, vector<128x48xf32> -> vector<128x128xf32>
    %91 = arith.addf %62, %84 : vector<128x128xf32>
    %92 = arith.addf %91, %90 : vector<128x128xf32>
    %93 = vector.shape_cast %92 : vector<128x128xf32> to vector<8x16x128xf32>
    %c0_53 = arith.constant 0 : index
    %c0_54 = arith.constant 0 : index
    %c0_55 = arith.constant 0 : index
    %94 = vector.load %arg18[%c0_53, %c0_54, %c0_55] : memref<8x16x128xf32, #tpu.memory_space<vmem>>, vector<8x16x128xf32>
    tpu.vector_store %arg18[%c0_53, %c0_54, %c0_55], %93 {strides = array<i32>} : memref<8x16x128xf32, #tpu.memory_space<vmem>>, vector<8x16x128xf32>,
    return
  }
  func.func @transform_0(%arg0: i32) -> (i32, i32, i32) {
    %c0_i32 = arith.constant 0 : i32
    %c0_i32_0 = arith.constant 0 : i32
    %c0_i32_1 = arith.constant 0 : i32
    return %arg0, %c0_i32, %c0_i32_0 : i32, i32, i32
  }
  func.func @transform_1(%arg0: i32) -> (i32, i32, i32) {
    %c0_i32 = arith.constant 0 : i32
    %c0_i32_0 = arith.constant 0 : i32
    %c0_i32_1 = arith.constant 0 : i32
    return %arg0, %c0_i32, %c0_i32_0 : i32, i32, i32
  }
  func.func @transform_2(%arg0: i32) -> (i32, i32, i32) {
    %c0_i32 = arith.constant 0 : i32
    %c0_i32_0 = arith.constant 0 : i32
    %c0_i32_1 = arith.constant 0 : i32
    return %arg0, %c0_i32, %c0_i32_0 : i32, i32, i32
  }
  func.func @transform_3(%arg0: i32) -> (i32, i32) {
    %c0_i32 = arith.constant 0 : i32
    %c0_i32_0 = arith.constant 0 : i32
    %c0_i32_1 = arith.constant 0 : i32
    return %c0_i32, %c0_i32_0 : i32, i32
  }
  func.func @transform_4(%arg0: i32) -> (i32, i32) {
    %c0_i32 = arith.constant 0 : i32
    %c0_i32_0 = arith.constant 0 : i32
    %c0_i32_1 = arith.constant 0 : i32
    return %c0_i32, %c0_i32_0 : i32, i32
  }
  func.func @transform_5(%arg0: i32) -> (i32, i32) {
    %c0_i32 = arith.constant 0 : i32
    %c0_i32_0 = arith.constant 0 : i32
    %c0_i32_1 = arith.constant 0 : i32
    return %c0_i32, %c0_i32_0 : i32, i32
  }
  func.func @transform_6(%arg0: i32) -> (i32, i32) {
    %c0_i32 = arith.constant 0 : i32
    %c0_i32_0 = arith.constant 0 : i32
    %c0_i32_1 = arith.constant 0 : i32
    return %c0_i32, %c0_i32_0 : i32, i32
  }
  func.func @transform_7(%arg0: i32) -> (i32, i32) {
    %c0_i32 = arith.constant 0 : i32
    %c0_i32_0 = arith.constant 0 : i32
    %c0_i32_1 = arith.constant 0 : i32
    return %c0_i32, %c0_i32_0 : i32, i32
  }
  func.func @transform_8(%arg0: i32) -> (i32, i32) {
    %c0_i32 = arith.constant 0 : i32
    %c0_i32_0 = arith.constant 0 : i32
    %c0_i32_1 = arith.constant 0 : i32
    return %c0_i32, %c0_i32_0 : i32, i32
  }
  func.func @transform_9(%arg0: i32) -> (i32, i32) {
    %c0_i32 = arith.constant 0 : i32
    %c0_i32_0 = arith.constant 0 : i32
    %c0_i32_1 = arith.constant 0 : i32
    return %c0_i32, %c0_i32_0 : i32, i32
  }
  func.func @transform_10(%arg0: i32) -> (i32, i32) {
    %c0_i32 = arith.constant 0 : i32
    %c0_i32_0 = arith.constant 0 : i32
    %c0_i32_1 = arith.constant 0 : i32
    return %c0_i32, %c0_i32_0 : i32, i32
  }
  func.func @transform_11(%arg0: i32) -> (i32, i32) {
    %c0_i32 = arith.constant 0 : i32
    %c0_i32_0 = arith.constant 0 : i32
    %c0_i32_1 = arith.constant 0 : i32
    return %c0_i32, %c0_i32_0 : i32, i32
  }
  func.func @transform_12(%arg0: i32) -> (i32, i32) {
    %c0_i32 = arith.constant 0 : i32
    %c0_i32_0 = arith.constant 0 : i32
    %c0_i32_1 = arith.constant 0 : i32
    return %c0_i32, %c0_i32_0 : i32, i32
  }
  func.func @transform_13(%arg0: i32) -> (i32, i32) {
    %c0_i32 = arith.constant 0 : i32
    %c0_i32_0 = arith.constant 0 : i32
    %c0_i32_1 = arith.constant 0 : i32
    return %c0_i32, %c0_i32_0 : i32, i32
  }
  func.func @transform_14(%arg0: i32) -> (i32, i32) {
    %c0_i32 = arith.constant 0 : i32
    %c0_i32_0 = arith.constant 0 : i32
    %c0_i32_1 = arith.constant 0 : i32
    return %c0_i32, %c0_i32_0 : i32, i32
  }
  func.func @transform_15(%arg0: i32) -> (i32, i32) {
    %c0_i32 = arith.constant 0 : i32
    %c0_i32_0 = arith.constant 0 : i32
    %c0_i32_1 = arith.constant 0 : i32
    return %c0_i32, %c0_i32_0 : i32, i32
  }
  func.func @transform_16(%arg0: i32) -> (i32, i32) {
    %c0_i32 = arith.constant 0 : i32
    %c0_i32_0 = arith.constant 0 : i32
    %c0_i32_1 = arith.constant 0 : i32
    return %c0_i32, %c0_i32_0 : i32, i32
  }
  func.func @transform_17(%arg0: i32) -> (i32, i32, i32) {
    %c0_i32 = arith.constant 0 : i32
    %c0_i32_0 = arith.constant 0 : i32
    %c0_i32_1 = arith.constant 0 : i32
    return %arg0, %c0_i32, %c0_i32_0 : i32, i32, i32
  }
}

</mosaic_0001>

<llo_original>
// kernel: tpu_custom_call.1
$region0: #{tpu_custom_call.1}
  #allocation0 [shape = 'u32[]', space=smem, size = 0x4, offset = 0x4, fixed_abs, tag = 'smem constant byte address 0x4 - core index']
  #allocation1 [shape = 'u32[144,128]{1,0:T(1,128)}', space=vmem, size = 0x12000, scoped, tag = 'internal scratch']
  %s0 = inlined_call_operand.hbm [shape: bf16[16,16,16], index: 0, kind: input, shape index: {}]
  %s1 = inlined_call_operand.hbm [shape: bf16[16,16,32], index: 1, kind: input, shape index: {}]
  %s2 = inlined_call_operand.hbm [shape: f32[16,16,16], index: 2, kind: input, shape index: {}]
  %s3 = inlined_call_operand.hbm [shape: bf16[32,64], index: 3, kind: input, shape index: {}]
  %s4 = inlined_call_operand.vmem [shape: f32[1,64], index: 4, kind: input, shape index: {}]
  %s5 = inlined_call_operand.hbm [shape: bf16[16,16], index: 5, kind: input, shape index: {}]
  %s6 = inlined_call_operand.hbm [shape: f32[1,16], index: 6, kind: input, shape index: {}]
  %s7 = inlined_call_operand.vmem [shape: bf16[32,32], index: 7, kind: input, shape index: {}]
  %s8 = inlined_call_operand.hbm [shape: f32[1,32], index: 8, kind: input, shape index: {}]
  %s9 = inlined_call_operand.hbm [shape: bf16[16,128], index: 9, kind: input, shape index: {}]
  %s10 = inlined_call_operand.vmem [shape: bf16[32,128], index: 10, kind: input, shape index: {}]
  %s11 = inlined_call_operand.hbm [shape: bf16[32,128], index: 11, kind: input, shape index: {}]
  %s12 = inlined_call_operand.hbm [shape: f32[1,128], index: 12, kind: input, shape index: {}]
  %s13 = inlined_call_operand.hbm [shape: bf16[16,32], index: 13, kind: input, shape index: {}]
  %s14 = inlined_call_operand.vmem [shape: f32[1,32], index: 14, kind: input, shape index: {}]
  %s15 = inlined_call_operand.vmem [shape: bf16[32,128], index: 15, kind: input, shape index: {}]
  %s16 = inlined_call_operand.vmem [shape: f32[1,128], index: 16, kind: input, shape index: {}]
  %s17 = inlined_call_operand.hbm [shape: f32[16,16,128], index: 17, kind: output, shape index: {}]
  %s18 = sld [smem:[#allocation0]]
  $region145: #{tpu_custom_call.1} parent=0
    _
  %s20 = ssub.s32 1, %s18
  %s21 = scalar_select 0, %s20, %s18
  $region1: #{tpu_custom_call.1} parent=0
    #allocation2 [shape = 'u8[65536]{0}', space=vmem, size = 0x10000, scoped, tag = 'input window, operand 0']
    #allocation3 [shape = 's32[2]{0}', space=sflag, size = 0x8, scoped, tag = 'scoped memory for tpu_custom_call.1']
    #allocation4 [shape = 's32[2]{0}', space=sflag, size = 0x8, scoped, tag = 'scoped memory for tpu_custom_call.1']
    #allocation5 [shape = 'u8[65536]{0}', space=vmem, size = 0x10000, scoped, tag = 'input window, operand 1']
    #allocation6 [shape = 's32[2]{0}', space=sflag, size = 0x8, scoped, tag = 'scoped memory for tpu_custom_call.1']
    #allocation7 [shape = 'u8[131072]{0}', space=vmem, size = 0x20000, scoped, tag = 'input window, operand 2']
    #allocation8 [shape = 'u8[8192]{0}', space=vmem, size = 0x2000, scoped, tag = 'input window, operand 3, single buffered']
    #allocation9 [shape = 's32[1]{0}', space=sflag, size = 0x4, scoped, tag = 'scoped memory for tpu_custom_call.1']
    #allocation10 [shape = 'u8[4096]{0}', space=vmem, size = 0x1000, scoped, tag = 'input window, operand 5, single buffered']
    #allocation11 [shape = 'u8[512]{0}', space=vmem, size = 0x400, scoped, tag = 'input window, operand 6, single buffered']
    #allocation12 [shape = 's32[1]{0}', space=sflag, size = 0x4, scoped, tag = 'scoped memory for tpu_custom_call.1']
    #allocation13 [shape = 'u8[512]{0}', space=vmem, size = 0x400, scoped, tag = 'input window, operand 8, single buffered']
    #allocation14 [shape = 'u8[4096]{0}', space=vmem, size = 0x1000, scoped, tag = 'input window, operand 9, single buffered']
    #allocation15 [shape = 's32[1]{0}', space=sflag, size = 0x4, scoped, tag = 'scoped memory for tpu_custom_call.1']
    #allocation16 [shape = 'u8[8192]{0}', space=vmem, size = 0x2000, scoped, tag = 'input window, operand 11, single buffered']
    #allocation17 [shape = 'u8[512]{0}', space=vmem, size = 0x400, scoped, tag = 'input window, operand 12, single buffered']
    #allocation18 [shape = 's32[1]{0}', space=sflag, size = 0x4, scoped, tag = 'scoped memory for tpu_custom_call.1']
    #allocation19 [shape = 'u8[4096]{0}', space=vmem, size = 0x1000, scoped, tag = 'input window, operand 13, single buffered']
    #allocation20 [shape = 'u8[131072]{0}', space=vmem, size = 0x20000, scoped, tag = 'output window, operand 0']
    %22 = vsyncpa [#allocation3], 0
    %s23 = scalar_lea.sflag [#allocation3], 1
    %24 = vsyncpa %s23, 0
    %25 = vsyncpa [#allocation6], 0
    %s26 = scalar_lea.sflag [#allocation6], 1
    %27 = vsyncpa %s26, 0
    %28 = vsyncpa [#allocation9], 0
    %29 = vsyncpa [#allocation12], 0
    %30 = vsyncpa [#allocation15], 0
    %31 = vsyncpa [#allocation18], 0
    %32 = vsyncpa [#allocation4], 0
    %s33 = scalar_lea.sflag [#allocation4], 1
    %34 = vsyncpa %s33, 0
    loop: start=0, step=1, limit=4
    $region2: #{tpu_custom_call.1} parent=1 // loop_pre_header
      _
    $region3: #{tpu_custom_call.1} parent=1 // loop_header
      %s36 = sphi 0, %s40
      %p37 = scmp.ge.s32.totalorder %s36, 4
      %s46 = sphi 0, %s48
      %s49 = sphi 0, %s46
      %s50 = sphi 0, %s49
      %s66 = sphi 0, %s50
      %s72 = sphi 0, %s74
      %s75 = sphi 0, %s72
      %s76 = sphi 0, %s75
      %s92 = sphi 0, %s76
      %s98 = sphi 0, %s100
      %s101 = sphi 0, %s98
      %s102 = sphi 0, %s101
      %s118 = sphi 0, %s102
      %s122 = sphi 0, %s122
      %s124 = sphi 0, %s122
      %s125 = sphi 0, %s124
      %s139 = sphi 0, %s125
      %s143 = sphi 0, %s143
      %s145 = sphi 0, %s143
      %s146 = sphi 0, %s145
      %s160 = sphi 0, %s146
      %s164 = sphi 0, %s164
      %s166 = sphi 0, %s164
      %s167 = sphi 0, %s166
      %s181 = sphi 0, %s167
      %s185 = sphi 0, %s185
      %s187 = sphi 0, %s185
      %s188 = sphi 0, %s187
      %s202 = sphi 0, %s188
      %s206 = sphi 0, %s206
      %s208 = sphi 0, %s206
      %s209 = sphi 0, %s208
      %s223 = sphi 0, %s209
      %s227 = sphi 0, %s227
      %s229 = sphi 0, %s227
      %s230 = sphi 0, %s229
      %s244 = sphi 0, %s230
      %s248 = sphi 0, %s248
      %s250 = sphi 0, %s248
      %s251 = sphi 0, %s250
      %s265 = sphi 0, %s251
      %s269 = sphi 0, %s269
      %s271 = sphi 0, %s269
      %s272 = sphi 0, %s271
      %s286 = sphi 0, %s272
      %s290 = sphi 0, %s290
      %s292 = sphi 0, %s290
      %s293 = sphi 0, %s292
      %s307 = sphi 0, %s293
      %s311 = sphi 0, %s311
      %s313 = sphi 0, %s311
      %s314 = sphi 0, %s313
      %s328 = sphi 0, %s314
      %s332 = sphi 0, %s332
      %s334 = sphi 0, %s332
      %s335 = sphi 0, %s334
      %s349 = sphi 0, %s335
      %s353 = sphi 0, %s353
      %s355 = sphi 0, %s353
      %s356 = sphi 0, %s355
      %s370 = sphi 0, %s356
      %s374 = sphi 0, %s374
      %s376 = sphi 0, %s374
      %s377 = sphi 0, %s376
      %s391 = sphi 0, %s377
      %s395 = sphi 0, %s395
      %s397 = sphi 0, %s395
      %s398 = sphi 0, %s397
      %s412 = sphi 0, %s398
      %s418 = sphi 0, %s420
      %s421 = sphi 0, %s418
      %s422 = sphi 0, %s421
      %s438 = sphi 0, %s422
    $region4: #{tpu_custom_call.1} parent=1 // loop_header_branch
      %39 = sbr.rel (%p37) target = $region8
    $region5: #{tpu_custom_call.1} parent=1 // loop_body
      %s41 = ssub.s32 %s36, 1
      %s42 = ssub.s32 %s36, 2
      %s43 = sadd.s32 %s36, 1
      %s44 = ssub.s32 %s36, %s43
      %p45 = scmp.eq.s32.totalorder %s44, 0
      %s47 = sadd.s32 %s46, 1
      %s48 = scalar_select %p45, %s46, %s47
      %p51 = pneg %p45
      %p52 = scmp.eq.s32.totalorder %s36, 1
      %p53 = por %p51, %p52
      %p54 = scmp.ne.s32.totalorder %s46, %s49
      %p55 = scmp.eq.s32.totalorder %s36, 0
      %p56 = por %p54, %p55
      %p57 = scmp.ne.s32.totalorder %s46, %s49
      %p58 = scmp.eq.s32.totalorder %s41, 1
      %p59 = por %p57, %p58
      %p60 = scmp.ne.s32.totalorder %s49, %s50
      %p61 = scmp.eq.s32.totalorder %s41, 0
      %p62 = por %p60, %p61
      %p63 = scmp.ne.s32.totalorder %s49, %s50
      %p64 = scmp.eq.s32.totalorder %s42, 1
      %p65 = por %p63, %p64
      %p67 = scmp.ne.s32.totalorder %s50, %s66
      %p68 = scmp.eq.s32.totalorder %s42, 0
      %p69 = por %p67, %p68
      %s70 = ssub.s32 %s36, %s43
      %p71 = scmp.eq.s32.totalorder %s70, 0
      %s73 = sadd.s32 %s72, 1
      %s74 = scalar_select %p71, %s72, %s73
      %p77 = pneg %p71
      %p78 = scmp.eq.s32.totalorder %s36, 1
      %p79 = por %p77, %p78
      %p80 = scmp.ne.s32.totalorder %s72, %s75
      %p81 = scmp.eq.s32.totalorder %s36, 0
      %p82 = por %p80, %p81
      %p83 = scmp.ne.s32.totalorder %s72, %s75
      %p84 = scmp.eq.s32.totalorder %s41, 1
      %p85 = por %p83, %p84
      %p86 = scmp.ne.s32.totalorder %s75, %s76
      %p87 = scmp.eq.s32.totalorder %s41, 0
      %p88 = por %p86, %p87
      %p89 = scmp.ne.s32.totalorder %s75, %s76
      %p90 = scmp.eq.s32.totalorder %s42, 1
      %p91 = por %p89, %p90
      %p93 = scmp.ne.s32.totalorder %s76, %s92
      %p94 = scmp.eq.s32.totalorder %s42, 0
      %p95 = por %p93, %p94
      %s96 = ssub.s32 %s36, %s43
      %p97 = scmp.eq.s32.totalorder %s96, 0
      %s99 = sadd.s32 %s98, 1
      %s100 = scalar_select %p97, %s98, %s99
      %p103 = pneg %p97
      %p104 = scmp.eq.s32.totalorder %s36, 1
      %p105 = por %p103, %p104
      %p106 = scmp.ne.s32.totalorder %s98, %s101
      %p107 = scmp.eq.s32.totalorder %s36, 0
      %p108 = por %p106, %p107
      %p109 = scmp.ne.s32.totalorder %s98, %s101
      %p110 = scmp.eq.s32.totalorder %s41, 1
      %p111 = por %p109, %p110
      %p112 = scmp.ne.s32.totalorder %s101, %s102
      %p113 = scmp.eq.s32.totalorder %s41, 0
      %p114 = por %p112, %p113
      %p115 = scmp.ne.s32.totalorder %s101, %s102
      %p116 = scmp.eq.s32.totalorder %s42, 1
      %p117 = por %p115, %p116
      %p119 = scmp.ne.s32.totalorder %s102, %s118
      %p120 = scmp.eq.s32.totalorder %s42, 0
      %p121 = por %p119, %p120
      %s123 = sadd.s32 %s122, 1
      %p126 = scmp.eq.s32.totalorder %s36, 1
      %p127 = scmp.ne.s32.totalorder %s122, %s124
      %p128 = scmp.eq.s32.totalorder %s36, 0
      %p129 = por %p127, %p128
      %p130 = scmp.ne.s32.totalorder %s122, %s124
      %p131 = scmp.eq.s32.totalorder %s41, 1
      %p132 = por %p130, %p131
      %p133 = scmp.ne.s32.totalorder %s124, %s125
      %p134 = scmp.eq.s32.totalorder %s41, 0
      %p135 = por %p133, %p134
      %p136 = scmp.ne.s32.totalorder %s124, %s125
      %p137 = scmp.eq.s32.totalorder %s42, 1
      %p138 = por %p136, %p137
      %p140 = scmp.ne.s32.totalorder %s125, %s139
      %p141 = scmp.eq.s32.totalorder %s42, 0
      %p142 = por %p140, %p141
      %s144 = sadd.s32 %s143, 1
      %p147 = scmp.eq.s32.totalorder %s36, 1
      %p148 = scmp.ne.s32.totalorder %s143, %s145
      %p149 = scmp.eq.s32.totalorder %s36, 0
      %p150 = por %p148, %p149
      %p151 = scmp.ne.s32.totalorder %s143, %s145
      %p152 = scmp.eq.s32.totalorder %s41, 1
      %p153 = por %p151, %p152
      %p154 = scmp.ne.s32.totalorder %s145, %s146
      %p155 = scmp.eq.s32.totalorder %s41, 0
      %p156 = por %p154, %p155
      %p157 = scmp.ne.s32.totalorder %s145, %s146
      %p158 = scmp.eq.s32.totalorder %s42, 1
      %p159 = por %p157, %p158
      %p161 = scmp.ne.s32.totalorder %s146, %s160
      %p162 = scmp.eq.s32.totalorder %s42, 0
      %p163 = por %p161, %p162
      %s165 = sadd.s32 %s164, 1
      %p168 = scmp.eq.s32.totalorder %s36, 1
      %p169 = scmp.ne.s32.totalorder %s164, %s166
      %p170 = scmp.eq.s32.totalorder %s36, 0
      %p171 = por %p169, %p170
      %p172 = scmp.ne.s32.totalorder %s164, %s166
      %p173 = scmp.eq.s32.totalorder %s41, 1
      %p174 = por %p172, %p173
      %p175 = scmp.ne.s32.totalorder %s166, %s167
      %p176 = scmp.eq.s32.totalorder %s41, 0
      %p177 = por %p175, %p176
      %p178 = scmp.ne.s32.totalorder %s166, %s167
      %p179 = scmp.eq.s32.totalorder %s42, 1
      %p180 = por %p178, %p179
      %p182 = scmp.ne.s32.totalorder %s167, %s181
      %p183 = scmp.eq.s32.totalorder %s42, 0
      %p184 = por %p182, %p183
      %s186 = sadd.s32 %s185, 1
      %p189 = scmp.eq.s32.totalorder %s36, 1
      %p190 = scmp.ne.s32.totalorder %s185, %s187
      %p191 = scmp.eq.s32.totalorder %s36, 0
      %p192 = por %p190, %p191
      %p193 = scmp.ne.s32.totalorder %s185, %s187
      %p194 = scmp.eq.s32.totalorder %s41, 1
      %p195 = por %p193, %p194
      %p196 = scmp.ne.s32.totalorder %s187, %s188
      %p197 = scmp.eq.s32.totalorder %s41, 0
      %p198 = por %p196, %p197
      %p199 = scmp.ne.s32.totalorder %s187, %s188
      %p200 = scmp.eq.s32.totalorder %s42, 1
      %p201 = por %p199, %p200
      %p203 = scmp.ne.s32.totalorder %s188, %s202
      %p204 = scmp.eq.s32.totalorder %s42, 0
      %p205 = por %p203, %p204
      %s207 = sadd.s32 %s206, 1
      %p210 = scmp.eq.s32.totalorder %s36, 1
      %p211 = scmp.ne.s32.totalorder %s206, %s208
      %p212 = scmp.eq.s32.totalorder %s36, 0
      %p213 = por %p211, %p212
      %p214 = scmp.ne.s32.totalorder %s206, %s208
      %p215 = scmp.eq.s32.totalorder %s41, 1
      %p216 = por %p214, %p215
      %p217 = scmp.ne.s32.totalorder %s208, %s209
      %p218 = scmp.eq.s32.totalorder %s41, 0
      %p219 = por %p217, %p218
      %p220 = scmp.ne.s32.totalorder %s208, %s209
      %p221 = scmp.eq.s32.totalorder %s42, 1
      %p222 = por %p220, %p221
      %p224 = scmp.ne.s32.totalorder %s209, %s223
      %p225 = scmp.eq.s32.totalorder %s42, 0
      %p226 = por %p224, %p225
      %s228 = sadd.s32 %s227, 1
      %p231 = scmp.eq.s32.totalorder %s36, 1
      %p232 = scmp.ne.s32.totalorder %s227, %s229
      %p233 = scmp.eq.s32.totalorder %s36, 0
      %p234 = por %p232, %p233
      %p235 = scmp.ne.s32.totalorder %s227, %s229
      %p236 = scmp.eq.s32.totalorder %s41, 1
      %p237 = por %p235, %p236
      %p238 = scmp.ne.s32.totalorder %s229, %s230
      %p239 = scmp.eq.s32.totalorder %s41, 0
      %p240 = por %p238, %p239
      %p241 = scmp.ne.s32.totalorder %s229, %s230
      %p242 = scmp.eq.s32.totalorder %s42, 1
      %p243 = por %p241, %p242
      %p245 = scmp.ne.s32.totalorder %s230, %s244
      %p246 = scmp.eq.s32.totalorder %s42, 0
      %p247 = por %p245, %p246
      %s249 = sadd.s32 %s248, 1
      %p252 = scmp.eq.s32.totalorder %s36, 1
      %p253 = scmp.ne.s32.totalorder %s248, %s250
      %p254 = scmp.eq.s32.totalorder %s36, 0
      %p255 = por %p253, %p254
      %p256 = scmp.ne.s32.totalorder %s248, %s250
      %p257 = scmp.eq.s32.totalorder %s41, 1
      %p258 = por %p256, %p257
      %p259 = scmp.ne.s32.totalorder %s250, %s251
      %p260 = scmp.eq.s32.totalorder %s41, 0
      %p261 = por %p259, %p260
      %p262 = scmp.ne.s32.totalorder %s250, %s251
      %p263 = scmp.eq.s32.totalorder %s42, 1
      %p264 = por %p262, %p263
      %p266 = scmp.ne.s32.totalorder %s251, %s265
      %p267 = scmp.eq.s32.totalorder %s42, 0
      %p268 = por %p266, %p267
      %s270 = sadd.s32 %s269, 1
      %p273 = scmp.eq.s32.totalorder %s36, 1
      %p274 = scmp.ne.s32.totalorder %s269, %s271
      %p275 = scmp.eq.s32.totalorder %s36, 0
      %p276 = por %p274, %p275
      %p277 = scmp.ne.s32.totalorder %s269, %s271
      %p278 = scmp.eq.s32.totalorder %s41, 1
      %p279 = por %p277, %p278
      %p280 = scmp.ne.s32.totalorder %s271, %s272
      %p281 = scmp.eq.s32.totalorder %s41, 0
      %p282 = por %p280, %p281
      %p283 = scmp.ne.s32.totalorder %s271, %s272
      %p284 = scmp.eq.s32.totalorder %s42, 1
      %p285 = por %p283, %p284
      %p287 = scmp.ne.s32.totalorder %s272, %s286
      %p288 = scmp.eq.s32.totalorder %s42, 0
      %p289 = por %p287, %p288
      %s291 = sadd.s32 %s290, 1
      %p294 = scmp.eq.s32.totalorder %s36, 1
      %p295 = scmp.ne.s32.totalorder %s290, %s292
      %p296 = scmp.eq.s32.totalorder %s36, 0
      %p297 = por %p295, %p296
      %p298 = scmp.ne.s32.totalorder %s290, %s292
      %p299 = scmp.eq.s32.totalorder %s41, 1
      %p300 = por %p298, %p299
      %p301 = scmp.ne.s32.totalorder %s292, %s293
      %p302 = scmp.eq.s32.totalorder %s41, 0
      %p303 = por %p301, %p302
      %p304 = scmp.ne.s32.totalorder %s292, %s293
      %p305 = scmp.eq.s32.totalorder %s42, 1
      %p306 = por %p304, %p305
      %p308 = scmp.ne.s32.totalorder %s293, %s307
      %p309 = scmp.eq.s32.totalorder %s42, 0
      %p310 = por %p308, %p309
      %s312 = sadd.s32 %s311, 1
      %p315 = scmp.eq.s32.totalorder %s36, 1
      %p316 = scmp.ne.s32.totalorder %s311, %s313
      %p317 = scmp.eq.s32.totalorder %s36, 0
      %p318 = por %p316, %p317
      %p319 = scmp.ne.s32.totalorder %s311, %s313
      %p320 = scmp.eq.s32.totalorder %s41, 1
      %p321 = por %p319, %p320
      %p322 = scmp.ne.s32.totalorder %s313, %s314
      %p323 = scmp.eq.s32.totalorder %s41, 0
      %p324 = por %p322, %p323
      %p325 = scmp.ne.s32.totalorder %s313, %s314
      %p326 = scmp.eq.s32.totalorder %s42, 1
      %p327 = por %p325, %p326
      %p329 = scmp.ne.s32.totalorder %s314, %s328
      %p330 = scmp.eq.s32.totalorder %s42, 0
      %p331 = por %p329, %p330
      %s333 = sadd.s32 %s332, 1
      %p336 = scmp.eq.s32.totalorder %s36, 1
      %p337 = scmp.ne.s32.totalorder %s332, %s334
      %p338 = scmp.eq.s32.totalorder %s36, 0
      %p339 = por %p337, %p338
      %p340 = scmp.ne.s32.totalorder %s332, %s334
      %p341 = scmp.eq.s32.totalorder %s41, 1
      %p342 = por %p340, %p341
      %p343 = scmp.ne.s32.totalorder %s334, %s335
      %p344 = scmp.eq.s32.totalorder %s41, 0
      %p345 = por %p343, %p344
      %p346 = scmp.ne.s32.totalorder %s334, %s335
      %p347 = scmp.eq.s32.totalorder %s42, 1
      %p348 = por %p346, %p347
      %p350 = scmp.ne.s32.totalorder %s335, %s349
      %p351 = scmp.eq.s32.totalorder %s42, 0
      %p352 = por %p350, %p351
      %s354 = sadd.s32 %s353, 1
      %p357 = scmp.eq.s32.totalorder %s36, 1
      %p358 = scmp.ne.s32.totalorder %s353, %s355
      %p359 = scmp.eq.s32.totalorder %s36, 0
      %p360 = por %p358, %p359
      %p361 = scmp.ne.s32.totalorder %s353, %s355
      %p362 = scmp.eq.s32.totalorder %s41, 1
      %p363 = por %p361, %p362
      %p364 = scmp.ne.s32.totalorder %s355, %s356
      %p365 = scmp.eq.s32.totalorder %s41, 0
      %p366 = por %p364, %p365
      %p367 = scmp.ne.s32.totalorder %s355, %s356
      %p368 = scmp.eq.s32.totalorder %s42, 1
      %p369 = por %p367, %p368
      %p371 = scmp.ne.s32.totalorder %s356, %s370
      %p372 = scmp.eq.s32.totalorder %s42, 0
      %p373 = por %p371, %p372
      %s375 = sadd.s32 %s374, 1
      %p378 = scmp.eq.s32.totalorder %s36, 1
      %p379 = scmp.ne.s32.totalorder %s374, %s376
      %p380 = scmp.eq.s32.totalorder %s36, 0
      %p381 = por %p379, %p380
      %p382 = scmp.ne.s32.totalorder %s374, %s376
      %p383 = scmp.eq.s32.totalorder %s41, 1
      %p384 = por %p382, %p383
      %p385 = scmp.ne.s32.totalorder %s376, %s377
      %p386 = scmp.eq.s32.totalorder %s41, 0
      %p387 = por %p385, %p386
      %p388 = scmp.ne.s32.totalorder %s376, %s377
      %p389 = scmp.eq.s32.totalorder %s42, 1
      %p390 = por %p388, %p389
      %p392 = scmp.ne.s32.totalorder %s377, %s391
      %p393 = scmp.eq.s32.totalorder %s42, 0
      %p394 = por %p392, %p393
      %s396 = sadd.s32 %s395, 1
      %p399 = scmp.eq.s32.totalorder %s36, 1
      %p400 = scmp.ne.s32.totalorder %s395, %s397
      %p401 = scmp.eq.s32.totalorder %s36, 0
      %p402 = por %p400, %p401
      %p403 = scmp.ne.s32.totalorder %s395, %s397
      %p404 = scmp.eq.s32.totalorder %s41, 1
      %p405 = por %p403, %p404
      %p406 = scmp.ne.s32.totalorder %s397, %s398
      %p407 = scmp.eq.s32.totalorder %s41, 0
      %p408 = por %p406, %p407
      %p409 = scmp.ne.s32.totalorder %s397, %s398
      %p410 = scmp.eq.s32.totalorder %s42, 1
      %p411 = por %p409, %p410
      %p413 = scmp.ne.s32.totalorder %s398, %s412
      %p414 = scmp.eq.s32.totalorder %s42, 0
      %p415 = por %p413, %p414
      %s416 = ssub.s32 %s36, %s43
      %p417 = scmp.eq.s32.totalorder %s416, 0
      %s419 = sadd.s32 %s418, 1
      %s420 = scalar_select %p417, %s418, %s419
      %p423 = pneg %p417
      %p424 = scmp.eq.s32.totalorder %s36, 1
      %p425 = por %p423, %p424
      %p426 = scmp.ne.s32.totalorder %s418, %s421
      %p427 = scmp.eq.s32.totalorder %s36, 0
      %p428 = por %p426, %p427
      %p429 = scmp.ne.s32.totalorder %s418, %s421
      %p430 = scmp.eq.s32.totalorder %s41, 1
      %p431 = por %p429, %p430
      %p432 = scmp.ne.s32.totalorder %s421, %s422
      %p433 = scmp.eq.s32.totalorder %s41, 0
      %p434 = por %p432, %p433
      %p435 = scmp.ne.s32.totalorder %s421, %s422
      %p436 = scmp.eq.s32.totalorder %s42, 1
      %p437 = por %p435, %p436
      %p439 = scmp.ne.s32.totalorder %s422, %s438
      %p440 = scmp.eq.s32.totalorder %s42, 0
      %p441 = por %p439, %p440
      %p442 = scmp.le.s32.totalorder 1, %s36
      %p443 = scmp.lt.s32.totalorder %s36, 3
      %p444 = pnand %p442, %p443
      %p445 = pneg %p444
      // Predicated region
      $region9: #{tpu_custom_call.1} parent=5 // pred_check
        _
      $region10: #{tpu_custom_call.1} parent=5 // pred_check_branch
        %447 = sbr.rel (%p444) target = $region12
      $region11: #{tpu_custom_call.1} parent=5 // pred_region
        %s448 = ssub.s32 %s36, 1
        // Predicated region
        $region13: #{tpu_custom_call.1} parent=11 // pred_check
          %p449 = pneg %p135
        $region14: #{tpu_custom_call.1} parent=11 // pred_check_branch
          %451 = sbr.rel (%p449) target = $region16
        $region15: #{tpu_custom_call.1} parent=11 // pred_region
          %s453 = ssub.s32 256, 256
          %454 = vsyncadd [#allocation9], %s453
          %s455 = sshll.u32 [#allocation8], 4
          %s456 = int_to_ptr.vmem [resolvable:$true] %s455
          %461 = dma.hbm_to_vmem [thread:$0]  %s3, 256, %s456, [#allocation9], 64, 64, 4
        $region16: #{tpu_custom_call.1} parent=11 // pred_fallthru
          _
        // Predicated region
        $region17: #{tpu_custom_call.1} parent=11 // pred_check
          %p462 = pneg %p156
        $region18: #{tpu_custom_call.1} parent=11 // pred_check_branch
          %464 = sbr.rel (%p462) target = $region20
        $region19: #{tpu_custom_call.1} parent=11 // pred_region
          _
        $region20: #{tpu_custom_call.1} parent=11 // pred_fallthru
          _
        // Predicated region
        $region21: #{tpu_custom_call.1} parent=11 // pred_check
          %p465 = pneg %p177
        $region22: #{tpu_custom_call.1} parent=11 // pred_check_branch
          %467 = sbr.rel (%p465) target = $region24
        $region23: #{tpu_custom_call.1} parent=11 // pred_region
          %s469 = ssub.s32 128, 128
          %470 = vsyncadd [#allocation9], %s469
          %s471 = sshll.u32 [#allocation10], 4
          %s472 = int_to_ptr.vmem [resolvable:$true] %s471
          %477 = dma.hbm_to_vmem [thread:$0]  %s5, 128, %s472, [#allocation9], 64, 64, 4
        $region24: #{tpu_custom_call.1} parent=11 // pred_fallthru
          _
        // Predicated region
        $region25: #{tpu_custom_call.1} parent=11 // pred_check
          %p478 = pneg %p198
        $region26: #{tpu_custom_call.1} parent=11 // pred_check_branch
          %480 = sbr.rel (%p478) target = $region28
        $region27: #{tpu_custom_call.1} parent=11 // pred_region
          %s482 = ssub.s32 16, 16
          %483 = vsyncadd [#allocation12], %s482
          %s485 = sshll.u32 [#allocation11], 4
          %s486 = int_to_ptr.vmem [resolvable:$true] %s485
          %488 = dma.hbm_to_vmem [thread:$0]  %s6, 16, %s486, [#allocation12]
        $region28: #{tpu_custom_call.1} parent=11 // pred_fallthru
          _
        // Predicated region
        $region29: #{tpu_custom_call.1} parent=11 // pred_check
          %p489 = pneg %p219
        $region30: #{tpu_custom_call.1} parent=11 // pred_check_branch
          %491 = sbr.rel (%p489) target = $region32
        $region31: #{tpu_custom_call.1} parent=11 // pred_region
          _
        $region32: #{tpu_custom_call.1} parent=11 // pred_fallthru
          _
        // Predicated region
        $region33: #{tpu_custom_call.1} parent=11 // pred_check
          %p492 = pneg %p240
        $region34: #{tpu_custom_call.1} parent=11 // pred_check_branch
          %494 = sbr.rel (%p492) target = $region36
        $region35: #{tpu_custom_call.1} parent=11 // pred_region
          %s496 = ssub.s32 16, 16
          %497 = vsyncadd [#allocation12], %s496
          %s499 = sshll.u32 [#allocation13], 4
          %s500 = int_to_ptr.vmem [resolvable:$true] %s499
          %502 = dma.hbm_to_vmem [thread:$0]  %s8, 16, %s500, [#allocation12]
        $region36: #{tpu_custom_call.1} parent=11 // pred_fallthru
          _
        // Predicated region
        $region37: #{tpu_custom_call.1} parent=11 // pred_check
          %p503 = pneg %p261
        $region38: #{tpu_custom_call.1} parent=11 // pred_check_branch
          %505 = sbr.rel (%p503) target = $region40
        $region39: #{tpu_custom_call.1} parent=11 // pred_region
          %s507 = ssub.s32 128, 128
          %508 = vsyncadd [#allocation15], %s507
          %s509 = sshll.u32 [#allocation14], 4
          %s510 = int_to_ptr.vmem [resolvable:$true] %s509
          %515 = dma.hbm_to_vmem [thread:$0]  %s9, 128, %s510, [#allocation15], 64, 64, 4
        $region40: #{tpu_custom_call.1} parent=11 // pred_fallthru
          _
        // Predicated region
        $region41: #{tpu_custom_call.1} parent=11 // pred_check
          %p516 = pneg %p282
        $region42: #{tpu_custom_call.1} parent=11 // pred_check_branch
          %518 = sbr.rel (%p516) target = $region44
        $region43: #{tpu_custom_call.1} parent=11 // pred_region
          _
        $region44: #{tpu_custom_call.1} parent=11 // pred_fallthru
          _
        // Predicated region
        $region45: #{tpu_custom_call.1} parent=11 // pred_check
          %p519 = pneg %p303
        $region46: #{tpu_custom_call.1} parent=11 // pred_check_branch
          %521 = sbr.rel (%p519) target = $region48
        $region47: #{tpu_custom_call.1} parent=11 // pred_region
          %s523 = ssub.s32 256, 256
          %524 = vsyncadd [#allocation15], %s523
          %s525 = sshll.u32 [#allocation16], 4
          %s526 = int_to_ptr.vmem [resolvable:$true] %s525
          %531 = dma.hbm_to_vmem [thread:$0]  %s11, 256, %s526, [#allocation15], 64, 64, 4
        $region48: #{tpu_custom_call.1} parent=11 // pred_fallthru
          _
        // Predicated region
        $region49: #{tpu_custom_call.1} parent=11 // pred_check
          %p532 = pneg %p324
        $region50: #{tpu_custom_call.1} parent=11 // pred_check_branch
          %534 = sbr.rel (%p532) target = $region52
        $region51: #{tpu_custom_call.1} parent=11 // pred_region
          %s536 = ssub.s32 16, 16
          %537 = vsyncadd [#allocation18], %s536
          %s539 = sshll.u32 [#allocation17], 4
          %s540 = int_to_ptr.vmem [resolvable:$true] %s539
          %542 = dma.hbm_to_vmem [thread:$0]  %s12, 16, %s540, [#allocation18]
        $region52: #{tpu_custom_call.1} parent=11 // pred_fallthru
          _
        // Predicated region
        $region53: #{tpu_custom_call.1} parent=11 // pred_check
          %p543 = pneg %p345
        $region54: #{tpu_custom_call.1} parent=11 // pred_check_branch
          %545 = sbr.rel (%p543) target = $region56
        $region55: #{tpu_custom_call.1} parent=11 // pred_region
          %s547 = ssub.s32 128, 128
          %548 = vsyncadd [#allocation18], %s547
          %s549 = sshll.u32 [#allocation19], 4
          %s550 = int_to_ptr.vmem [resolvable:$true] %s549
          %555 = dma.hbm_to_vmem [thread:$0]  %s13, 128, %s550, [#allocation18], 64, 64, 4
        $region56: #{tpu_custom_call.1} parent=11 // pred_fallthru
          _
        // Predicated region
        $region57: #{tpu_custom_call.1} parent=11 // pred_check
          %p556 = pneg %p366
        $region58: #{tpu_custom_call.1} parent=11 // pred_check_branch
          %558 = sbr.rel (%p556) target = $region60
        $region59: #{tpu_custom_call.1} parent=11 // pred_region
          _
        $region60: #{tpu_custom_call.1} parent=11 // pred_fallthru
          _
        // Predicated region
        $region61: #{tpu_custom_call.1} parent=11 // pred_check
          %p559 = pneg %p387
        $region62: #{tpu_custom_call.1} parent=11 // pred_check_branch
          %561 = sbr.rel (%p559) target = $region64
        $region63: #{tpu_custom_call.1} parent=11 // pred_region
          _
        $region64: #{tpu_custom_call.1} parent=11 // pred_fallthru
          _
        // Predicated region
        $region65: #{tpu_custom_call.1} parent=11 // pred_check
          %p562 = pneg %p408
        $region66: #{tpu_custom_call.1} parent=11 // pred_check_branch
          %564 = sbr.rel (%p562) target = $region68
        $region67: #{tpu_custom_call.1} parent=11 // pred_region
          _
        $region68: #{tpu_custom_call.1} parent=11 // pred_fallthru
          _
      $region12: #{tpu_custom_call.1} parent=5 // pred_fallthru
        _
      %p565 = scmp.lt.s32.totalorder %s36, 2
      // Predicated region
      $region69: #{tpu_custom_call.1} parent=5 // pred_check
        %p566 = pneg %p565
      $region70: #{tpu_custom_call.1} parent=5 // pred_check_branch
        %568 = sbr.rel (%p566) target = $region72
      $region71: #{tpu_custom_call.1} parent=5 // pred_region
        // Predicated region
        $region73: #{tpu_custom_call.1} parent=71 // pred_check
          %p569 = pneg %p56
        $region74: #{tpu_custom_call.1} parent=71 // pred_check_branch
          %571 = sbr.rel (%p569) target = $region76
        $region75: #{tpu_custom_call.1} parent=71 // pred_region
          %s572 = sand.u32 %s46, 1
          %s573 = scalar_lea.sflag [#allocation3], %s572
          %s574 = sand.u32 %s46, 1
          %s575 = smul.addr %s574, 64
          %s576 = scalar_lea.vmem [#allocation2], %s575
          %s577 = smul.u32 8, %s36
          %s579 = ssub.s32 1024, 1024
          %580 = vsyncadd %s573, %s579
          %s581 = smul.addr %s577, 2
          %s582 = smul.addr %s581, 64
          %s583 = scalar_lea.hbm %s0, %s582
          %s584 = sshll.u32 %s576, 4
          %s585 = int_to_ptr.vmem [resolvable:$true] %s584
          %590 = dma.hbm_to_vmem [thread:$0]  %s583, 1024, %s585, %s573, 64, 64, 4
        $region76: #{tpu_custom_call.1} parent=71 // pred_fallthru
          _
        // Predicated region
        $region77: #{tpu_custom_call.1} parent=71 // pred_check
          %p591 = pneg %p82
        $region78: #{tpu_custom_call.1} parent=71 // pred_check_branch
          %593 = sbr.rel (%p591) target = $region80
        $region79: #{tpu_custom_call.1} parent=71 // pred_region
          %s594 = sand.u32 %s36, 1
          %s595 = scalar_lea.sflag [#allocation6], %s594
          %s596 = sand.u32 %s72, 1
          %s597 = smul.addr %s596, 64
          %s598 = scalar_lea.vmem [#allocation5], %s597
          %s599 = smul.u32 8, %s36
          %s601 = ssub.s32 1024, 1024
          %602 = vsyncadd %s595, %s601
          %s603 = smul.addr %s599, 2
          %s604 = smul.addr %s603, 64
          %s605 = scalar_lea.hbm %s1, %s604
          %s606 = sshll.u32 %s598, 4
          %s607 = int_to_ptr.vmem [resolvable:$true] %s606
          %612 = dma.hbm_to_vmem [thread:$0]  %s605, 1024, %s607, %s595, 64, 64, 4
        $region80: #{tpu_custom_call.1} parent=71 // pred_fallthru
          _
        // Predicated region
        $region81: #{tpu_custom_call.1} parent=71 // pred_check
          %p613 = pneg %p108
        $region82: #{tpu_custom_call.1} parent=71 // pred_check_branch
          %615 = sbr.rel (%p613) target = $region84
        $region83: #{tpu_custom_call.1} parent=71 // pred_region
          %s616 = sand.u32 %s36, 1
          %s617 = scalar_lea.sflag [#allocation6], %s616
          %s618 = sand.u32 %s98, 1
          %s619 = smul.addr %s618, 128
          %s620 = scalar_lea.vmem [#allocation7], %s619
          %s621 = smul.u32 8, %s36
          %s623 = ssub.s32 2048, 2048
          %624 = vsyncadd %s617, %s623
          %s625 = smul.addr %s621, 2
          %s626 = smul.addr %s625, 128
          %s627 = scalar_lea.hbm %s2, %s626
          %s628 = sshll.u32 %s620, 4
          %s629 = int_to_ptr.vmem [resolvable:$true] %s628
          %634 = dma.hbm_to_vmem [thread:$0]  %s627, 2048, %s629, %s617, 128, 128, 8
        $region84: #{tpu_custom_call.1} parent=71 // pred_fallthru
          _
      $region72: #{tpu_custom_call.1} parent=5 // pred_fallthru
        _
      %p635 = scmp.le.s32.totalorder 1, %s36
      %p636 = scmp.lt.s32.totalorder %s36, 3
      %p637 = pnand %p635, %p636
      %p638 = pneg %p637
      // Predicated region
      $region85: #{tpu_custom_call.1} parent=5 // pred_check
        _
      $region86: #{tpu_custom_call.1} parent=5 // pred_check_branch
        %640 = sbr.rel (%p637) target = $region88
      $region87: #{tpu_custom_call.1} parent=5 // pred_region
        %s641 = ssub.s32 %s36, 1
        %s642 = sand.u32 %s49, 1
        %s643 = scalar_lea.sflag [#allocation3], %s642
        %s644 = sand.u32 %s49, 1
        %s645 = smul.addr %s644, 64
        %s646 = scalar_lea.vmem [#allocation2], %s645
        // Predicated region
        $region89: #{tpu_custom_call.1} parent=87 // pred_check
          %p647 = pneg %p62
        $region90: #{tpu_custom_call.1} parent=87 // pred_check_branch
          %649 = sbr.rel (%p647) target = $region92
        $region91: #{tpu_custom_call.1} parent=87 // pred_region
          %650 = dma.done %s643, 1024
        $region92: #{tpu_custom_call.1} parent=87 // pred_fallthru
          _
        %s651 = sand.u32 %s41, 1
        %s652 = scalar_lea.sflag [#allocation6], %s651
        %s653 = sand.u32 %s75, 1
        %s654 = smul.addr %s653, 64
        %s655 = scalar_lea.vmem [#allocation5], %s654
        // Predicated region
        $region93: #{tpu_custom_call.1} parent=87 // pred_check
          %p656 = pneg %p88
        $region94: #{tpu_custom_call.1} parent=87 // pred_check_branch
          %658 = sbr.rel (%p656) target = $region96
        $region95: #{tpu_custom_call.1} parent=87 // pred_region
          %659 = dma.done %s652, 1024
        $region96: #{tpu_custom_call.1} parent=87 // pred_fallthru
          _
        %s660 = sand.u32 %s41, 1
        %s661 = scalar_lea.sflag [#allocation6], %s660
        %s662 = sand.u32 %s101, 1
        %s663 = smul.addr %s662, 128
        %s664 = scalar_lea.vmem [#allocation7], %s663
        // Predicated region
        $region97: #{tpu_custom_call.1} parent=87 // pred_check
          %p665 = pneg %p114
        $region98: #{tpu_custom_call.1} parent=87 // pred_check_branch
          %667 = sbr.rel (%p665) target = $region100
        $region99: #{tpu_custom_call.1} parent=87 // pred_region
          %668 = dma.done %s661, 2048
        $region100: #{tpu_custom_call.1} parent=87 // pred_fallthru
          _
        // Predicated region
        $region101: #{tpu_custom_call.1} parent=87 // pred_check
          %p669 = pneg %p135
        $region102: #{tpu_custom_call.1} parent=87 // pred_check_branch
          %671 = sbr.rel (%p669) target = $region104
        $region103: #{tpu_custom_call.1} parent=87 // pred_region
          %672 = dma.done [#allocation9], 256
        $region104: #{tpu_custom_call.1} parent=87 // pred_fallthru
          _
        // Predicated region
        $region105: #{tpu_custom_call.1} parent=87 // pred_check
          %p673 = pneg %p177
        $region106: #{tpu_custom_call.1} parent=87 // pred_check_branch
          %675 = sbr.rel (%p673) target = $region108
        $region107: #{tpu_custom_call.1} parent=87 // pred_region
          %676 = dma.done [#allocation9], 128
        $region108: #{tpu_custom_call.1} parent=87 // pred_fallthru
          _
        // Predicated region
        $region109: #{tpu_custom_call.1} parent=87 // pred_check
          %p677 = pneg %p198
        $region110: #{tpu_custom_call.1} parent=87 // pred_check_branch
          %679 = sbr.rel (%p677) target = $region112
        $region111: #{tpu_custom_call.1} parent=87 // pred_region
          %680 = dma.done [#allocation12], 16
        $region112: #{tpu_custom_call.1} parent=87 // pred_fallthru
          _
        // Predicated region
        $region113: #{tpu_custom_call.1} parent=87 // pred_check
          %p681 = pneg %p240
        $region114: #{tpu_custom_call.1} parent=87 // pred_check_branch
          %683 = sbr.rel (%p681) target = $region116
        $region115: #{tpu_custom_call.1} parent=87 // pred_region
          %684 = dma.done [#allocation12], 16
        $region116: #{tpu_custom_call.1} parent=87 // pred_fallthru
          _
        // Predicated region
        $region117: #{tpu_custom_call.1} parent=87 // pred_check
          %p685 = pneg %p261
        $region118: #{tpu_custom_call.1} parent=87 // pred_check_branch
          %687 = sbr.rel (%p685) target = $region120
        $region119: #{tpu_custom_call.1} parent=87 // pred_region
          %688 = dma.done [#allocation15], 128
        $region120: #{tpu_custom_call.1} parent=87 // pred_fallthru
          _
        // Predicated region
        $region121: #{tpu_custom_call.1} parent=87 // pred_check
          %p689 = pneg %p303
        $region122: #{tpu_custom_call.1} parent=87 // pred_check_branch
          %691 = sbr.rel (%p689) target = $region124
        $region123: #{tpu_custom_call.1} parent=87 // pred_region
          %692 = dma.done [#allocation15], 256
        $region124: #{tpu_custom_call.1} parent=87 // pred_fallthru
          _
        // Predicated region
        $region125: #{tpu_custom_call.1} parent=87 // pred_check
          %p693 = pneg %p324
        $region126: #{tpu_custom_call.1} parent=87 // pred_check_branch
          %695 = sbr.rel (%p693) target = $region128
        $region127: #{tpu_custom_call.1} parent=87 // pred_region
          %696 = dma.done [#allocation18], 16
        $region128: #{tpu_custom_call.1} parent=87 // pred_fallthru
          _
        // Predicated region
        $region129: #{tpu_custom_call.1} parent=87 // pred_check
          %p697 = pneg %p345
        $region130: #{tpu_custom_call.1} parent=87 // pred_check_branch
          %699 = sbr.rel (%p697) target = $region132
        $region131: #{tpu_custom_call.1} parent=87 // pred_region
          %700 = dma.done [#allocation18], 128
        $region132: #{tpu_custom_call.1} parent=87 // pred_fallthru
          _
        %s701 = sand.u32 %s49, 1
        %s702 = scalar_lea.sflag [#allocation3], %s701
        %s703 = sand.u32 %s49, 1
        %s704 = smul.addr %s703, 64
        %s705 = scalar_lea.vmem [#allocation2], %s704
        %p706 = pneg %p62
        %p707 = pneg %p59
        %s708 = sand.u32 %s41, 1
        %s709 = scalar_lea.sflag [#allocation6], %s708
        %s710 = sand.u32 %s75, 1
        %s711 = smul.addr %s710, 64
        %s712 = scalar_lea.vmem [#allocation5], %s711
        %p713 = pneg %p88
        %p714 = pneg %p85
        %s715 = sand.u32 %s41, 1
        %s716 = scalar_lea.sflag [#allocation6], %s715
        %s717 = sand.u32 %s101, 1
        %s718 = smul.addr %s717, 128
        %s719 = scalar_lea.vmem [#allocation7], %s718
        %p720 = pneg %p114
        %p721 = pneg %p111
        %p722 = pneg %p135
        %p723 = pneg %p132
        %p724 = pneg %p156
        %p725 = pneg %p153
        %p726 = pneg %p177
        %p727 = pneg %p174
        %p728 = pneg %p198
        %p729 = pneg %p195
        %p730 = pneg %p219
        %p731 = pneg %p216
        %p732 = pneg %p240
        %p733 = pneg %p237
        %p734 = pneg %p261
        %p735 = pneg %p258
        %p736 = pneg %p282
        %p737 = pneg %p279
        %p738 = pneg %p303
        %p739 = pneg %p300
        %p740 = pneg %p324
        %p741 = pneg %p321
        %p742 = pneg %p345
        %p743 = pneg %p342
        %p744 = pneg %p366
        %p745 = pneg %p363
        %p746 = pneg %p387
        %p747 = pneg %p384
        %p748 = pneg %p408
        %p749 = pneg %p405
        %p750 = pneg %p434
        %p751 = pneg %p431
        %s752 = sand.u32 %s421, 1
        %s753 = scalar_lea.sflag [#allocation4], %s752
        %s754 = sand.u32 %s421, 1
        %s755 = smul.addr %s754, 128
        %s756 = scalar_lea.vmem [#allocation20], %s755
        %s757 = smul.u32 8, %s41
        %s758 = smul.u32 8, %s41
        %s759 = smul.u32 8, %s41
        %s760 = smul.u32 8, %s41
        %v762 = vld [vmem:[%s646] sm:$0xf]
        %v763 = vld [vmem:[%s646 + $0x4] sm:$0xf]
        %v764 = vld [vmem:[%s646 + $0x8] sm:$0xf]
        %v765 = vld [vmem:[%s646 + $0xc] sm:$0xf]
        %v766 = vld [vmem:[%s646 + $0x10] sm:$0xf]
        %v767 = vld [vmem:[%s646 + $0x14] sm:$0xf]
        %v768 = vld [vmem:[%s646 + $0x18] sm:$0xf]
        %v769 = vld [vmem:[%s646 + $0x1c] sm:$0xf]
        %v770 = vld [vmem:[%s646 + $0x20] sm:$0xf]
        %v771 = vld [vmem:[%s646 + $0x24] sm:$0xf]
        %v772 = vld [vmem:[%s646 + $0x28] sm:$0xf]
        %v773 = vld [vmem:[%s646 + $0x2c] sm:$0xf]
        %v774 = vld [vmem:[%s646 + $0x30] sm:$0xf]
        %v775 = vld [vmem:[%s646 + $0x34] sm:$0xf]
        %v776 = vld [vmem:[%s646 + $0x38] sm:$0xf]
        %v777 = vld [vmem:[%s646 + $0x3c] sm:$0xf]
        %v778 = vld [vmem:[%s655] sm:$0xf]
        %v779 = vld [vmem:[%s655 + $0x4] sm:$0xf]
        %v780 = vld [vmem:[%s655 + $0x8] sm:$0xf]
        %v781 = vld [vmem:[%s655 + $0xc] sm:$0xf]
        %v782 = vld [vmem:[%s655 + $0x10] sm:$0xf]
        %v783 = vld [vmem:[%s655 + $0x14] sm:$0xf]
        %v784 = vld [vmem:[%s655 + $0x18] sm:$0xf]
        %v785 = vld [vmem:[%s655 + $0x1c] sm:$0xf]
        %v786 = vld [vmem:[%s655 + $0x20] sm:$0xf]
        %v787 = vld [vmem:[%s655 + $0x24] sm:$0xf]
        %v788 = vld [vmem:[%s655 + $0x28] sm:$0xf]
        %v789 = vld [vmem:[%s655 + $0x2c] sm:$0xf]
        %v790 = vld [vmem:[%s655 + $0x30] sm:$0xf]
        %v791 = vld [vmem:[%s655 + $0x34] sm:$0xf]
        %v792 = vld [vmem:[%s655 + $0x38] sm:$0xf]
        %v793 = vld [vmem:[%s655 + $0x3c] sm:$0xf]
        %v794 = vld [vmem:[%s664] sm:$0xff]
        %v795 = vld [vmem:[%s664 + $0x8] sm:$0xff]
        %v796 = vld [vmem:[%s664 + $0x10] sm:$0xff]
        %v797 = vld [vmem:[%s664 + $0x18] sm:$0xff]
        %v798 = vld [vmem:[%s664 + $0x20] sm:$0xff]
        %v799 = vld [vmem:[%s664 + $0x28] sm:$0xff]
        %v800 = vld [vmem:[%s664 + $0x30] sm:$0xff]
        %v801 = vld [vmem:[%s664 + $0x38] sm:$0xff]
        %v802 = vld [vmem:[%s664 + $0x40] sm:$0xff]
        %v803 = vld [vmem:[%s664 + $0x48] sm:$0xff]
        %v804 = vld [vmem:[%s664 + $0x50] sm:$0xff]
        %v805 = vld [vmem:[%s664 + $0x58] sm:$0xff]
        %v806 = vld [vmem:[%s664 + $0x60] sm:$0xff]
        %v807 = vld [vmem:[%s664 + $0x68] sm:$0xff]
        %v808 = vld [vmem:[%s664 + $0x70] sm:$0xff]
        %v809 = vld [vmem:[%s664 + $0x78] sm:$0xff]
        %v810 = vld [vmem:[#allocation8] sm:$0xf]
        %v811 = vld [vmem:[#allocation8 + $0x4] sm:$0xf]
        %v812 = vld [vmem:[#allocation8 + $0x8] sm:$0xf]
        %v813 = vld [vmem:[#allocation8 + $0xc] sm:$0xf]
        %v814 = vld [vmem:[%s4] sm:$0x1]
        %v816 = vlaneseq
        %v817 = vshrl.u32 %v816, 7
        %v818 = vsub.s32 0, %v817
        %v819 = vrot.slane %v814, %v818
        %v837 = vunpack.c.l.b16 %v778
        %v838 = vunpack.c.l.b16 %v779
        %v839 = vunpack.c.l.b16 %v780
        %v840 = vunpack.c.l.b16 %v781
        %v841 = vunpack.c.l.b16 %v782
        %v842 = vunpack.c.l.b16 %v783
        %v843 = vunpack.c.l.b16 %v784
        %v844 = vunpack.c.l.b16 %v785
        %v845 = vunpack.c.l.b16 %v786
        %v846 = vunpack.c.l.b16 %v787
        %v847 = vunpack.c.l.b16 %v788
        %v848 = vunpack.c.l.b16 %v789
        %v849 = vunpack.c.l.b16 %v790
        %v850 = vunpack.c.l.b16 %v791
        %v851 = vunpack.c.l.b16 %v792
        %v852 = vunpack.c.l.b16 %v793
        %v853 = vpack.c.b16 %v838, %v837
        %v854 = vpack.c.b16 %v840, %v839
        %v855 = vpack.c.b16 %v842, %v841
        %v856 = vpack.c.b16 %v844, %v843
        %v857 = vpack.c.b16 %v846, %v845
        %v858 = vpack.c.b16 %v848, %v847
        %v859 = vpack.c.b16 %v850, %v849
        %v860 = vpack.c.b16 %v852, %v851
        %v865 = vunpack.c.l.b16 %v810
        %v866 = vunpack.c.l.b16 %v811
        %v867 = vunpack.c.l.b16 %v812
        %v868 = vunpack.c.l.b16 %v813
        %v869 = vpack.c.b16 %v866, %v865
        %v870 = vpack.c.b16 %v868, %v867
        %vm873 = vcmask 261120
        %v875 = vsel %vm873, %v853, 0
        %v878 = vsel %vm873, %v854, 0
        %v881 = vsel %vm873, %v855, 0
        %v884 = vsel %vm873, %v856, 0
        %v887 = vsel %vm873, %v857, 0
        %v890 = vsel %vm873, %v858, 0
        %v893 = vsel %vm873, %v859, 0
        %v896 = vsel %vm873, %v860, 0
        %898 = vmatprep.subr.bf16.mxu0 0
        %899 = vmatpush1.bf16.msra.mxu0 %v869
        %900 = vmatprep.subr.bf16.mxu0 0
        %901 = vmatpush1.bf16.msra.mxu0 %v870
        %902 = vmatprep.subr.bf16.mxu0 0
        %903 = vmatpush1.bf16.msra.mxu0 0
        %904 = vmatprep.subr.bf16.mxu0 0
        %905 = vmatpush1.bf16.msra.mxu0 0
        %906 = vmatprep.subr.bf16.mxu0 0
        %907 = vmatpush1.bf16.msra.mxu0 0
        %908 = vmatprep.subr.bf16.mxu0 0
        %909 = vmatpush1.bf16.msra.mxu0 0
        %910 = vmatprep.subr.bf16.mxu0 0
        %911 = vmatpush1.bf16.msra.mxu0 0
        %912 = vmatprep.subr.bf16.mxu0 0
        %913 = vmatpush1.bf16.msra.mxu0 0
        %914 = vmatprep.subr.bf16.mxu0 0
        %915 = vmatpush1.bf16.msra.mxu0 0
        %916 = vmatprep.subr.bf16.mxu0 0
        %917 = vmatpush1.bf16.msra.mxu0 0
        %918 = vmatprep.subr.bf16.mxu0 0
        %919 = vmatpush1.bf16.msra.mxu0 0
        %920 = vmatprep.subr.bf16.mxu0 0
        %921 = vmatpush1.bf16.msra.mxu0 0
        %922 = vmatprep.subr.bf16.mxu0 0
        %923 = vmatpush1.bf16.msra.mxu0 0
        %924 = vmatprep.subr.bf16.mxu0 0
        %925 = vmatpush1.bf16.msra.mxu0 0
        %926 = vmatprep.subr.bf16.mxu0 0
        %927 = vmatpush1.bf16.msra.mxu0 0
        %928 = vmatprep.subr.bf16.mxu0 0
        %929 = vmatpush1.bf16.msra.mxu0 0
        %930 = vmatprep.mubr.bf16.mxu0 0
        %931 = vmatmul.mubr.bf16.gmra.mrb[0].mxu0 %v875
        %v932 = vpop.f32.mrb[0].mxu0
        %v933 = vadd.f32 %v819, %v932
        %v934 = vpop.f32.mrb[0].mxu0
        %v935 = vpop.f32.mrb[0].mxu0
        %v936 = vadd.f32 %v819, %v935
        %v937 = vpop.f32.mrb[0].mxu0
        %938 = vmatprep.mubr.bf16.mxu0 0
        %939 = vmatmul.mubr.bf16.gmra.mrb[0].mxu0 %v878
        %v940 = vpop.f32.mrb[0].mxu0
        %v941 = vadd.f32 %v819, %v940
        %v942 = vpop.f32.mrb[0].mxu0
        %v943 = vpop.f32.mrb[0].mxu0
        %v944 = vadd.f32 %v819, %v943
        %v945 = vpop.f32.mrb[0].mxu0
        %946 = vmatprep.mubr.bf16.mxu0 0
        %947 = vmatmul.mubr.bf16.gmra.mrb[0].mxu0 %v881
        %v948 = vpop.f32.mrb[0].mxu0
        %v949 = vadd.f32 %v819, %v948
        %v950 = vpop.f32.mrb[0].mxu0
        %v951 = vpop.f32.mrb[0].mxu0
        %v952 = vadd.f32 %v819, %v951
        %v953 = vpop.f32.mrb[0].mxu0
        %954 = vmatprep.mubr.bf16.mxu0 0
        %955 = vmatmul.mubr.bf16.gmra.mrb[0].mxu0 %v884
        %v956 = vpop.f32.mrb[0].mxu0
        %v957 = vadd.f32 %v819, %v956
        %v958 = vpop.f32.mrb[0].mxu0
        %v959 = vpop.f32.mrb[0].mxu0
        %v960 = vadd.f32 %v819, %v959
        %v961 = vpop.f32.mrb[0].mxu0
        %962 = vmatprep.mubr.bf16.mxu0 0
        %963 = vmatmul.mubr.bf16.gmra.mrb[0].mxu0 %v887
        %v964 = vpop.f32.mrb[0].mxu0
        %v965 = vadd.f32 %v819, %v964
        %v966 = vpop.f32.mrb[0].mxu0
        %v967 = vpop.f32.mrb[0].mxu0
        %v968 = vadd.f32 %v819, %v967
        %v969 = vpop.f32.mrb[0].mxu0
        %970 = vmatprep.mubr.bf16.mxu0 0
        %971 = vmatmul.mubr.bf16.gmra.mrb[0].mxu0 %v890
        %v972 = vpop.f32.mrb[0].mxu0
        %v973 = vadd.f32 %v819, %v972
        %v974 = vpop.f32.mrb[0].mxu0
        %v975 = vpop.f32.mrb[0].mxu0
        %v976 = vadd.f32 %v819, %v975
        %v977 = vpop.f32.mrb[0].mxu0
        %978 = vmatprep.mubr.bf16.mxu0 0
        %979 = vmatmul.mubr.bf16.gmra.mrb[0].mxu0 %v893
        %v980 = vpop.f32.mrb[0].mxu0
        %v981 = vadd.f32 %v819, %v980
        %v982 = vpop.f32.mrb[0].mxu0
        %v983 = vpop.f32.mrb[0].mxu0
        %v984 = vadd.f32 %v819, %v983
        %v985 = vpop.f32.mrb[0].mxu0
        %986 = vmatprep.mubr.bf16.mxu0 0
        %987 = vmatmul.mubr.bf16.gmra.mrb[0].mxu0 %v896
        %v988 = vpop.f32.mrb[0].mxu0
        %v989 = vadd.f32 %v819, %v988
        %v990 = vpop.f32.mrb[0].mxu0
        %v991 = vpop.f32.mrb[0].mxu0
        %v992 = vadd.f32 %v819, %v991
        %v993 = vpop.f32.mrb[0].mxu0
        %994 = vdwg.mxu0
        %v995 = vxor.u32 %v933, 2147483648
        %v996 = vxor.u32 %v936, 2147483648
        %v997 = vxor.u32 %v941, 2147483648
        %v998 = vxor.u32 %v944, 2147483648
        %v999 = vxor.u32 %v949, 2147483648
        %v1000 = vxor.u32 %v952, 2147483648
        %v1001 = vxor.u32 %v957, 2147483648
        %v1002 = vxor.u32 %v960, 2147483648
        %v1003 = vxor.u32 %v965, 2147483648
        %v1004 = vxor.u32 %v968, 2147483648
        %v1005 = vxor.u32 %v973, 2147483648
        %v1006 = vxor.u32 %v976, 2147483648
        %v1007 = vxor.u32 %v981, 2147483648
        %v1008 = vxor.u32 %v984, 2147483648
        %v1009 = vxor.u32 %v989, 2147483648
        %v1010 = vxor.u32 %v992, 2147483648
        %v1011 = vmul.f32 %v995, 1.442695
        %v1012 = vpow.pop %v1011
        %v1013 = vmul.f32 %v996, 1.442695
        %v1014 = vpow.pop %v1013
        %v1015 = vmul.f32 %v997, 1.442695
        %v1016 = vpow.pop %v1015
        %v1017 = vmul.f32 %v998, 1.442695
        %v1018 = vpow.pop %v1017
        %v1019 = vmul.f32 %v999, 1.442695
        %v1020 = vpow.pop %v1019
        %v1021 = vmul.f32 %v1000, 1.442695
        %v1022 = vpow.pop %v1021
        %v1023 = vmul.f32 %v1001, 1.442695
        %v1024 = vpow.pop %v1023
        %v1025 = vmul.f32 %v1002, 1.442695
        %v1026 = vpow.pop %v1025
        %v1027 = vmul.f32 %v1003, 1.442695
        %v1028 = vpow.pop %v1027
        %v1029 = vmul.f32 %v1004, 1.442695
        %v1030 = vpow.pop %v1029
        %v1031 = vmul.f32 %v1005, 1.442695
        %v1032 = vpow.pop %v1031
        %v1033 = vmul.f32 %v1006, 1.442695
        %v1034 = vpow.pop %v1033
        %v1035 = vmul.f32 %v1007, 1.442695
        %v1036 = vpow.pop %v1035
        %v1037 = vmul.f32 %v1008, 1.442695
        %v1038 = vpow.pop %v1037
        %v1039 = vmul.f32 %v1009, 1.442695
        %v1040 = vpow.pop %v1039
        %v1041 = vmul.f32 %v1010, 1.442695
        %v1042 = vpow.pop %v1041
        %v1043 = vadd.f32 %v1012, 1.0
        %v1044 = vadd.f32 %v1014, 1.0
        %v1045 = vadd.f32 %v1016, 1.0
        %v1046 = vadd.f32 %v1018, 1.0
        %v1047 = vadd.f32 %v1020, 1.0
        %v1048 = vadd.f32 %v1022, 1.0
        %v1049 = vadd.f32 %v1024, 1.0
        %v1050 = vadd.f32 %v1026, 1.0
        %v1051 = vadd.f32 %v1028, 1.0
        %v1052 = vadd.f32 %v1030, 1.0
        %v1053 = vadd.f32 %v1032, 1.0
        %v1054 = vadd.f32 %v1034, 1.0
        %v1055 = vadd.f32 %v1036, 1.0
        %v1056 = vadd.f32 %v1038, 1.0
        %v1057 = vadd.f32 %v1040, 1.0
        %v1058 = vadd.f32 %v1042, 1.0
        %v1059 = vrcp.pop %v1043
        %v1060 = vmul.f32 1.0, %v1059
        %v1061 = vrcp.pop %v1044
        %v1062 = vmul.f32 1.0, %v1061
        %v1063 = vrcp.pop %v1045
        %v1064 = vmul.f32 1.0, %v1063
        %v1065 = vrcp.pop %v1046
        %v1066 = vmul.f32 1.0, %v1065
        %v1067 = vrcp.pop %v1047
        %v1068 = vmul.f32 1.0, %v1067
        %v1069 = vrcp.pop %v1048
        %v1070 = vmul.f32 1.0, %v1069
        %v1071 = vrcp.pop %v1049
        %v1072 = vmul.f32 1.0, %v1071
        %v1073 = vrcp.pop %v1050
        %v1074 = vmul.f32 1.0, %v1073
        %v1075 = vrcp.pop %v1051
        %v1076 = vmul.f32 1.0, %v1075
        %v1077 = vrcp.pop %v1052
        %v1078 = vmul.f32 1.0, %v1077
        %v1079 = vrcp.pop %v1053
        %v1080 = vmul.f32 1.0, %v1079
        %v1081 = vrcp.pop %v1054
        %v1082 = vmul.f32 1.0, %v1081
        %v1083 = vrcp.pop %v1055
        %v1084 = vmul.f32 1.0, %v1083
        %v1085 = vrcp.pop %v1056
        %v1086 = vmul.f32 1.0, %v1085
        %v1087 = vrcp.pop %v1057
        %v1088 = vmul.f32 1.0, %v1087
        %v1089 = vrcp.pop %v1058
        %v1090 = vmul.f32 1.0, %v1089
        %v1091 = vld [vmem:[#allocation10] sm:$0xf]
        %v1092 = vld [vmem:[#allocation10 + $0x4] sm:$0xf]
        %v1093 = vld [vmem:[#allocation11] sm:$0x1]
        %v1095 = vlaneseq
        %v1096 = vshrl.u32 %v1095, 7
        %v1097 = vsub.s32 0, %v1096
        %v1098 = vrot.slane %v1093, %v1097
        %v1116 = vunpack.c.l.b16 %v762
        %v1117 = vunpack.c.l.b16 %v763
        %v1118 = vunpack.c.l.b16 %v764
        %v1119 = vunpack.c.l.b16 %v765
        %v1120 = vunpack.c.l.b16 %v766
        %v1121 = vunpack.c.l.b16 %v767
        %v1122 = vunpack.c.l.b16 %v768
        %v1123 = vunpack.c.l.b16 %v769
        %v1124 = vunpack.c.l.b16 %v770
        %v1125 = vunpack.c.l.b16 %v771
        %v1126 = vunpack.c.l.b16 %v772
        %v1127 = vunpack.c.l.b16 %v773
        %v1128 = vunpack.c.l.b16 %v774
        %v1129 = vunpack.c.l.b16 %v775
        %v1130 = vunpack.c.l.b16 %v776
        %v1131 = vunpack.c.l.b16 %v777
        %v1132 = vpack.c.b16 %v1117, %v1116
        %v1133 = vpack.c.b16 %v1119, %v1118
        %v1134 = vpack.c.b16 %v1121, %v1120
        %v1135 = vpack.c.b16 %v1123, %v1122
        %v1136 = vpack.c.b16 %v1125, %v1124
        %v1137 = vpack.c.b16 %v1127, %v1126
        %v1138 = vpack.c.b16 %v1129, %v1128
        %v1139 = vpack.c.b16 %v1131, %v1130
        %v1142 = vunpack.c.l.b16 %v1091
        %v1143 = vunpack.c.l.b16 %v1092
        %v1144 = vpack.c.b16 %v1143, %v1142
        %vm1146 = vcmask 130048
        %v1148 = vsel %vm1146, %v1132, 0
        %v1151 = vsel %vm1146, %v1133, 0
        %v1154 = vsel %vm1146, %v1134, 0
        %v1157 = vsel %vm1146, %v1135, 0
        %v1160 = vsel %vm1146, %v1136, 0
        %v1163 = vsel %vm1146, %v1137, 0
        %v1166 = vsel %vm1146, %v1138, 0
        %v1169 = vsel %vm1146, %v1139, 0
        %1171 = vmatprep.subr.bf16.mxu0 0
        %1172 = vmatpush1.bf16.msra.mxu0 %v1144
        %1173 = vmatprep.subr.bf16.mxu0 0
        %1174 = vmatpush1.bf16.msra.mxu0 0
        %1175 = vmatprep.subr.bf16.mxu0 0
        %1176 = vmatpush1.bf16.msra.mxu0 0
        %1177 = vmatprep.subr.bf16.mxu0 0
        %1178 = vmatpush1.bf16.msra.mxu0 0
        %1179 = vmatprep.subr.bf16.mxu0 0
        %1180 = vmatpush1.bf16.msra.mxu0 0
        %1181 = vmatprep.subr.bf16.mxu0 0
        %1182 = vmatpush1.bf16.msra.mxu0 0
        %1183 = vmatprep.subr.bf16.mxu0 0
        %1184 = vmatpush1.bf16.msra.mxu0 0
        %1185 = vmatprep.subr.bf16.mxu0 0
        %1186 = vmatpush1.bf16.msra.mxu0 0
        %1187 = vmatprep.subr.bf16.mxu0 0
        %1188 = vmatpush1.bf16.msra.mxu0 0
        %1189 = vmatprep.subr.bf16.mxu0 0
        %1190 = vmatpush1.bf16.msra.mxu0 0
        %1191 = vmatprep.subr.bf16.mxu0 0
        %1192 = vmatpush1.bf16.msra.mxu0 0
        %1193 = vmatprep.subr.bf16.mxu0 0
        %1194 = vmatpush1.bf16.msra.mxu0 0
        %1195 = vmatprep.subr.bf16.mxu0 0
        %1196 = vmatpush1.bf16.msra.mxu0 0
        %1197 = vmatprep.subr.bf16.mxu0 0
        %1198 = vmatpush1.bf16.msra.mxu0 0
        %1199 = vmatprep.subr.bf16.mxu0 0
        %1200 = vmatpush1.bf16.msra.mxu0 0
        %1201 = vmatprep.subr.bf16.mxu0 0
        %1202 = vmatpush1.bf16.msra.mxu0 0
        %1203 = vmatprep.mubr.bf16.mxu0 0
        %1204 = vmatmul.mubr.bf16.gmra.mrb[0].mxu0 %v1148
        %v1205 = vpop.f32.mrb[0].mxu0
        %v1206 = vadd.f32 %v1098, %v1205
        %v1207 = vpop.f32.mrb[0].mxu0
        %v1208 = vpop.f32.mrb[0].mxu0
        %v1209 = vadd.f32 %v1098, %v1208
        %v1210 = vpop.f32.mrb[0].mxu0
        %1211 = vmatprep.mubr.bf16.mxu0 0
        %1212 = vmatmul.mubr.bf16.gmra.mrb[0].mxu0 %v1151
        %v1213 = vpop.f32.mrb[0].mxu0
        %v1214 = vadd.f32 %v1098, %v1213
        %v1215 = vpop.f32.mrb[0].mxu0
        %v1216 = vpop.f32.mrb[0].mxu0
        %v1217 = vadd.f32 %v1098, %v1216
        %v1218 = vpop.f32.mrb[0].mxu0
        %1219 = vmatprep.mubr.bf16.mxu0 0
        %1220 = vmatmul.mubr.bf16.gmra.mrb[0].mxu0 %v1154
        %v1221 = vpop.f32.mrb[0].mxu0
        %v1222 = vadd.f32 %v1098, %v1221
        %v1223 = vpop.f32.mrb[0].mxu0
        %v1224 = vpop.f32.mrb[0].mxu0
        %v1225 = vadd.f32 %v1098, %v1224
        %v1226 = vpop.f32.mrb[0].mxu0
        %1227 = vmatprep.mubr.bf16.mxu0 0
        %1228 = vmatmul.mubr.bf16.gmra.mrb[0].mxu0 %v1157
        %v1229 = vpop.f32.mrb[0].mxu0
        %v1230 = vadd.f32 %v1098, %v1229
        %v1231 = vpop.f32.mrb[0].mxu0
        %v1232 = vpop.f32.mrb[0].mxu0
        %v1233 = vadd.f32 %v1098, %v1232
        %v1234 = vpop.f32.mrb[0].mxu0
        %1235 = vmatprep.mubr.bf16.mxu0 0
        %1236 = vmatmul.mubr.bf16.gmra.mrb[0].mxu0 %v1160
        %v1237 = vpop.f32.mrb[0].mxu0
        %v1238 = vadd.f32 %v1098, %v1237
        %v1239 = vpop.f32.mrb[0].mxu0
        %v1240 = vpop.f32.mrb[0].mxu0
        %v1241 = vadd.f32 %v1098, %v1240
        %v1242 = vpop.f32.mrb[0].mxu0
        %1243 = vmatprep.mubr.bf16.mxu0 0
        %1244 = vmatmul.mubr.bf16.gmra.mrb[0].mxu0 %v1163
        %v1245 = vpop.f32.mrb[0].mxu0
        %v1246 = vadd.f32 %v1098, %v1245
        %v1247 = vpop.f32.mrb[0].mxu0
        %v1248 = vpop.f32.mrb[0].mxu0
        %v1249 = vadd.f32 %v1098, %v1248
        %v1250 = vpop.f32.mrb[0].mxu0
        %1251 = vmatprep.mubr.bf16.mxu0 0
        %1252 = vmatmul.mubr.bf16.gmra.mrb[0].mxu0 %v1166
        %v1253 = vpop.f32.mrb[0].mxu0
        %v1254 = vadd.f32 %v1098, %v1253
        %v1255 = vpop.f32.mrb[0].mxu0
        %v1256 = vpop.f32.mrb[0].mxu0
        %v1257 = vadd.f32 %v1098, %v1256
        %v1258 = vpop.f32.mrb[0].mxu0
        %1259 = vmatprep.mubr.bf16.mxu0 0
        %1260 = vmatmul.mubr.bf16.gmra.mrb[0].mxu0 %v1169
        %v1261 = vpop.f32.mrb[0].mxu0
        %v1262 = vadd.f32 %v1098, %v1261
        %v1263 = vpop.f32.mrb[0].mxu0
        %v1264 = vpop.f32.mrb[0].mxu0
        %v1265 = vadd.f32 %v1098, %v1264
        %v1266 = vpop.f32.mrb[0].mxu0
        %1267 = vdwg.mxu0
        %v1268 = vxor.u32 %v1206, 2147483648
        %v1269 = vxor.u32 %v1209, 2147483648
        %v1270 = vxor.u32 %v1214, 2147483648
        %v1271 = vxor.u32 %v1217, 2147483648
        %v1272 = vxor.u32 %v1222, 2147483648
        %v1273 = vxor.u32 %v1225, 2147483648
        %v1274 = vxor.u32 %v1230, 2147483648
        %v1275 = vxor.u32 %v1233, 2147483648
        %v1276 = vxor.u32 %v1238, 2147483648
        %v1277 = vxor.u32 %v1241, 2147483648
        %v1278 = vxor.u32 %v1246, 2147483648
        %v1279 = vxor.u32 %v1249, 2147483648
        %v1280 = vxor.u32 %v1254, 2147483648
        %v1281 = vxor.u32 %v1257, 2147483648
        %v1282 = vxor.u32 %v1262, 2147483648
        %v1283 = vxor.u32 %v1265, 2147483648
        %v1284 = vmul.f32 %v1268, 1.442695
        %v1285 = vpow.pop %v1284
        %v1286 = vmul.f32 %v1269, 1.442695
        %v1287 = vpow.pop %v1286
        %v1288 = vmul.f32 %v1270, 1.442695
        %v1289 = vpow.pop %v1288
        %v1290 = vmul.f32 %v1271, 1.442695
        %v1291 = vpow.pop %v1290
        %v1292 = vmul.f32 %v1272, 1.442695
        %v1293 = vpow.pop %v1292
        %v1294 = vmul.f32 %v1273, 1.442695
        %v1295 = vpow.pop %v1294
        %v1296 = vmul.f32 %v1274, 1.442695
        %v1297 = vpow.pop %v1296
        %v1298 = vmul.f32 %v1275, 1.442695
        %v1299 = vpow.pop %v1298
        %v1300 = vmul.f32 %v1276, 1.442695
        %v1301 = vpow.pop %v1300
        %v1302 = vmul.f32 %v1277, 1.442695
        %v1303 = vpow.pop %v1302
        %v1304 = vmul.f32 %v1278, 1.442695
        %v1305 = vpow.pop %v1304
        %v1306 = vmul.f32 %v1279, 1.442695
        %v1307 = vpow.pop %v1306
        %v1308 = vmul.f32 %v1280, 1.442695
        %v1309 = vpow.pop %v1308
        %v1310 = vmul.f32 %v1281, 1.442695
        %v1311 = vpow.pop %v1310
        %v1312 = vmul.f32 %v1282, 1.442695
        %v1313 = vpow.pop %v1312
        %v1314 = vmul.f32 %v1283, 1.442695
        %v1315 = vpow.pop %v1314
        %v1316 = vadd.f32 %v1285, 1.0
        %v1317 = vadd.f32 %v1287, 1.0
        %v1318 = vadd.f32 %v1289, 1.0
        %v1319 = vadd.f32 %v1291, 1.0
        %v1320 = vadd.f32 %v1293, 1.0
        %v1321 = vadd.f32 %v1295, 1.0
        %v1322 = vadd.f32 %v1297, 1.0
        %v1323 = vadd.f32 %v1299, 1.0
        %v1324 = vadd.f32 %v1301, 1.0
        %v1325 = vadd.f32 %v1303, 1.0
        %v1326 = vadd.f32 %v1305, 1.0
        %v1327 = vadd.f32 %v1307, 1.0
        %v1328 = vadd.f32 %v1309, 1.0
        %v1329 = vadd.f32 %v1311, 1.0
        %v1330 = vadd.f32 %v1313, 1.0
        %v1331 = vadd.f32 %v1315, 1.0
        %v1332 = vrcp.pop %v1316
        %v1333 = vmul.f32 1.0, %v1332
        %v1334 = vrcp.pop %v1317
        %v1335 = vmul.f32 1.0, %v1334
        %v1336 = vrcp.pop %v1318
        %v1337 = vmul.f32 1.0, %v1336
        %v1338 = vrcp.pop %v1319
        %v1339 = vmul.f32 1.0, %v1338
        %v1340 = vrcp.pop %v1320
        %v1341 = vmul.f32 1.0, %v1340
        %v1342 = vrcp.pop %v1321
        %v1343 = vmul.f32 1.0, %v1342
        %v1344 = vrcp.pop %v1322
        %v1345 = vmul.f32 1.0, %v1344
        %v1346 = vrcp.pop %v1323
        %v1347 = vmul.f32 1.0, %v1346
        %v1348 = vrcp.pop %v1324
        %v1349 = vmul.f32 1.0, %v1348
        %v1350 = vrcp.pop %v1325
        %v1351 = vmul.f32 1.0, %v1350
        %v1352 = vrcp.pop %v1326
        %v1353 = vmul.f32 1.0, %v1352
        %v1354 = vrcp.pop %v1327
        %v1355 = vmul.f32 1.0, %v1354
        %v1356 = vrcp.pop %v1328
        %v1357 = vmul.f32 1.0, %v1356
        %v1358 = vrcp.pop %v1329
        %v1359 = vmul.f32 1.0, %v1358
        %v1360 = vrcp.pop %v1330
        %v1361 = vmul.f32 1.0, %v1360
        %v1362 = vrcp.pop %v1331
        %v1363 = vmul.f32 1.0, %v1362
        %v1364 = vpack.c.bf16 %v936, %v933
        %v1365 = vpack.c.bf16 %v944, %v941
        %v1366 = vpack.c.bf16 %v952, %v949
        %v1367 = vpack.c.bf16 %v960, %v957
        %v1368 = vpack.c.bf16 %v968, %v965
        %v1369 = vpack.c.bf16 %v976, %v973
        %v1370 = vpack.c.bf16 %v984, %v981
        %v1371 = vpack.c.bf16 %v992, %v989
        %1373 = vrot.lane.b32.xlu0 %v1364, 96
        %v1374 = vpop.permute.xlu0 %1373
        %1376 = vmatprep.subr.bf16.mxu0 0
        %1377 = vmatpush1.bf16.msra.mxu0 %v1374
        %1378 = vmatprep.subr.bf16.mxu0 0
        %1379 = vmatpush1.bf16.msra.mxu0 0
        %1380 = vmatprep.subr.bf16.mxu0 0
        %1381 = vmatpush1.bf16.msra.mxu0 0
        %1382 = vmatprep.subr.bf16.mxu0 0
        %1383 = vmatpush1.bf16.msra.mxu0 0
        %1384 = vmatprep.subr.bf16.mxu0 0
        %1385 = vmatpush1.bf16.msra.mxu0 0
        %1386 = vmatprep.subr.bf16.mxu0 0
        %1387 = vmatpush1.bf16.msra.mxu0 0
        %1388 = vmatprep.subr.bf16.mxu0 0
        %1389 = vmatpush1.bf16.msra.mxu0 0
        %1390 = vmatprep.subr.bf16.mxu0 0
        %1391 = vmatpush1.bf16.msra.mxu0 0
        %1392 = vmatprep.subr.bf16.mxu0 0
        %1393 = vmatpush1.bf16.msra.mxu0 0
        %1394 = vmatprep.subr.bf16.mxu0 0
        %1395 = vmatpush1.bf16.msra.mxu0 0
        %1396 = vmatprep.subr.bf16.mxu0 0
        %1397 = vmatpush1.bf16.msra.mxu0 0
        %1398 = vmatprep.subr.bf16.mxu0 0
        %1399 = vmatpush1.bf16.msra.mxu0 0
        %1400 = vmatprep.subr.bf16.mxu0 0
        %1401 = vmatpush1.bf16.msra.mxu0 0
        %1402 = vmatprep.subr.bf16.mxu0 0
        %1403 = vmatpush1.bf16.msra.mxu0 0
        %1404 = vmatprep.subr.bf16.mxu0 0
        %1405 = vmatpush1.bf16.msra.mxu0 0
        %1406 = vmatprep.subr.bf16.mxu0 0
        %1407 = vmatpush1.bf16.msra.mxu0 0
        %1408 = vmatprep.mubr.bf16.mxu0 0
        %1409 = vmatmul.mubr.bf16.gmra.mrb[0].mxu0 %v1148
        %v1410 = vpop.f32.mrb[0].mxu0
        %v1411 = vadd.f32 0.0, %v1410
        %v1412 = vpop.f32.mrb[0].mxu0
        %v1413 = vpop.f32.mrb[0].mxu0
        %v1414 = vadd.f32 0.0, %v1413
        %v1415 = vpop.f32.mrb[0].mxu0
        %1416 = vdwg.mxu0
        %1418 = vrot.lane.b32.xlu0 %v1365, 96
        %v1419 = vpop.permute.xlu0 %1418
        %1421 = vmatprep.subr.bf16.mxu0 0
        %1422 = vmatpush1.bf16.msra.mxu0 %v1419
        %1423 = vmatprep.subr.bf16.mxu0 0
        %1424 = vmatpush1.bf16.msra.mxu0 0
        %1425 = vmatprep.subr.bf16.mxu0 0
        %1426 = vmatpush1.bf16.msra.mxu0 0
        %1427 = vmatprep.subr.bf16.mxu0 0
        %1428 = vmatpush1.bf16.msra.mxu0 0
        %1429 = vmatprep.subr.bf16.mxu0 0
        %1430 = vmatpush1.bf16.msra.mxu0 0
        %1431 = vmatprep.subr.bf16.mxu0 0
        %1432 = vmatpush1.bf16.msra.mxu0 0
        %1433 = vmatprep.subr.bf16.mxu0 0
        %1434 = vmatpush1.bf16.msra.mxu0 0
        %1435 = vmatprep.subr.bf16.mxu0 0
        %1436 = vmatpush1.bf16.msra.mxu0 0
        %1437 = vmatprep.subr.bf16.mxu0 0
        %1438 = vmatpush1.bf16.msra.mxu0 0
        %1439 = vmatprep.subr.bf16.mxu0 0
        %1440 = vmatpush1.bf16.msra.mxu0 0
        %1441 = vmatprep.subr.bf16.mxu0 0
        %1442 = vmatpush1.bf16.msra.mxu0 0
        %1443 = vmatprep.subr.bf16.mxu0 0
        %1444 = vmatpush1.bf16.msra.mxu0 0
        %1445 = vmatprep.subr.bf16.mxu0 0
        %1446 = vmatpush1.bf16.msra.mxu0 0
        %1447 = vmatprep.subr.bf16.mxu0 0
        %1448 = vmatpush1.bf16.msra.mxu0 0
        %1449 = vmatprep.subr.bf16.mxu0 0
        %1450 = vmatpush1.bf16.msra.mxu0 0
        %1451 = vmatprep.subr.bf16.mxu0 0
        %1452 = vmatpush1.bf16.msra.mxu0 0
        %1453 = vmatprep.mubr.bf16.mxu0 0
        %1454 = vmatmul.mubr.bf16.gmra.mrb[0].mxu0 %v1151
        %v1455 = vpop.f32.mrb[0].mxu0
        %v1456 = vadd.f32 0.0, %v1455
        %v1457 = vpop.f32.mrb[0].mxu0
        %v1458 = vpop.f32.mrb[0].mxu0
        %v1459 = vadd.f32 0.0, %v1458
        %v1460 = vpop.f32.mrb[0].mxu0
        %1461 = vdwg.mxu0
        %1463 = vrot.lane.b32.xlu0 %v1366, 96
        %v1464 = vpop.permute.xlu0 %1463
        %1466 = vmatprep.subr.bf16.mxu0 0
        %1467 = vmatpush1.bf16.msra.mxu0 %v1464
        %1468 = vmatprep.subr.bf16.mxu0 0
        %1469 = vmatpush1.bf16.msra.mxu0 0
        %1470 = vmatprep.subr.bf16.mxu0 0
        %1471 = vmatpush1.bf16.msra.mxu0 0
        %1472 = vmatprep.subr.bf16.mxu0 0
        %1473 = vmatpush1.bf16.msra.mxu0 0
        %1474 = vmatprep.subr.bf16.mxu0 0
        %1475 = vmatpush1.bf16.msra.mxu0 0
        %1476 = vmatprep.subr.bf16.mxu0 0
        %1477 = vmatpush1.bf16.msra.mxu0 0
        %1478 = vmatprep.subr.bf16.mxu0 0
        %1479 = vmatpush1.bf16.msra.mxu0 0
        %1480 = vmatprep.subr.bf16.mxu0 0
        %1481 = vmatpush1.bf16.msra.mxu0 0
        %1482 = vmatprep.subr.bf16.mxu0 0
        %1483 = vmatpush1.bf16.msra.mxu0 0
        %1484 = vmatprep.subr.bf16.mxu0 0
        %1485 = vmatpush1.bf16.msra.mxu0 0
        %1486 = vmatprep.subr.bf16.mxu0 0
        %1487 = vmatpush1.bf16.msra.mxu0 0
        %1488 = vmatprep.subr.bf16.mxu0 0
        %1489 = vmatpush1.bf16.msra.mxu0 0
        %1490 = vmatprep.subr.bf16.mxu0 0
        %1491 = vmatpush1.bf16.msra.mxu0 0
        %1492 = vmatprep.subr.bf16.mxu0 0
        %1493 = vmatpush1.bf16.msra.mxu0 0
        %1494 = vmatprep.subr.bf16.mxu0 0
        %1495 = vmatpush1.bf16.msra.mxu0 0
        %1496 = vmatprep.subr.bf16.mxu0 0
        %1497 = vmatpush1.bf16.msra.mxu0 0
        %1498 = vmatprep.mubr.bf16.mxu0 0
        %1499 = vmatmul.mubr.bf16.gmra.mrb[0].mxu0 %v1154
        %v1500 = vpop.f32.mrb[0].mxu0
        %v1501 = vadd.f32 0.0, %v1500
        %v1502 = vpop.f32.mrb[0].mxu0
        %v1503 = vpop.f32.mrb[0].mxu0
        %v1504 = vadd.f32 0.0, %v1503
        %v1505 = vpop.f32.mrb[0].mxu0
        %1506 = vdwg.mxu0
        %1508 = vrot.lane.b32.xlu0 %v1367, 96
        %v1509 = vpop.permute.xlu0 %1508
        %1511 = vmatprep.subr.bf16.mxu0 0
        %1512 = vmatpush1.bf16.msra.mxu0 %v1509
        %1513 = vmatprep.subr.bf16.mxu0 0
        %1514 = vmatpush1.bf16.msra.mxu0 0
        %1515 = vmatprep.subr.bf16.mxu0 0
        %1516 = vmatpush1.bf16.msra.mxu0 0
        %1517 = vmatprep.subr.bf16.mxu0 0
        %1518 = vmatpush1.bf16.msra.mxu0 0
        %1519 = vmatprep.subr.bf16.mxu0 0
        %1520 = vmatpush1.bf16.msra.mxu0 0
        %1521 = vmatprep.subr.bf16.mxu0 0
        %1522 = vmatpush1.bf16.msra.mxu0 0
        %1523 = vmatprep.subr.bf16.mxu0 0
        %1524 = vmatpush1.bf16.msra.mxu0 0
        %1525 = vmatprep.subr.bf16.mxu0 0
        %1526 = vmatpush1.bf16.msra.mxu0 0
        %1527 = vmatprep.subr.bf16.mxu0 0
        %1528 = vmatpush1.bf16.msra.mxu0 0
        %1529 = vmatprep.subr.bf16.mxu0 0
        %1530 = vmatpush1.bf16.msra.mxu0 0
        %1531 = vmatprep.subr.bf16.mxu0 0
        %1532 = vmatpush1.bf16.msra.mxu0 0
        %1533 = vmatprep.subr.bf16.mxu0 0
        %1534 = vmatpush1.bf16.msra.mxu0 0
        %1535 = vmatprep.subr.bf16.mxu0 0
        %1536 = vmatpush1.bf16.msra.mxu0 0
        %1537 = vmatprep.subr.bf16.mxu0 0
        %1538 = vmatpush1.bf16.msra.mxu0 0
        %1539 = vmatprep.subr.bf16.mxu0 0
        %1540 = vmatpush1.bf16.msra.mxu0 0
        %1541 = vmatprep.subr.bf16.mxu0 0
        %1542 = vmatpush1.bf16.msra.mxu0 0
        %1543 = vmatprep.mubr.bf16.mxu0 0
        %1544 = vmatmul.mubr.bf16.gmra.mrb[0].mxu0 %v1157
        %v1545 = vpop.f32.mrb[0].mxu0
        %v1546 = vadd.f32 0.0, %v1545
        %v1547 = vpop.f32.mrb[0].mxu0
        %v1548 = vpop.f32.mrb[0].mxu0
        %v1549 = vadd.f32 0.0, %v1548
        %v1550 = vpop.f32.mrb[0].mxu0
        %1551 = vdwg.mxu0
        %1553 = vrot.lane.b32.xlu0 %v1368, 96
        %v1554 = vpop.permute.xlu0 %1553
        %1556 = vmatprep.subr.bf16.mxu0 0
        %1557 = vmatpush1.bf16.msra.mxu0 %v1554
        %1558 = vmatprep.subr.bf16.mxu0 0
        %1559 = vmatpush1.bf16.msra.mxu0 0
        %1560 = vmatprep.subr.bf16.mxu0 0
        %1561 = vmatpush1.bf16.msra.mxu0 0
        %1562 = vmatprep.subr.bf16.mxu0 0
        %1563 = vmatpush1.bf16.msra.mxu0 0
        %1564 = vmatprep.subr.bf16.mxu0 0
        %1565 = vmatpush1.bf16.msra.mxu0 0
        %1566 = vmatprep.subr.bf16.mxu0 0
        %1567 = vmatpush1.bf16.msra.mxu0 0
        %1568 = vmatprep.subr.bf16.mxu0 0
        %1569 = vmatpush1.bf16.msra.mxu0 0
        %1570 = vmatprep.subr.bf16.mxu0 0
        %1571 = vmatpush1.bf16.msra.mxu0 0
        %1572 = vmatprep.subr.bf16.mxu0 0
        %1573 = vmatpush1.bf16.msra.mxu0 0
        %1574 = vmatprep.subr.bf16.mxu0 0
        %1575 = vmatpush1.bf16.msra.mxu0 0
        %1576 = vmatprep.subr.bf16.mxu0 0
        %1577 = vmatpush1.bf16.msra.mxu0 0
        %1578 = vmatprep.subr.bf16.mxu0 0
        %1579 = vmatpush1.bf16.msra.mxu0 0
        %1580 = vmatprep.subr.bf16.mxu0 0
        %1581 = vmatpush1.bf16.msra.mxu0 0
        %1582 = vmatprep.subr.bf16.mxu0 0
        %1583 = vmatpush1.bf16.msra.mxu0 0
        %1584 = vmatprep.subr.bf16.mxu0 0
        %1585 = vmatpush1.bf16.msra.mxu0 0
        %1586 = vmatprep.subr.bf16.mxu0 0
        %1587 = vmatpush1.bf16.msra.mxu0 0
        %1588 = vmatprep.mubr.bf16.mxu0 0
        %1589 = vmatmul.mubr.bf16.gmra.mrb[0].mxu0 %v1160
        %v1590 = vpop.f32.mrb[0].mxu0
        %v1591 = vadd.f32 0.0, %v1590
        %v1592 = vpop.f32.mrb[0].mxu0
        %v1593 = vpop.f32.mrb[0].mxu0
        %v1594 = vadd.f32 0.0, %v1593
        %v1595 = vpop.f32.mrb[0].mxu0
        %1596 = vdwg.mxu0
        %1598 = vrot.lane.b32.xlu0 %v1369, 96
        %v1599 = vpop.permute.xlu0 %1598
        %1601 = vmatprep.subr.bf16.mxu0 0
        %1602 = vmatpush1.bf16.msra.mxu0 %v1599
        %1603 = vmatprep.subr.bf16.mxu0 0
        %1604 = vmatpush1.bf16.msra.mxu0 0
        %1605 = vmatprep.subr.bf16.mxu0 0
        %1606 = vmatpush1.bf16.msra.mxu0 0
        %1607 = vmatprep.subr.bf16.mxu0 0
        %1608 = vmatpush1.bf16.msra.mxu0 0
        %1609 = vmatprep.subr.bf16.mxu0 0
        %1610 = vmatpush1.bf16.msra.mxu0 0
        %1611 = vmatprep.subr.bf16.mxu0 0
        %1612 = vmatpush1.bf16.msra.mxu0 0
        %1613 = vmatprep.subr.bf16.mxu0 0
        %1614 = vmatpush1.bf16.msra.mxu0 0
        %1615 = vmatprep.subr.bf16.mxu0 0
        %1616 = vmatpush1.bf16.msra.mxu0 0
        %1617 = vmatprep.subr.bf16.mxu0 0
        %1618 = vmatpush1.bf16.msra.mxu0 0
        %1619 = vmatprep.subr.bf16.mxu0 0
        %1620 = vmatpush1.bf16.msra.mxu0 0
        %1621 = vmatprep.subr.bf16.mxu0 0
        %1622 = vmatpush1.bf16.msra.mxu0 0
        %1623 = vmatprep.subr.bf16.mxu0 0
        %1624 = vmatpush1.bf16.msra.mxu0 0
        %1625 = vmatprep.subr.bf16.mxu0 0
        %1626 = vmatpush1.bf16.msra.mxu0 0
        %1627 = vmatprep.subr.bf16.mxu0 0
        %1628 = vmatpush1.bf16.msra.mxu0 0
        %1629 = vmatprep.subr.bf16.mxu0 0
        %1630 = vmatpush1.bf16.msra.mxu0 0
        %1631 = vmatprep.subr.bf16.mxu0 0
        %1632 = vmatpush1.bf16.msra.mxu0 0
        %1633 = vmatprep.mubr.bf16.mxu0 0
        %1634 = vmatmul.mubr.bf16.gmra.mrb[0].mxu0 %v1163
        %v1635 = vpop.f32.mrb[0].mxu0
        %v1636 = vadd.f32 0.0, %v1635
        %v1637 = vpop.f32.mrb[0].mxu0
        %v1638 = vpop.f32.mrb[0].mxu0
        %v1639 = vadd.f32 0.0, %v1638
        %v1640 = vpop.f32.mrb[0].mxu0
        %1641 = vdwg.mxu0
        %1643 = vrot.lane.b32.xlu0 %v1370, 96
        %v1644 = vpop.permute.xlu0 %1643
        %1646 = vmatprep.subr.bf16.mxu0 0
        %1647 = vmatpush1.bf16.msra.mxu0 %v1644
        %1648 = vmatprep.subr.bf16.mxu0 0
        %1649 = vmatpush1.bf16.msra.mxu0 0
        %1650 = vmatprep.subr.bf16.mxu0 0
        %1651 = vmatpush1.bf16.msra.mxu0 0
        %1652 = vmatprep.subr.bf16.mxu0 0
        %1653 = vmatpush1.bf16.msra.mxu0 0
        %1654 = vmatprep.subr.bf16.mxu0 0
        %1655 = vmatpush1.bf16.msra.mxu0 0
        %1656 = vmatprep.subr.bf16.mxu0 0
        %1657 = vmatpush1.bf16.msra.mxu0 0
        %1658 = vmatprep.subr.bf16.mxu0 0
        %1659 = vmatpush1.bf16.msra.mxu0 0
        %1660 = vmatprep.subr.bf16.mxu0 0
        %1661 = vmatpush1.bf16.msra.mxu0 0
        %1662 = vmatprep.subr.bf16.mxu0 0
        %1663 = vmatpush1.bf16.msra.mxu0 0
        %1664 = vmatprep.subr.bf16.mxu0 0
        %1665 = vmatpush1.bf16.msra.mxu0 0
        %1666 = vmatprep.subr.bf16.mxu0 0
        %1667 = vmatpush1.bf16.msra.mxu0 0
        %1668 = vmatprep.subr.bf16.mxu0 0
        %1669 = vmatpush1.bf16.msra.mxu0 0
        %1670 = vmatprep.subr.bf16.mxu0 0
        %1671 = vmatpush1.bf16.msra.mxu0 0
        %1672 = vmatprep.subr.bf16.mxu0 0
        %1673 = vmatpush1.bf16.msra.mxu0 0
        %1674 = vmatprep.subr.bf16.mxu0 0
        %1675 = vmatpush1.bf16.msra.mxu0 0
        %1676 = vmatprep.subr.bf16.mxu0 0
        %1677 = vmatpush1.bf16.msra.mxu0 0
        %1678 = vmatprep.mubr.bf16.mxu0 0
        %1679 = vmatmul.mubr.bf16.gmra.mrb[0].mxu0 %v1166
        %v1680 = vpop.f32.mrb[0].mxu0
        %v1681 = vadd.f32 0.0, %v1680
        %v1682 = vpop.f32.mrb[0].mxu0
        %v1683 = vpop.f32.mrb[0].mxu0
        %v1684 = vadd.f32 0.0, %v1683
        %v1685 = vpop.f32.mrb[0].mxu0
        %1686 = vdwg.mxu0
        %1688 = vrot.lane.b32.xlu0 %v1371, 96
        %v1689 = vpop.permute.xlu0 %1688
        %1691 = vmatprep.subr.bf16.mxu0 0
        %1692 = vmatpush1.bf16.msra.mxu0 %v1689
        %1693 = vmatprep.subr.bf16.mxu0 0
        %1694 = vmatpush1.bf16.msra.mxu0 0
        %1695 = vmatprep.subr.bf16.mxu0 0
        %1696 = vmatpush1.bf16.msra.mxu0 0
        %1697 = vmatprep.subr.bf16.mxu0 0
        %1698 = vmatpush1.bf16.msra.mxu0 0
        %1699 = vmatprep.subr.bf16.mxu0 0
        %1700 = vmatpush1.bf16.msra.mxu0 0
        %1701 = vmatprep.subr.bf16.mxu0 0
        %1702 = vmatpush1.bf16.msra.mxu0 0
        %1703 = vmatprep.subr.bf16.mxu0 0
        %1704 = vmatpush1.bf16.msra.mxu0 0
        %1705 = vmatprep.subr.bf16.mxu0 0
        %1706 = vmatpush1.bf16.msra.mxu0 0
        %1707 = vmatprep.subr.bf16.mxu0 0
        %1708 = vmatpush1.bf16.msra.mxu0 0
        %1709 = vmatprep.subr.bf16.mxu0 0
        %1710 = vmatpush1.bf16.msra.mxu0 0
        %1711 = vmatprep.subr.bf16.mxu0 0
        %1712 = vmatpush1.bf16.msra.mxu0 0
        %1713 = vmatprep.subr.bf16.mxu0 0
        %1714 = vmatpush1.bf16.msra.mxu0 0
        %1715 = vmatprep.subr.bf16.mxu0 0
        %1716 = vmatpush1.bf16.msra.mxu0 0
        %1717 = vmatprep.subr.bf16.mxu0 0
        %1718 = vmatpush1.bf16.msra.mxu0 0
        %1719 = vmatprep.subr.bf16.mxu0 0
        %1720 = vmatpush1.bf16.msra.mxu0 0
        %1721 = vmatprep.subr.bf16.mxu0 0
        %1722 = vmatpush1.bf16.msra.mxu0 0
        %1723 = vmatprep.mubr.bf16.mxu0 0
        %1724 = vmatmul.mubr.bf16.gmra.mrb[0].mxu0 %v1169
        %v1725 = vpop.f32.mrb[0].mxu0
        %v1726 = vadd.f32 0.0, %v1725
        %v1727 = vpop.f32.mrb[0].mxu0
        %v1728 = vpop.f32.mrb[0].mxu0
        %v1729 = vadd.f32 0.0, %v1728
        %v1730 = vpop.f32.mrb[0].mxu0
        %1731 = vdwg.mxu0
        %v1732 = vmax.f32 %v1411, 0.0
        %v1733 = vmax.f32 %v1414, 0.0
        %v1734 = vmax.f32 %v1456, 0.0
        %v1735 = vmax.f32 %v1459, 0.0
        %v1736 = vmax.f32 %v1501, 0.0
        %v1737 = vmax.f32 %v1504, 0.0
        %v1738 = vmax.f32 %v1546, 0.0
        %v1739 = vmax.f32 %v1549, 0.0
        %v1740 = vmax.f32 %v1591, 0.0
        %v1741 = vmax.f32 %v1594, 0.0
        %v1742 = vmax.f32 %v1636, 0.0
        %v1743 = vmax.f32 %v1639, 0.0
        %v1744 = vmax.f32 %v1681, 0.0
        %v1745 = vmax.f32 %v1684, 0.0
        %v1746 = vmax.f32 %v1726, 0.0
        %v1747 = vmax.f32 %v1729, 0.0
        %v1748 = vpack.c.bf16 %v1733, %v1732
        %v1749 = vpack.c.bf16 %v1735, %v1734
        %v1750 = vpack.c.bf16 %v1737, %v1736
        %v1751 = vpack.c.bf16 %v1739, %v1738
        %v1752 = vpack.c.bf16 %v1741, %v1740
        %v1753 = vpack.c.bf16 %v1743, %v1742
        %v1754 = vpack.c.bf16 %v1745, %v1744
        %v1755 = vpack.c.bf16 %v1747, %v1746
        %v1756 = vld [vmem:[%s7] sm:$0xf]
        %v1757 = vld [vmem:[%s7 + $0x4] sm:$0xf]
        %v1758 = vld [vmem:[%s7 + $0x8] sm:$0xf]
        %v1759 = vld [vmem:[%s7 + $0xc] sm:$0xf]
        %v1760 = vld [vmem:[#allocation13] sm:$0x1]
        %v1762 = vlaneseq
        %v1763 = vshrl.u32 %v1762, 7
        %v1764 = vsub.s32 0, %v1763
        %v1765 = vrot.slane %v1760, %v1764
        %v1771 = vunpack.c.l.b16 %v1756
        %v1772 = vunpack.c.l.b16 %v1757
        %v1773 = vunpack.c.l.b16 %v1758
        %v1774 = vunpack.c.l.b16 %v1759
        %v1775 = vpack.c.b16 %v1772, %v1771
        %v1776 = vpack.c.b16 %v1774, %v1773
        %v1780 = vsel %vm873, %v1748, 0
        %v1783 = vsel %vm873, %v1749, 0
        %v1786 = vsel %vm873, %v1750, 0
        %v1789 = vsel %vm873, %v1751, 0
        %v1792 = vsel %vm873, %v1752, 0
        %v1795 = vsel %vm873, %v1753, 0
        %v1798 = vsel %vm873, %v1754, 0
        %v1801 = vsel %vm873, %v1755, 0
        %1803 = vmatprep.subr.bf16.mxu0 0
        %1804 = vmatpush1.bf16.msra.mxu0 %v1775
        %1805 = vmatprep.subr.bf16.mxu0 0
        %1806 = vmatpush1.bf16.msra.mxu0 %v1776
        %1807 = vmatprep.subr.bf16.mxu0 0
        %1808 = vmatpush1.bf16.msra.mxu0 0
        %1809 = vmatprep.subr.bf16.mxu0 0
        %1810 = vmatpush1.bf16.msra.mxu0 0
        %1811 = vmatprep.subr.bf16.mxu0 0
        %1812 = vmatpush1.bf16.msra.mxu0 0
        %1813 = vmatprep.subr.bf16.mxu0 0
        %1814 = vmatpush1.bf16.msra.mxu0 0
        %1815 = vmatprep.subr.bf16.mxu0 0
        %1816 = vmatpush1.bf16.msra.mxu0 0
        %1817 = vmatprep.subr.bf16.mxu0 0
        %1818 = vmatpush1.bf16.msra.mxu0 0
        %1819 = vmatprep.subr.bf16.mxu0 0
        %1820 = vmatpush1.bf16.msra.mxu0 0
        %1821 = vmatprep.subr.bf16.mxu0 0
        %1822 = vmatpush1.bf16.msra.mxu0 0
        %1823 = vmatprep.subr.bf16.mxu0 0
        %1824 = vmatpush1.bf16.msra.mxu0 0
        %1825 = vmatprep.subr.bf16.mxu0 0
        %1826 = vmatpush1.bf16.msra.mxu0 0
        %1827 = vmatprep.subr.bf16.mxu0 0
        %1828 = vmatpush1.bf16.msra.mxu0 0
        %1829 = vmatprep.subr.bf16.mxu0 0
        %1830 = vmatpush1.bf16.msra.mxu0 0
        %1831 = vmatprep.subr.bf16.mxu0 0
        %1832 = vmatpush1.bf16.msra.mxu0 0
        %1833 = vmatprep.subr.bf16.mxu0 0
        %1834 = vmatpush1.bf16.msra.mxu0 0
        %1835 = vmatprep.mubr.bf16.mxu0 0
        %1836 = vmatmul.mubr.bf16.gmra.mrb[0].mxu0 %v1780
        %v1837 = vpop.f32.mrb[0].mxu0
        %v1838 = vadd.f32 %v1765, %v1837
        %v1839 = vpop.f32.mrb[0].mxu0
        %v1840 = vpop.f32.mrb[0].mxu0
        %v1841 = vadd.f32 %v1765, %v1840
        %v1842 = vpop.f32.mrb[0].mxu0
        %1843 = vmatprep.mubr.bf16.mxu0 0
        %1844 = vmatmul.mubr.bf16.gmra.mrb[0].mxu0 %v1783
        %v1845 = vpop.f32.mrb[0].mxu0
        %v1846 = vadd.f32 %v1765, %v1845
        %v1847 = vpop.f32.mrb[0].mxu0
        %v1848 = vpop.f32.mrb[0].mxu0
        %v1849 = vadd.f32 %v1765, %v1848
        %v1850 = vpop.f32.mrb[0].mxu0
        %1851 = vmatprep.mubr.bf16.mxu0 0
        %1852 = vmatmul.mubr.bf16.gmra.mrb[0].mxu0 %v1786
        %v1853 = vpop.f32.mrb[0].mxu0
        %v1854 = vadd.f32 %v1765, %v1853
        %v1855 = vpop.f32.mrb[0].mxu0
        %v1856 = vpop.f32.mrb[0].mxu0
        %v1857 = vadd.f32 %v1765, %v1856
        %v1858 = vpop.f32.mrb[0].mxu0
        %1859 = vmatprep.mubr.bf16.mxu0 0
        %1860 = vmatmul.mubr.bf16.gmra.mrb[0].mxu0 %v1789
        %v1861 = vpop.f32.mrb[0].mxu0
        %v1862 = vadd.f32 %v1765, %v1861
        %v1863 = vpop.f32.mrb[0].mxu0
        %v1864 = vpop.f32.mrb[0].mxu0
        %v1865 = vadd.f32 %v1765, %v1864
        %v1866 = vpop.f32.mrb[0].mxu0
        %1867 = vmatprep.mubr.bf16.mxu0 0
        %1868 = vmatmul.mubr.bf16.gmra.mrb[0].mxu0 %v1792
        %v1869 = vpop.f32.mrb[0].mxu0
        %v1870 = vadd.f32 %v1765, %v1869
        %v1871 = vpop.f32.mrb[0].mxu0
        %v1872 = vpop.f32.mrb[0].mxu0
        %v1873 = vadd.f32 %v1765, %v1872
        %v1874 = vpop.f32.mrb[0].mxu0
        %1875 = vmatprep.mubr.bf16.mxu0 0
        %1876 = vmatmul.mubr.bf16.gmra.mrb[0].mxu0 %v1795
        %v1877 = vpop.f32.mrb[0].mxu0
        %v1878 = vadd.f32 %v1765, %v1877
        %v1879 = vpop.f32.mrb[0].mxu0
        %v1880 = vpop.f32.mrb[0].mxu0
        %v1881 = vadd.f32 %v1765, %v1880
        %v1882 = vpop.f32.mrb[0].mxu0
        %1883 = vmatprep.mubr.bf16.mxu0 0
        %1884 = vmatmul.mubr.bf16.gmra.mrb[0].mxu0 %v1798
        %v1885 = vpop.f32.mrb[0].mxu0
        %v1886 = vadd.f32 %v1765, %v1885
        %v1887 = vpop.f32.mrb[0].mxu0
        %v1888 = vpop.f32.mrb[0].mxu0
        %v1889 = vadd.f32 %v1765, %v1888
        %v1890 = vpop.f32.mrb[0].mxu0
        %1891 = vmatprep.mubr.bf16.mxu0 0
        %1892 = vmatmul.mubr.bf16.gmra.mrb[0].mxu0 %v1801
        %v1893 = vpop.f32.mrb[0].mxu0
        %v1894 = vadd.f32 %v1765, %v1893
        %v1895 = vpop.f32.mrb[0].mxu0
        %v1896 = vpop.f32.mrb[0].mxu0
        %v1897 = vadd.f32 %v1765, %v1896
        %v1898 = vpop.f32.mrb[0].mxu0
        %1899 = vdwg.mxu0
        %v1900 = vpack.c.bf16 %v1841, %v1838
        %v1901 = vpack.c.bf16 %v1849, %v1846
        %v1902 = vpack.c.bf16 %v1857, %v1854
        %v1903 = vpack.c.bf16 %v1865, %v1862
        %v1904 = vpack.c.bf16 %v1873, %v1870
        %v1905 = vpack.c.bf16 %v1881, %v1878
        %v1906 = vpack.c.bf16 %v1889, %v1886
        %v1907 = vpack.c.bf16 %v1897, %v1894
        %1908 = vmatprep.subr.bf16.mxu0 0
        %1909 = vmatpush1.bf16.msra.mxu0 %v1900
        %1910 = vmatprep.subr.bf16.mxu0 0
        %1911 = vmatpush1.bf16.msra.mxu0 0
        %1912 = vmatprep.subr.bf16.mxu0 0
        %1913 = vmatpush1.bf16.msra.mxu0 0
        %1914 = vmatprep.subr.bf16.mxu0 0
        %1915 = vmatpush1.bf16.msra.mxu0 0
        %1916 = vmatprep.subr.bf16.mxu0 0
        %1917 = vmatpush1.bf16.msra.mxu0 0
        %1918 = vmatprep.subr.bf16.mxu0 0
        %1919 = vmatpush1.bf16.msra.mxu0 0
        %1920 = vmatprep.subr.bf16.mxu0 0
        %1921 = vmatpush1.bf16.msra.mxu0 0
        %1922 = vmatprep.subr.bf16.mxu0 0
        %1923 = vmatpush1.bf16.msra.mxu0 0
        %1924 = vmatprep.subr.bf16.mxu0 0
        %1925 = vmatpush1.bf16.msra.mxu0 0
        %1926 = vmatprep.subr.bf16.mxu0 0
        %1927 = vmatpush1.bf16.msra.mxu0 0
        %1928 = vmatprep.subr.bf16.mxu0 0
        %1929 = vmatpush1.bf16.msra.mxu0 0
        %1930 = vmatprep.subr.bf16.mxu0 0
        %1931 = vmatpush1.bf16.msra.mxu0 0
        %1932 = vmatprep.subr.bf16.mxu0 0
        %1933 = vmatpush1.bf16.msra.mxu0 0
        %1934 = vmatprep.subr.bf16.mxu0 0
        %1935 = vmatpush1.bf16.msra.mxu0 0
        %1936 = vmatprep.subr.bf16.mxu0 0
        %1937 = vmatpush1.bf16.msra.mxu0 0
        %1938 = vmatprep.subr.bf16.mxu0 0
        %1939 = vmatpush1.bf16.msra.mxu0 0
        %1940 = vmatprep.mubr.bf16.mxu0 0
        %1941 = vmatmul.mubr.bf16.gmra.mrb[0].mxu0 %v1148
        %v1942 = vpop.f32.mrb[0].mxu0
        %v1943 = vadd.f32 0.0, %v1942
        %v1944 = vpop.f32.mrb[0].mxu0
        %v1945 = vpop.f32.mrb[0].mxu0
        %v1946 = vadd.f32 0.0, %v1945
        %v1947 = vpop.f32.mrb[0].mxu0
        %1948 = vdwg.mxu0
        %1949 = vmatprep.subr.bf16.mxu0 0
        %1950 = vmatpush1.bf16.msra.mxu0 %v1901
        %1951 = vmatprep.subr.bf16.mxu0 0
        %1952 = vmatpush1.bf16.msra.mxu0 0
        %1953 = vmatprep.subr.bf16.mxu0 0
        %1954 = vmatpush1.bf16.msra.mxu0 0
        %1955 = vmatprep.subr.bf16.mxu0 0
        %1956 = vmatpush1.bf16.msra.mxu0 0
        %1957 = vmatprep.subr.bf16.mxu0 0
        %1958 = vmatpush1.bf16.msra.mxu0 0
        %1959 = vmatprep.subr.bf16.mxu0 0
        %1960 = vmatpush1.bf16.msra.mxu0 0
        %1961 = vmatprep.subr.bf16.mxu0 0
        %1962 = vmatpush1.bf16.msra.mxu0 0
        %1963 = vmatprep.subr.bf16.mxu0 0
        %1964 = vmatpush1.bf16.msra.mxu0 0
        %1965 = vmatprep.subr.bf16.mxu0 0
        %1966 = vmatpush1.bf16.msra.mxu0 0
        %1967 = vmatprep.subr.bf16.mxu0 0
        %1968 = vmatpush1.bf16.msra.mxu0 0
        %1969 = vmatprep.subr.bf16.mxu0 0
        %1970 = vmatpush1.bf16.msra.mxu0 0
        %1971 = vmatprep.subr.bf16.mxu0 0
        %1972 = vmatpush1.bf16.msra.mxu0 0
        %1973 = vmatprep.subr.bf16.mxu0 0
        %1974 = vmatpush1.bf16.msra.mxu0 0
        %1975 = vmatprep.subr.bf16.mxu0 0
        %1976 = vmatpush1.bf16.msra.mxu0 0
        %1977 = vmatprep.subr.bf16.mxu0 0
        %1978 = vmatpush1.bf16.msra.mxu0 0
        %1979 = vmatprep.subr.bf16.mxu0 0
        %1980 = vmatpush1.bf16.msra.mxu0 0
        %1981 = vmatprep.mubr.bf16.mxu0 0
        %1982 = vmatmul.mubr.bf16.gmra.mrb[0].mxu0 %v1151
        %v1983 = vpop.f32.mrb[0].mxu0
        %v1984 = vadd.f32 0.0, %v1983
        %v1985 = vpop.f32.mrb[0].mxu0
        %v1986 = vpop.f32.mrb[0].mxu0
        %v1987 = vadd.f32 0.0, %v1986
        %v1988 = vpop.f32.mrb[0].mxu0
        %1989 = vdwg.mxu0
        %1990 = vmatprep.subr.bf16.mxu0 0
        %1991 = vmatpush1.bf16.msra.mxu0 %v1902
        %1992 = vmatprep.subr.bf16.mxu0 0
        %1993 = vmatpush1.bf16.msra.mxu0 0
        %1994 = vmatprep.subr.bf16.mxu0 0
        %1995 = vmatpush1.bf16.msra.mxu0 0
        %1996 = vmatprep.subr.bf16.mxu0 0
        %1997 = vmatpush1.bf16.msra.mxu0 0
        %1998 = vmatprep.subr.bf16.mxu0 0
        %1999 = vmatpush1.bf16.msra.mxu0 0
        %2000 = vmatprep.subr.bf16.mxu0 0
        %2001 = vmatpush1.bf16.msra.mxu0 0
        %2002 = vmatprep.subr.bf16.mxu0 0
        %2003 = vmatpush1.bf16.msra.mxu0 0
        %2004 = vmatprep.subr.bf16.mxu0 0
        %2005 = vmatpush1.bf16.msra.mxu0 0
        %2006 = vmatprep.subr.bf16.mxu0 0
        %2007 = vmatpush1.bf16.msra.mxu0 0
        %2008 = vmatprep.subr.bf16.mxu0 0
        %2009 = vmatpush1.bf16.msra.mxu0 0
        %2010 = vmatprep.subr.bf16.mxu0 0
        %2011 = vmatpush1.bf16.msra.mxu0 0
        %2012 = vmatprep.subr.bf16.mxu0 0
        %2013 = vmatpush1.bf16.msra.mxu0 0
        %2014 = vmatprep.subr.bf16.mxu0 0
        %2015 = vmatpush1.bf16.msra.mxu0 0
        %2016 = vmatprep.subr.bf16.mxu0 0
        %2017 = vmatpush1.bf16.msra.mxu0 0
        %2018 = vmatprep.subr.bf16.mxu0 0
        %2019 = vmatpush1.bf16.msra.mxu0 0
        %2020 = vmatprep.subr.bf16.mxu0 0
        %2021 = vmatpush1.bf16.msra.mxu0 0
        %2022 = vmatprep.mubr.bf16.mxu0 0
        %2023 = vmatmul.mubr.bf16.gmra.mrb[0].mxu0 %v1154
        %v2024 = vpop.f32.mrb[0].mxu0
        %v2025 = vadd.f32 0.0, %v2024
        %v2026 = vpop.f32.mrb[0].mxu0
        %v2027 = vpop.f32.mrb[0].mxu0
        %v2028 = vadd.f32 0.0, %v2027
        %v2029 = vpop.f32.mrb[0].mxu0
        %2030 = vdwg.mxu0
        %2031 = vmatprep.subr.bf16.mxu0 0
        %2032 = vmatpush1.bf16.msra.mxu0 %v1903
        %2033 = vmatprep.subr.bf16.mxu0 0
        %2034 = vmatpush1.bf16.msra.mxu0 0
        %2035 = vmatprep.subr.bf16.mxu0 0
        %2036 = vmatpush1.bf16.msra.mxu0 0
        %2037 = vmatprep.subr.bf16.mxu0 0
        %2038 = vmatpush1.bf16.msra.mxu0 0
        %2039 = vmatprep.subr.bf16.mxu0 0
        %2040 = vmatpush1.bf16.msra.mxu0 0
        %2041 = vmatprep.subr.bf16.mxu0 0
        %2042 = vmatpush1.bf16.msra.mxu0 0
        %2043 = vmatprep.subr.bf16.mxu0 0
        %2044 = vmatpush1.bf16.msra.mxu0 0
        %2045 = vmatprep.subr.bf16.mxu0 0
        %2046 = vmatpush1.bf16.msra.mxu0 0
        %2047 = vmatprep.subr.bf16.mxu0 0
        %2048 = vmatpush1.bf16.msra.mxu0 0
        %2049 = vmatprep.subr.bf16.mxu0 0
        %2050 = vmatpush1.bf16.msra.mxu0 0
        %2051 = vmatprep.subr.bf16.mxu0 0
        %2052 = vmatpush1.bf16.msra.mxu0 0
        %2053 = vmatprep.subr.bf16.mxu0 0
        %2054 = vmatpush1.bf16.msra.mxu0 0
        %2055 = vmatprep.subr.bf16.mxu0 0
        %2056 = vmatpush1.bf16.msra.mxu0 0
        %2057 = vmatprep.subr.bf16.mxu0 0
        %2058 = vmatpush1.bf16.msra.mxu0 0
        %2059 = vmatprep.subr.bf16.mxu0 0
        %2060 = vmatpush1.bf16.msra.mxu0 0
        %2061 = vmatprep.subr.bf16.mxu0 0
        %2062 = vmatpush1.bf16.msra.mxu0 0
        %2063 = vmatprep.mubr.bf16.mxu0 0
        %2064 = vmatmul.mubr.bf16.gmra.mrb[0].mxu0 %v1157
        %v2065 = vpop.f32.mrb[0].mxu0
        %v2066 = vadd.f32 0.0, %v2065
        %v2067 = vpop.f32.mrb[0].mxu0
        %v2068 = vpop.f32.mrb[0].mxu0
        %v2069 = vadd.f32 0.0, %v2068
        %v2070 = vpop.f32.mrb[0].mxu0
        %2071 = vdwg.mxu0
        %2072 = vmatprep.subr.bf16.mxu0 0
        %2073 = vmatpush1.bf16.msra.mxu0 %v1904
        %2074 = vmatprep.subr.bf16.mxu0 0
        %2075 = vmatpush1.bf16.msra.mxu0 0
        %2076 = vmatprep.subr.bf16.mxu0 0
        %2077 = vmatpush1.bf16.msra.mxu0 0
        %2078 = vmatprep.subr.bf16.mxu0 0
        %2079 = vmatpush1.bf16.msra.mxu0 0
        %2080 = vmatprep.subr.bf16.mxu0 0
        %2081 = vmatpush1.bf16.msra.mxu0 0
        %2082 = vmatprep.subr.bf16.mxu0 0
        %2083 = vmatpush1.bf16.msra.mxu0 0
        %2084 = vmatprep.subr.bf16.mxu0 0
        %2085 = vmatpush1.bf16.msra.mxu0 0
        %2086 = vmatprep.subr.bf16.mxu0 0
        %2087 = vmatpush1.bf16.msra.mxu0 0
        %2088 = vmatprep.subr.bf16.mxu0 0
        %2089 = vmatpush1.bf16.msra.mxu0 0
        %2090 = vmatprep.subr.bf16.mxu0 0
        %2091 = vmatpush1.bf16.msra.mxu0 0
        %2092 = vmatprep.subr.bf16.mxu0 0
        %2093 = vmatpush1.bf16.msra.mxu0 0
        %2094 = vmatprep.subr.bf16.mxu0 0
        %2095 = vmatpush1.bf16.msra.mxu0 0
        %2096 = vmatprep.subr.bf16.mxu0 0
        %2097 = vmatpush1.bf16.msra.mxu0 0
        %2098 = vmatprep.subr.bf16.mxu0 0
        %2099 = vmatpush1.bf16.msra.mxu0 0
        %2100 = vmatprep.subr.bf16.mxu0 0
        %2101 = vmatpush1.bf16.msra.mxu0 0
        %2102 = vmatprep.subr.bf16.mxu0 0
        %2103 = vmatpush1.bf16.msra.mxu0 0
        %2104 = vmatprep.mubr.bf16.mxu0 0
        %2105 = vmatmul.mubr.bf16.gmra.mrb[0].mxu0 %v1160
        %v2106 = vpop.f32.mrb[0].mxu0
        %v2107 = vadd.f32 0.0, %v2106
        %v2108 = vpop.f32.mrb[0].mxu0
        %v2109 = vpop.f32.mrb[0].mxu0
        %v2110 = vadd.f32 0.0, %v2109
        %v2111 = vpop.f32.mrb[0].mxu0
        %2112 = vdwg.mxu0
        %2113 = vmatprep.subr.bf16.mxu0 0
        %2114 = vmatpush1.bf16.msra.mxu0 %v1905
        %2115 = vmatprep.subr.bf16.mxu0 0
        %2116 = vmatpush1.bf16.msra.mxu0 0
        %2117 = vmatprep.subr.bf16.mxu0 0
        %2118 = vmatpush1.bf16.msra.mxu0 0
        %2119 = vmatprep.subr.bf16.mxu0 0
        %2120 = vmatpush1.bf16.msra.mxu0 0
        %2121 = vmatprep.subr.bf16.mxu0 0
        %2122 = vmatpush1.bf16.msra.mxu0 0
        %2123 = vmatprep.subr.bf16.mxu0 0
        %2124 = vmatpush1.bf16.msra.mxu0 0
        %2125 = vmatprep.subr.bf16.mxu0 0
        %2126 = vmatpush1.bf16.msra.mxu0 0
        %2127 = vmatprep.subr.bf16.mxu0 0
        %2128 = vmatpush1.bf16.msra.mxu0 0
        %2129 = vmatprep.subr.bf16.mxu0 0
        %2130 = vmatpush1.bf16.msra.mxu0 0
        %2131 = vmatprep.subr.bf16.mxu0 0
        %2132 = vmatpush1.bf16.msra.mxu0 0
        %2133 = vmatprep.subr.bf16.mxu0 0
        %2134 = vmatpush1.bf16.msra.mxu0 0
        %2135 = vmatprep.subr.bf16.mxu0 0
        %2136 = vmatpush1.bf16.msra.mxu0 0
        %2137 = vmatprep.subr.bf16.mxu0 0
        %2138 = vmatpush1.bf16.msra.mxu0 0
        %2139 = vmatprep.subr.bf16.mxu0 0
        %2140 = vmatpush1.bf16.msra.mxu0 0
        %2141 = vmatprep.subr.bf16.mxu0 0
        %2142 = vmatpush1.bf16.msra.mxu0 0
        %2143 = vmatprep.subr.bf16.mxu0 0
        %2144 = vmatpush1.bf16.msra.mxu0 0
        %2145 = vmatprep.mubr.bf16.mxu0 0
        %2146 = vmatmul.mubr.bf16.gmra.mrb[0].mxu0 %v1163
        %v2147 = vpop.f32.mrb[0].mxu0
        %v2148 = vadd.f32 0.0, %v2147
        %v2149 = vpop.f32.mrb[0].mxu0
        %v2150 = vpop.f32.mrb[0].mxu0
        %v2151 = vadd.f32 0.0, %v2150
        %v2152 = vpop.f32.mrb[0].mxu0
        %2153 = vdwg.mxu0
        %2154 = vmatprep.subr.bf16.mxu0 0
        %2155 = vmatpush1.bf16.msra.mxu0 %v1906
        %2156 = vmatprep.subr.bf16.mxu0 0
        %2157 = vmatpush1.bf16.msra.mxu0 0
        %2158 = vmatprep.subr.bf16.mxu0 0
        %2159 = vmatpush1.bf16.msra.mxu0 0
        %2160 = vmatprep.subr.bf16.mxu0 0
        %2161 = vmatpush1.bf16.msra.mxu0 0
        %2162 = vmatprep.subr.bf16.mxu0 0
        %2163 = vmatpush1.bf16.msra.mxu0 0
        %2164 = vmatprep.subr.bf16.mxu0 0
        %2165 = vmatpush1.bf16.msra.mxu0 0
        %2166 = vmatprep.subr.bf16.mxu0 0
        %2167 = vmatpush1.bf16.msra.mxu0 0
        %2168 = vmatprep.subr.bf16.mxu0 0
        %2169 = vmatpush1.bf16.msra.mxu0 0
        %2170 = vmatprep.subr.bf16.mxu0 0
        %2171 = vmatpush1.bf16.msra.mxu0 0
        %2172 = vmatprep.subr.bf16.mxu0 0
        %2173 = vmatpush1.bf16.msra.mxu0 0
        %2174 = vmatprep.subr.bf16.mxu0 0
        %2175 = vmatpush1.bf16.msra.mxu0 0
        %2176 = vmatprep.subr.bf16.mxu0 0
        %2177 = vmatpush1.bf16.msra.mxu0 0
        %2178 = vmatprep.subr.bf16.mxu0 0
        %2179 = vmatpush1.bf16.msra.mxu0 0
        %2180 = vmatprep.subr.bf16.mxu0 0
        %2181 = vmatpush1.bf16.msra.mxu0 0
        %2182 = vmatprep.subr.bf16.mxu0 0
        %2183 = vmatpush1.bf16.msra.mxu0 0
        %2184 = vmatprep.subr.bf16.mxu0 0
        %2185 = vmatpush1.bf16.msra.mxu0 0
        %2186 = vmatprep.mubr.bf16.mxu0 0
        %2187 = vmatmul.mubr.bf16.gmra.mrb[0].mxu0 %v1166
        %v2188 = vpop.f32.mrb[0].mxu0
        %v2189 = vadd.f32 0.0, %v2188
        %v2190 = vpop.f32.mrb[0].mxu0
        %v2191 = vpop.f32.mrb[0].mxu0
        %v2192 = vadd.f32 0.0, %v2191
        %v2193 = vpop.f32.mrb[0].mxu0
        %2194 = vdwg.mxu0
        %2195 = vmatprep.subr.bf16.mxu0 0
        %2196 = vmatpush1.bf16.msra.mxu0 %v1907
        %2197 = vmatprep.subr.bf16.mxu0 0
        %2198 = vmatpush1.bf16.msra.mxu0 0
        %2199 = vmatprep.subr.bf16.mxu0 0
        %2200 = vmatpush1.bf16.msra.mxu0 0
        %2201 = vmatprep.subr.bf16.mxu0 0
        %2202 = vmatpush1.bf16.msra.mxu0 0
        %2203 = vmatprep.subr.bf16.mxu0 0
        %2204 = vmatpush1.bf16.msra.mxu0 0
        %2205 = vmatprep.subr.bf16.mxu0 0
        %2206 = vmatpush1.bf16.msra.mxu0 0
        %2207 = vmatprep.subr.bf16.mxu0 0
        %2208 = vmatpush1.bf16.msra.mxu0 0
        %2209 = vmatprep.subr.bf16.mxu0 0
        %2210 = vmatpush1.bf16.msra.mxu0 0
        %2211 = vmatprep.subr.bf16.mxu0 0
        %2212 = vmatpush1.bf16.msra.mxu0 0
        %2213 = vmatprep.subr.bf16.mxu0 0
        %2214 = vmatpush1.bf16.msra.mxu0 0
        %2215 = vmatprep.subr.bf16.mxu0 0
        %2216 = vmatpush1.bf16.msra.mxu0 0
        %2217 = vmatprep.subr.bf16.mxu0 0
        %2218 = vmatpush1.bf16.msra.mxu0 0
        %2219 = vmatprep.subr.bf16.mxu0 0
        %2220 = vmatpush1.bf16.msra.mxu0 0
        %2221 = vmatprep.subr.bf16.mxu0 0
        %2222 = vmatpush1.bf16.msra.mxu0 0
        %2223 = vmatprep.subr.bf16.mxu0 0
        %2224 = vmatpush1.bf16.msra.mxu0 0
        %2225 = vmatprep.subr.bf16.mxu0 0
        %2226 = vmatpush1.bf16.msra.mxu0 0
        %2227 = vmatprep.mubr.bf16.mxu0 0
        %2228 = vmatmul.mubr.bf16.gmra.mrb[0].mxu0 %v1169
        %v2229 = vpop.f32.mrb[0].mxu0
        %v2230 = vadd.f32 0.0, %v2229
        %v2231 = vpop.f32.mrb[0].mxu0
        %v2232 = vpop.f32.mrb[0].mxu0
        %v2233 = vadd.f32 0.0, %v2232
        %v2234 = vpop.f32.mrb[0].mxu0
        %2235 = vdwg.mxu0
        %v2236 = vxor.u32 %v1943, 2147483648
        %v2237 = vxor.u32 %v1946, 2147483648
        %v2238 = vxor.u32 %v1984, 2147483648
        %v2239 = vxor.u32 %v1987, 2147483648
        %v2240 = vxor.u32 %v2025, 2147483648
        %v2241 = vxor.u32 %v2028, 2147483648
        %v2242 = vxor.u32 %v2066, 2147483648
        %v2243 = vxor.u32 %v2069, 2147483648
        %v2244 = vxor.u32 %v2107, 2147483648
        %v2245 = vxor.u32 %v2110, 2147483648
        %v2246 = vxor.u32 %v2148, 2147483648
        %v2247 = vxor.u32 %v2151, 2147483648
        %v2248 = vxor.u32 %v2189, 2147483648
        %v2249 = vxor.u32 %v2192, 2147483648
        %v2250 = vxor.u32 %v2230, 2147483648
        %v2251 = vxor.u32 %v2233, 2147483648
        %v2252 = vmul.f32 %v2236, 1.442695
        %v2253 = vpow.pop %v2252
        %v2254 = vmul.f32 %v2237, 1.442695
        %v2255 = vpow.pop %v2254
        %v2256 = vmul.f32 %v2238, 1.442695
        %v2257 = vpow.pop %v2256
        %v2258 = vmul.f32 %v2239, 1.442695
        %v2259 = vpow.pop %v2258
        %v2260 = vmul.f32 %v2240, 1.442695
        %v2261 = vpow.pop %v2260
        %v2262 = vmul.f32 %v2241, 1.442695
        %v2263 = vpow.pop %v2262
        %v2264 = vmul.f32 %v2242, 1.442695
        %v2265 = vpow.pop %v2264
        %v2266 = vmul.f32 %v2243, 1.442695
        %v2267 = vpow.pop %v2266
        %v2268 = vmul.f32 %v2244, 1.442695
        %v2269 = vpow.pop %v2268
        %v2270 = vmul.f32 %v2245, 1.442695
        %v2271 = vpow.pop %v2270
        %v2272 = vmul.f32 %v2246, 1.442695
        %v2273 = vpow.pop %v2272
        %v2274 = vmul.f32 %v2247, 1.442695
        %v2275 = vpow.pop %v2274
        %v2276 = vmul.f32 %v2248, 1.442695
        %v2277 = vpow.pop %v2276
        %v2278 = vmul.f32 %v2249, 1.442695
        %v2279 = vpow.pop %v2278
        %v2280 = vmul.f32 %v2250, 1.442695
        %v2281 = vpow.pop %v2280
        %v2282 = vmul.f32 %v2251, 1.442695
        %v2283 = vpow.pop %v2282
        %v2284 = vadd.f32 %v2253, 1.0
        %v2285 = vadd.f32 %v2255, 1.0
        %v2286 = vadd.f32 %v2257, 1.0
        %v2287 = vadd.f32 %v2259, 1.0
        %v2288 = vadd.f32 %v2261, 1.0
        %v2289 = vadd.f32 %v2263, 1.0
        %v2290 = vadd.f32 %v2265, 1.0
        %v2291 = vadd.f32 %v2267, 1.0
        %v2292 = vadd.f32 %v2269, 1.0
        %v2293 = vadd.f32 %v2271, 1.0
        %v2294 = vadd.f32 %v2273, 1.0
        %v2295 = vadd.f32 %v2275, 1.0
        %v2296 = vadd.f32 %v2277, 1.0
        %v2297 = vadd.f32 %v2279, 1.0
        %v2298 = vadd.f32 %v2281, 1.0
        %v2299 = vadd.f32 %v2283, 1.0
        %v2300 = vrcp.pop %v2284
        %v2301 = vmul.f32 1.0, %v2300
        %v2302 = vrcp.pop %v2285
        %v2303 = vmul.f32 1.0, %v2302
        %v2304 = vrcp.pop %v2286
        %v2305 = vmul.f32 1.0, %v2304
        %v2306 = vrcp.pop %v2287
        %v2307 = vmul.f32 1.0, %v2306
        %v2308 = vrcp.pop %v2288
        %v2309 = vmul.f32 1.0, %v2308
        %v2310 = vrcp.pop %v2289
        %v2311 = vmul.f32 1.0, %v2310
        %v2312 = vrcp.pop %v2290
        %v2313 = vmul.f32 1.0, %v2312
        %v2314 = vrcp.pop %v2291
        %v2315 = vmul.f32 1.0, %v2314
        %v2316 = vrcp.pop %v2292
        %v2317 = vmul.f32 1.0, %v2316
        %v2318 = vrcp.pop %v2293
        %v2319 = vmul.f32 1.0, %v2318
        %v2320 = vrcp.pop %v2294
        %v2321 = vmul.f32 1.0, %v2320
        %v2322 = vrcp.pop %v2295
        %v2323 = vmul.f32 1.0, %v2322
        %v2324 = vrcp.pop %v2296
        %v2325 = vmul.f32 1.0, %v2324
        %v2326 = vrcp.pop %v2297
        %v2327 = vmul.f32 1.0, %v2326
        %v2328 = vrcp.pop %v2298
        %v2329 = vmul.f32 1.0, %v2328
        %v2330 = vrcp.pop %v2299
        %v2331 = vmul.f32 1.0, %v2330
        %v2332 = vpack.c.bf16 %v1335, %v1333
        %v2333 = vpack.c.bf16 %v1339, %v1337
        %v2334 = vpack.c.bf16 %v1343, %v1341
        %v2335 = vpack.c.bf16 %v1347, %v1345
        %v2336 = vpack.c.bf16 %v1351, %v1349
        %v2337 = vpack.c.bf16 %v1355, %v1353
        %v2338 = vpack.c.bf16 %v1359, %v1357
        %v2339 = vpack.c.bf16 %v1363, %v1361
        %v2340 = vld [vmem:[#allocation14] sm:$0xf]
        %v2341 = vld [vmem:[#allocation14 + $0x4] sm:$0xf]
        %v2342 = vpack.c.bf16 %v1062, %v1060
        %v2343 = vpack.c.bf16 %v1066, %v1064
        %v2344 = vpack.c.bf16 %v1070, %v1068
        %v2345 = vpack.c.bf16 %v1074, %v1072
        %v2346 = vpack.c.bf16 %v1078, %v1076
        %v2347 = vpack.c.bf16 %v1082, %v1080
        %v2348 = vpack.c.bf16 %v1086, %v1084
        %v2349 = vpack.c.bf16 %v1090, %v1088
        %v2350 = vld [vmem:[%s10] sm:$0xf]
        %v2351 = vld [vmem:[%s10 + $0x4] sm:$0xf]
        %v2352 = vld [vmem:[%s10 + $0x8] sm:$0xf]
        %v2353 = vld [vmem:[%s10 + $0xc] sm:$0xf]
        %v2358 = vunpack.c.l.b16 %v2350
        %v2359 = vunpack.c.l.b16 %v2351
        %v2360 = vunpack.c.l.b16 %v2352
        %v2361 = vunpack.c.l.b16 %v2353
        %v2362 = vpack.c.b16 %v2359, %v2358
        %v2363 = vpack.c.b16 %v2361, %v2360
        %v2367 = vsel %vm873, %v2342, 0
        %v2370 = vsel %vm873, %v2343, 0
        %v2373 = vsel %vm873, %v2344, 0
        %v2376 = vsel %vm873, %v2345, 0
        %v2379 = vsel %vm873, %v2346, 0
        %v2382 = vsel %vm873, %v2347, 0
        %v2385 = vsel %vm873, %v2348, 0
        %v2388 = vsel %vm873, %v2349, 0
        %2390 = vmatprep.subr.bf16.mxu0 0
        %2391 = vmatpush1.bf16.msra.mxu0 %v2362
        %2392 = vmatprep.subr.bf16.mxu0 0
        %2393 = vmatpush1.bf16.msra.mxu0 %v2363
        %2394 = vmatprep.subr.bf16.mxu0 0
        %2395 = vmatpush1.bf16.msra.mxu0 0
        %2396 = vmatprep.subr.bf16.mxu0 0
        %2397 = vmatpush1.bf16.msra.mxu0 0
        %2398 = vmatprep.subr.bf16.mxu0 0
        %2399 = vmatpush1.bf16.msra.mxu0 0
        %2400 = vmatprep.subr.bf16.mxu0 0
        %2401 = vmatpush1.bf16.msra.mxu0 0
        %2402 = vmatprep.subr.bf16.mxu0 0
        %2403 = vmatpush1.bf16.msra.mxu0 0
        %2404 = vmatprep.subr.bf16.mxu0 0
        %2405 = vmatpush1.bf16.msra.mxu0 0
        %2406 = vmatprep.subr.bf16.mxu0 0
        %2407 = vmatpush1.bf16.msra.mxu0 0
        %2408 = vmatprep.subr.bf16.mxu0 0
        %2409 = vmatpush1.bf16.msra.mxu0 0
        %2410 = vmatprep.subr.bf16.mxu0 0
        %2411 = vmatpush1.bf16.msra.mxu0 0
        %2412 = vmatprep.subr.bf16.mxu0 0
        %2413 = vmatpush1.bf16.msra.mxu0 0
        %2414 = vmatprep.subr.bf16.mxu0 0
        %2415 = vmatpush1.bf16.msra.mxu0 0
        %2416 = vmatprep.subr.bf16.mxu0 0
        %2417 = vmatpush1.bf16.msra.mxu0 0
        %2418 = vmatprep.subr.bf16.mxu0 0
        %2419 = vmatpush1.bf16.msra.mxu0 0
        %2420 = vmatprep.subr.bf16.mxu0 0
        %2421 = vmatpush1.bf16.msra.mxu0 0
        %2422 = vmatprep.mubr.bf16.mxu0 0
        %2423 = vmatmul.mubr.bf16.gmra.mrb[0].mxu0 %v2367
        %v2424 = vpop.f32.mrb[0].mxu0
        %v2425 = vadd.f32 0.0, %v2424
        %v2426 = vpop.f32.mrb[0].mxu0
        %v2427 = vpop.f32.mrb[0].mxu0
        %v2428 = vadd.f32 0.0, %v2427
        %v2429 = vpop.f32.mrb[0].mxu0
        %2430 = vmatprep.mubr.bf16.mxu0 0
        %2431 = vmatmul.mubr.bf16.gmra.mrb[0].mxu0 %v2370
        %v2432 = vpop.f32.mrb[0].mxu0
        %v2433 = vadd.f32 0.0, %v2432
        %v2434 = vpop.f32.mrb[0].mxu0
        %v2435 = vpop.f32.mrb[0].mxu0
        %v2436 = vadd.f32 0.0, %v2435
        %v2437 = vpop.f32.mrb[0].mxu0
        %2438 = vmatprep.mubr.bf16.mxu0 0
        %2439 = vmatmul.mubr.bf16.gmra.mrb[0].mxu0 %v2373
        %v2440 = vpop.f32.mrb[0].mxu0
        %v2441 = vadd.f32 0.0, %v2440
        %v2442 = vpop.f32.mrb[0].mxu0
        %v2443 = vpop.f32.mrb[0].mxu0
        %v2444 = vadd.f32 0.0, %v2443
        %v2445 = vpop.f32.mrb[0].mxu0
        %2446 = vmatprep.mubr.bf16.mxu0 0
        %2447 = vmatmul.mubr.bf16.gmra.mrb[0].mxu0 %v2376
        %v2448 = vpop.f32.mrb[0].mxu0
        %v2449 = vadd.f32 0.0, %v2448
        %v2450 = vpop.f32.mrb[0].mxu0
        %v2451 = vpop.f32.mrb[0].mxu0
        %v2452 = vadd.f32 0.0, %v2451
        %v2453 = vpop.f32.mrb[0].mxu0
        %2454 = vmatprep.mubr.bf16.mxu0 0
        %2455 = vmatmul.mubr.bf16.gmra.mrb[0].mxu0 %v2379
        %v2456 = vpop.f32.mrb[0].mxu0
        %v2457 = vadd.f32 0.0, %v2456
        %v2458 = vpop.f32.mrb[0].mxu0
        %v2459 = vpop.f32.mrb[0].mxu0
        %v2460 = vadd.f32 0.0, %v2459
        %v2461 = vpop.f32.mrb[0].mxu0
        %2462 = vmatprep.mubr.bf16.mxu0 0
        %2463 = vmatmul.mubr.bf16.gmra.mrb[0].mxu0 %v2382
        %v2464 = vpop.f32.mrb[0].mxu0
        %v2465 = vadd.f32 0.0, %v2464
        %v2466 = vpop.f32.mrb[0].mxu0
        %v2467 = vpop.f32.mrb[0].mxu0
        %v2468 = vadd.f32 0.0, %v2467
        %v2469 = vpop.f32.mrb[0].mxu0
        %2470 = vmatprep.mubr.bf16.mxu0 0
        %2471 = vmatmul.mubr.bf16.gmra.mrb[0].mxu0 %v2385
        %v2472 = vpop.f32.mrb[0].mxu0
        %v2473 = vadd.f32 0.0, %v2472
        %v2474 = vpop.f32.mrb[0].mxu0
        %v2475 = vpop.f32.mrb[0].mxu0
        %v2476 = vadd.f32 0.0, %v2475
        %v2477 = vpop.f32.mrb[0].mxu0
        %2478 = vmatprep.mubr.bf16.mxu0 0
        %2479 = vmatmul.mubr.bf16.gmra.mrb[0].mxu0 %v2388
        %v2480 = vpop.f32.mrb[0].mxu0
        %v2481 = vadd.f32 0.0, %v2480
        %v2482 = vpop.f32.mrb[0].mxu0
        %v2483 = vpop.f32.mrb[0].mxu0
        %v2484 = vadd.f32 0.0, %v2483
        %v2485 = vpop.f32.mrb[0].mxu0
        %2486 = vdwg.mxu0
        %v2489 = vunpack.c.l.b16 %v2340
        %v2490 = vunpack.c.l.b16 %v2341
        %v2491 = vpack.c.b16 %v2490, %v2489
        %v2494 = vsel %vm1146, %v2332, 0
        %v2497 = vsel %vm1146, %v2333, 0
        %v2500 = vsel %vm1146, %v2334, 0
        %v2503 = vsel %vm1146, %v2335, 0
        %v2506 = vsel %vm1146, %v2336, 0
        %v2509 = vsel %vm1146, %v2337, 0
        %v2512 = vsel %vm1146, %v2338, 0
        %v2515 = vsel %vm1146, %v2339, 0
        %2517 = vmatprep.subr.bf16.mxu0 0
        %2518 = vmatpush1.bf16.msra.mxu0 %v2491
        %2519 = vmatprep.subr.bf16.mxu0 0
        %2520 = vmatpush1.bf16.msra.mxu0 0
        %2521 = vmatprep.subr.bf16.mxu0 0
        %2522 = vmatpush1.bf16.msra.mxu0 0
        %2523 = vmatprep.subr.bf16.mxu0 0
        %2524 = vmatpush1.bf16.msra.mxu0 0
        %2525 = vmatprep.subr.bf16.mxu0 0
        %2526 = vmatpush1.bf16.msra.mxu0 0
        %2527 = vmatprep.subr.bf16.mxu0 0
        %2528 = vmatpush1.bf16.msra.mxu0 0
        %2529 = vmatprep.subr.bf16.mxu0 0
        %2530 = vmatpush1.bf16.msra.mxu0 0
        %2531 = vmatprep.subr.bf16.mxu0 0
        %2532 = vmatpush1.bf16.msra.mxu0 0
        %2533 = vmatprep.subr.bf16.mxu0 0
        %2534 = vmatpush1.bf16.msra.mxu0 0
        %2535 = vmatprep.subr.bf16.mxu0 0
        %2536 = vmatpush1.bf16.msra.mxu0 0
        %2537 = vmatprep.subr.bf16.mxu0 0
        %2538 = vmatpush1.bf16.msra.mxu0 0
        %2539 = vmatprep.subr.bf16.mxu0 0
        %2540 = vmatpush1.bf16.msra.mxu0 0
        %2541 = vmatprep.subr.bf16.mxu0 0
        %2542 = vmatpush1.bf16.msra.mxu0 0
        %2543 = vmatprep.subr.bf16.mxu0 0
        %2544 = vmatpush1.bf16.msra.mxu0 0
        %2545 = vmatprep.subr.bf16.mxu0 0
        %2546 = vmatpush1.bf16.msra.mxu0 0
        %2547 = vmatprep.subr.bf16.mxu0 0
        %2548 = vmatpush1.bf16.msra.mxu0 0
        %2549 = vmatprep.mubr.bf16.mxu0 0
        %2550 = vmatmul.mubr.bf16.gmra.mrb[0].mxu0 %v2494
        %v2551 = vpop.f32.mrb[0].mxu0
        %v2552 = vadd.f32 %v2425, %v2551
        %v2553 = vpop.f32.mrb[0].mxu0
        %v2554 = vpop.f32.mrb[0].mxu0
        %v2555 = vadd.f32 %v2428, %v2554
        %v2556 = vpop.f32.mrb[0].mxu0
        %2557 = vmatprep.mubr.bf16.mxu0 0
        %2558 = vmatmul.mubr.bf16.gmra.mrb[0].mxu0 %v2497
        %v2559 = vpop.f32.mrb[0].mxu0
        %v2560 = vadd.f32 %v2433, %v2559
        %v2561 = vpop.f32.mrb[0].mxu0
        %v2562 = vpop.f32.mrb[0].mxu0
        %v2563 = vadd.f32 %v2436, %v2562
        %v2564 = vpop.f32.mrb[0].mxu0
        %2565 = vmatprep.mubr.bf16.mxu0 0
        %2566 = vmatmul.mubr.bf16.gmra.mrb[0].mxu0 %v2500
        %v2567 = vpop.f32.mrb[0].mxu0
        %v2568 = vadd.f32 %v2441, %v2567
        %v2569 = vpop.f32.mrb[0].mxu0
        %v2570 = vpop.f32.mrb[0].mxu0
        %v2571 = vadd.f32 %v2444, %v2570
        %v2572 = vpop.f32.mrb[0].mxu0
        %2573 = vmatprep.mubr.bf16.mxu0 0
        %2574 = vmatmul.mubr.bf16.gmra.mrb[0].mxu0 %v2503
        %v2575 = vpop.f32.mrb[0].mxu0
        %v2576 = vadd.f32 %v2449, %v2575
        %v2577 = vpop.f32.mrb[0].mxu0
        %v2578 = vpop.f32.mrb[0].mxu0
        %v2579 = vadd.f32 %v2452, %v2578
        %v2580 = vpop.f32.mrb[0].mxu0
        %2581 = vmatprep.mubr.bf16.mxu0 0
        %2582 = vmatmul.mubr.bf16.gmra.mrb[0].mxu0 %v2506
        %v2583 = vpop.f32.mrb[0].mxu0
        %v2584 = vadd.f32 %v2457, %v2583
        %v2585 = vpop.f32.mrb[0].mxu0
        %v2586 = vpop.f32.mrb[0].mxu0
        %v2587 = vadd.f32 %v2460, %v2586
        %v2588 = vpop.f32.mrb[0].mxu0
        %2589 = vmatprep.mubr.bf16.mxu0 0
        %2590 = vmatmul.mubr.bf16.gmra.mrb[0].mxu0 %v2509
        %v2591 = vpop.f32.mrb[0].mxu0
        %v2592 = vadd.f32 %v2465, %v2591
        %v2593 = vpop.f32.mrb[0].mxu0
        %v2594 = vpop.f32.mrb[0].mxu0
        %v2595 = vadd.f32 %v2468, %v2594
        %v2596 = vpop.f32.mrb[0].mxu0
        %2597 = vmatprep.mubr.bf16.mxu0 0
        %2598 = vmatmul.mubr.bf16.gmra.mrb[0].mxu0 %v2512
        %v2599 = vpop.f32.mrb[0].mxu0
        %v2600 = vadd.f32 %v2473, %v2599
        %v2601 = vpop.f32.mrb[0].mxu0
        %v2602 = vpop.f32.mrb[0].mxu0
        %v2603 = vadd.f32 %v2476, %v2602
        %v2604 = vpop.f32.mrb[0].mxu0
        %2605 = vmatprep.mubr.bf16.mxu0 0
        %2606 = vmatmul.mubr.bf16.gmra.mrb[0].mxu0 %v2515
        %v2607 = vpop.f32.mrb[0].mxu0
        %v2608 = vadd.f32 %v2481, %v2607
        %v2609 = vpop.f32.mrb[0].mxu0
        %v2610 = vpop.f32.mrb[0].mxu0
        %v2611 = vadd.f32 %v2484, %v2610
        %v2612 = vpop.f32.mrb[0].mxu0
        %2613 = vdwg.mxu0
        %v2614 = vpack.c.bf16 %v2303, %v2301
        %v2615 = vpack.c.bf16 %v2307, %v2305
        %v2616 = vpack.c.bf16 %v2311, %v2309
        %v2617 = vpack.c.bf16 %v2315, %v2313
        %v2618 = vpack.c.bf16 %v2319, %v2317
        %v2619 = vpack.c.bf16 %v2323, %v2321
        %v2620 = vpack.c.bf16 %v2327, %v2325
        %v2621 = vpack.c.bf16 %v2331, %v2329
        %v2622 = vld [vmem:[#allocation16] sm:$0xf]
        %v2623 = vld [vmem:[#allocation16 + $0x4] sm:$0xf]
        %v2624 = vld [vmem:[#allocation16 + $0x8] sm:$0xf]
        %v2625 = vld [vmem:[#allocation16 + $0xc] sm:$0xf]
        %v2630 = vunpack.c.l.b16 %v2622
        %v2631 = vunpack.c.l.b16 %v2623
        %v2632 = vunpack.c.l.b16 %v2624
        %v2633 = vunpack.c.l.b16 %v2625
        %v2634 = vpack.c.b16 %v2631, %v2630
        %v2635 = vpack.c.b16 %v2633, %v2632
        %v2639 = vsel %vm873, %v2614, 0
        %v2642 = vsel %vm873, %v2615, 0
        %v2645 = vsel %vm873, %v2616, 0
        %v2648 = vsel %vm873, %v2617, 0
        %v2651 = vsel %vm873, %v2618, 0
        %v2654 = vsel %vm873, %v2619, 0
        %v2657 = vsel %vm873, %v2620, 0
        %v2660 = vsel %vm873, %v2621, 0
        %2662 = vmatprep.subr.bf16.mxu0 0
        %2663 = vmatpush1.bf16.msra.mxu0 %v2634
        %2664 = vmatprep.subr.bf16.mxu0 0
        %2665 = vmatpush1.bf16.msra.mxu0 %v2635
        %2666 = vmatprep.subr.bf16.mxu0 0
        %2667 = vmatpush1.bf16.msra.mxu0 0
        %2668 = vmatprep.subr.bf16.mxu0 0
        %2669 = vmatpush1.bf16.msra.mxu0 0
        %2670 = vmatprep.subr.bf16.mxu0 0
        %2671 = vmatpush1.bf16.msra.mxu0 0
        %2672 = vmatprep.subr.bf16.mxu0 0
        %2673 = vmatpush1.bf16.msra.mxu0 0
        %2674 = vmatprep.subr.bf16.mxu0 0
        %2675 = vmatpush1.bf16.msra.mxu0 0
        %2676 = vmatprep.subr.bf16.mxu0 0
        %2677 = vmatpush1.bf16.msra.mxu0 0
        %2678 = vmatprep.subr.bf16.mxu0 0
        %2679 = vmatpush1.bf16.msra.mxu0 0
        %2680 = vmatprep.subr.bf16.mxu0 0
        %2681 = vmatpush1.bf16.msra.mxu0 0
        %2682 = vmatprep.subr.bf16.mxu0 0
        %2683 = vmatpush1.bf16.msra.mxu0 0
        %2684 = vmatprep.subr.bf16.mxu0 0
        %2685 = vmatpush1.bf16.msra.mxu0 0
        %2686 = vmatprep.subr.bf16.mxu0 0
        %2687 = vmatpush1.bf16.msra.mxu0 0
        %2688 = vmatprep.subr.bf16.mxu0 0
        %2689 = vmatpush1.bf16.msra.mxu0 0
        %2690 = vmatprep.subr.bf16.mxu0 0
        %2691 = vmatpush1.bf16.msra.mxu0 0
        %2692 = vmatprep.subr.bf16.mxu0 0
        %2693 = vmatpush1.bf16.msra.mxu0 0
        %2694 = vmatprep.mubr.bf16.mxu0 0
        %2695 = vmatmul.mubr.bf16.gmra.mrb[0].mxu0 %v2639
        %v2696 = vpop.f32.mrb[0].mxu0
        %v2697 = vadd.f32 0.0, %v2696
        %v2698 = vpop.f32.mrb[0].mxu0
        %v2699 = vpop.f32.mrb[0].mxu0
        %v2700 = vadd.f32 0.0, %v2699
        %v2701 = vpop.f32.mrb[0].mxu0
        %2702 = vmatprep.mubr.bf16.mxu0 0
        %2703 = vmatmul.mubr.bf16.gmra.mrb[0].mxu0 %v2642
        %v2704 = vpop.f32.mrb[0].mxu0
        %v2705 = vadd.f32 0.0, %v2704
        %v2706 = vpop.f32.mrb[0].mxu0
        %v2707 = vpop.f32.mrb[0].mxu0
        %v2708 = vadd.f32 0.0, %v2707
        %v2709 = vpop.f32.mrb[0].mxu0
        %2710 = vmatprep.mubr.bf16.mxu0 0
        %2711 = vmatmul.mubr.bf16.gmra.mrb[0].mxu0 %v2645
        %v2712 = vpop.f32.mrb[0].mxu0
        %v2713 = vadd.f32 0.0, %v2712
        %v2714 = vpop.f32.mrb[0].mxu0
        %v2715 = vpop.f32.mrb[0].mxu0
        %v2716 = vadd.f32 0.0, %v2715
        %v2717 = vpop.f32.mrb[0].mxu0
        %2718 = vmatprep.mubr.bf16.mxu0 0
        %2719 = vmatmul.mubr.bf16.gmra.mrb[0].mxu0 %v2648
        %v2720 = vpop.f32.mrb[0].mxu0
        %v2721 = vadd.f32 0.0, %v2720
        %v2722 = vpop.f32.mrb[0].mxu0
        %v2723 = vpop.f32.mrb[0].mxu0
        %v2724 = vadd.f32 0.0, %v2723
        %v2725 = vpop.f32.mrb[0].mxu0
        %2726 = vmatprep.mubr.bf16.mxu0 0
        %2727 = vmatmul.mubr.bf16.gmra.mrb[0].mxu0 %v2651
        %v2728 = vpop.f32.mrb[0].mxu0
        %v2729 = vadd.f32 0.0, %v2728
        %v2730 = vpop.f32.mrb[0].mxu0
        %v2731 = vpop.f32.mrb[0].mxu0
        %v2732 = vadd.f32 0.0, %v2731
        %v2733 = vpop.f32.mrb[0].mxu0
        %2734 = vmatprep.mubr.bf16.mxu0 0
        %2735 = vmatmul.mubr.bf16.gmra.mrb[0].mxu0 %v2654
        %v2736 = vpop.f32.mrb[0].mxu0
        %v2737 = vadd.f32 0.0, %v2736
        %v2738 = vpop.f32.mrb[0].mxu0
        %v2739 = vpop.f32.mrb[0].mxu0
        %v2740 = vadd.f32 0.0, %v2739
        %v2741 = vpop.f32.mrb[0].mxu0
        %2742 = vmatprep.mubr.bf16.mxu0 0
        %2743 = vmatmul.mubr.bf16.gmra.mrb[0].mxu0 %v2657
        %v2744 = vpop.f32.mrb[0].mxu0
        %v2745 = vadd.f32 0.0, %v2744
        %v2746 = vpop.f32.mrb[0].mxu0
        %v2747 = vpop.f32.mrb[0].mxu0
        %v2748 = vadd.f32 0.0, %v2747
        %v2749 = vpop.f32.mrb[0].mxu0
        %2750 = vmatprep.mubr.bf16.mxu0 0
        %2751 = vmatmul.mubr.bf16.gmra.mrb[0].mxu0 %v2660
        %v2752 = vpop.f32.mrb[0].mxu0
        %v2753 = vadd.f32 0.0, %v2752
        %v2754 = vpop.f32.mrb[0].mxu0
        %v2755 = vpop.f32.mrb[0].mxu0
        %v2756 = vadd.f32 0.0, %v2755
        %v2757 = vpop.f32.mrb[0].mxu0
        %2758 = vdwg.mxu0
        %v2759 = vadd.f32 %v2552, %v2697
        %v2760 = vadd.f32 %v2555, %v2700
        %v2761 = vadd.f32 %v2560, %v2705
        %v2762 = vadd.f32 %v2563, %v2708
        %v2763 = vadd.f32 %v2568, %v2713
        %v2764 = vadd.f32 %v2571, %v2716
        %v2765 = vadd.f32 %v2576, %v2721
        %v2766 = vadd.f32 %v2579, %v2724
        %v2767 = vadd.f32 %v2584, %v2729
        %v2768 = vadd.f32 %v2587, %v2732
        %v2769 = vadd.f32 %v2592, %v2737
        %v2770 = vadd.f32 %v2595, %v2740
        %v2771 = vadd.f32 %v2600, %v2745
        %v2772 = vadd.f32 %v2603, %v2748
        %v2773 = vadd.f32 %v2608, %v2753
        %v2774 = vadd.f32 %v2611, %v2756
        %v2775 = vld [vmem:[#allocation17] sm:$0x1]
        %v2777 = vlaneseq
        %v2778 = vshrl.u32 %v2777, 7
        %v2779 = vsub.s32 0, %v2778
        %v2780 = vrot.slane %v2775, %v2779
        %v2782 = vadd.f32 %v2759, %v2780
        %v2783 = vadd.f32 %v2760, %v2780
        %v2784 = vadd.f32 %v2761, %v2780
        %v2785 = vadd.f32 %v2762, %v2780
        %v2786 = vadd.f32 %v2763, %v2780
        %v2787 = vadd.f32 %v2764, %v2780
        %v2788 = vadd.f32 %v2765, %v2780
        %v2789 = vadd.f32 %v2766, %v2780
        %v2790 = vadd.f32 %v2767, %v2780
        %v2791 = vadd.f32 %v2768, %v2780
        %v2792 = vadd.f32 %v2769, %v2780
        %v2793 = vadd.f32 %v2770, %v2780
        %v2794 = vadd.f32 %v2771, %v2780
        %v2795 = vadd.f32 %v2772, %v2780
        %v2796 = vadd.f32 %v2773, %v2780
        %v2797 = vadd.f32 %v2774, %v2780
        %v2798 = vmul.f32 %v2782, 1.442695
        %v2799 = vpow.pop %v2798
        %v2800 = vmul.f32 %v2783, 1.442695
        %v2801 = vpow.pop %v2800
        %v2802 = vmul.f32 %v2784, 1.442695
        %v2803 = vpow.pop %v2802
        %v2804 = vmul.f32 %v2785, 1.442695
        %v2805 = vpow.pop %v2804
        %v2806 = vmul.f32 %v2786, 1.442695
        %v2807 = vpow.pop %v2806
        %v2808 = vmul.f32 %v2787, 1.442695
        %v2809 = vpow.pop %v2808
        %v2810 = vmul.f32 %v2788, 1.442695
        %v2811 = vpow.pop %v2810
        %v2812 = vmul.f32 %v2789, 1.442695
        %v2813 = vpow.pop %v2812
        %v2814 = vmul.f32 %v2790, 1.442695
        %v2815 = vpow.pop %v2814
        %v2816 = vmul.f32 %v2791, 1.442695
        %v2817 = vpow.pop %v2816
        %v2818 = vmul.f32 %v2792, 1.442695
        %v2819 = vpow.pop %v2818
        %v2820 = vmul.f32 %v2793, 1.442695
        %v2821 = vpow.pop %v2820
        %v2822 = vmul.f32 %v2794, 1.442695
        %v2823 = vpow.pop %v2822
        %v2824 = vmul.f32 %v2795, 1.442695
        %v2825 = vpow.pop %v2824
        %v2826 = vmul.f32 %v2796, 1.442695
        %v2827 = vpow.pop %v2826
        %v2828 = vmul.f32 %v2797, 1.442695
        %v2829 = vpow.pop %v2828
        %2846 = vrot.lane.b32.xlu0 %v794, 16
        %v2847 = vpop.permute.xlu0 %2846
        %2848 = vrot.lane.b32.xlu0 %v795, 16
        %v2849 = vpop.permute.xlu0 %2848
        %2850 = vrot.lane.b32.xlu0 %v796, 16
        %v2851 = vpop.permute.xlu0 %2850
        %2852 = vrot.lane.b32.xlu0 %v797, 16
        %v2853 = vpop.permute.xlu0 %2852
        %2854 = vrot.lane.b32.xlu0 %v798, 16
        %v2855 = vpop.permute.xlu0 %2854
        %2856 = vrot.lane.b32.xlu0 %v799, 16
        %v2857 = vpop.permute.xlu0 %2856
        %2858 = vrot.lane.b32.xlu0 %v800, 16
        %v2859 = vpop.permute.xlu0 %2858
        %2860 = vrot.lane.b32.xlu0 %v801, 16
        %v2861 = vpop.permute.xlu0 %2860
        %2862 = vrot.lane.b32.xlu0 %v802, 16
        %v2863 = vpop.permute.xlu0 %2862
        %2864 = vrot.lane.b32.xlu0 %v803, 16
        %v2865 = vpop.permute.xlu0 %2864
        %2866 = vrot.lane.b32.xlu0 %v804, 16
        %v2867 = vpop.permute.xlu0 %2866
        %2868 = vrot.lane.b32.xlu0 %v805, 16
        %v2869 = vpop.permute.xlu0 %2868
        %2870 = vrot.lane.b32.xlu0 %v806, 16
        %v2871 = vpop.permute.xlu0 %2870
        %2872 = vrot.lane.b32.xlu0 %v807, 16
        %v2873 = vpop.permute.xlu0 %2872
        %2874 = vrot.lane.b32.xlu0 %v808, 16
        %v2875 = vpop.permute.xlu0 %2874
        %2876 = vrot.lane.b32.xlu0 %v809, 16
        %v2877 = vpop.permute.xlu0 %2876
        %v2894 = vmul.f32 %v2799, %v2847
        %v2895 = vmul.f32 %v2801, %v2849
        %v2896 = vmul.f32 %v2803, %v2851
        %v2897 = vmul.f32 %v2805, %v2853
        %v2898 = vmul.f32 %v2807, %v2855
        %v2899 = vmul.f32 %v2809, %v2857
        %v2900 = vmul.f32 %v2811, %v2859
        %v2901 = vmul.f32 %v2813, %v2861
        %v2902 = vmul.f32 %v2815, %v2863
        %v2903 = vmul.f32 %v2817, %v2865
        %v2904 = vmul.f32 %v2819, %v2867
        %v2905 = vmul.f32 %v2821, %v2869
        %v2906 = vmul.f32 %v2823, %v2871
        %v2907 = vmul.f32 %v2825, %v2873
        %v2908 = vmul.f32 %v2827, %v2875
        %v2909 = vmul.f32 %v2829, %v2877
        %2926 = vrot.lane.b32.xlu0 %v2894, 112
        %v2927 = vpop.permute.xlu0 %2926
        %2928 = vrot.lane.b32.xlu0 %v2895, 112
        %v2929 = vpop.permute.xlu0 %2928
        %2930 = vrot.lane.b32.xlu0 %v2896, 112
        %v2931 = vpop.permute.xlu0 %2930
        %2932 = vrot.lane.b32.xlu0 %v2897, 112
        %v2933 = vpop.permute.xlu0 %2932
        %2934 = vrot.lane.b32.xlu0 %v2898, 112
        %v2935 = vpop.permute.xlu0 %2934
        %2936 = vrot.lane.b32.xlu0 %v2899, 112
        %v2937 = vpop.permute.xlu0 %2936
        %2938 = vrot.lane.b32.xlu0 %v2900, 112
        %v2939 = vpop.permute.xlu0 %2938
        %2940 = vrot.lane.b32.xlu0 %v2901, 112
        %v2941 = vpop.permute.xlu0 %2940
        %2942 = vrot.lane.b32.xlu0 %v2902, 112
        %v2943 = vpop.permute.xlu0 %2942
        %2944 = vrot.lane.b32.xlu0 %v2903, 112
        %v2945 = vpop.permute.xlu0 %2944
        %2946 = vrot.lane.b32.xlu0 %v2904, 112
        %v2947 = vpop.permute.xlu0 %2946
        %2948 = vrot.lane.b32.xlu0 %v2905, 112
        %v2949 = vpop.permute.xlu0 %2948
        %2950 = vrot.lane.b32.xlu0 %v2906, 112
        %v2951 = vpop.permute.xlu0 %2950
        %2952 = vrot.lane.b32.xlu0 %v2907, 112
        %v2953 = vpop.permute.xlu0 %2952
        %2954 = vrot.lane.b32.xlu0 %v2908, 112
        %v2955 = vpop.permute.xlu0 %2954
        %2956 = vrot.lane.b32.xlu0 %v2909, 112
        %v2957 = vpop.permute.xlu0 %2956
        %v2974 = vadd.f32 %v2782, %v2927
        %v2975 = vadd.f32 %v2783, %v2929
        %v2976 = vadd.f32 %v2784, %v2931
        %v2977 = vadd.f32 %v2785, %v2933
        %v2978 = vadd.f32 %v2786, %v2935
        %v2979 = vadd.f32 %v2787, %v2937
        %v2980 = vadd.f32 %v2788, %v2939
        %v2981 = vadd.f32 %v2789, %v2941
        %v2982 = vadd.f32 %v2790, %v2943
        %v2983 = vadd.f32 %v2791, %v2945
        %v2984 = vadd.f32 %v2792, %v2947
        %v2985 = vadd.f32 %v2793, %v2949
        %v2986 = vadd.f32 %v2794, %v2951
        %v2987 = vadd.f32 %v2795, %v2953
        %v2988 = vadd.f32 %v2796, %v2955
        %v2989 = vadd.f32 %v2797, %v2957
        %v2990 = vpack.c.bf16 %v2975, %v2974
        %v2991 = vpack.c.bf16 %v2977, %v2976
        %v2992 = vpack.c.bf16 %v2979, %v2978
        %v2993 = vpack.c.bf16 %v2981, %v2980
        %v2994 = vpack.c.bf16 %v2983, %v2982
        %v2995 = vpack.c.bf16 %v2985, %v2984
        %v2996 = vpack.c.bf16 %v2987, %v2986
        %v2997 = vpack.c.bf16 %v2989, %v2988
        %v2998 = vld [vmem:[#allocation19] sm:$0xf]
        %v2999 = vld [vmem:[#allocation19 + $0x4] sm:$0xf]
        %v3000 = vld [vmem:[%s14] sm:$0x1]
        %v3002 = vlaneseq
        %v3003 = vshrl.u32 %v3002, 7
        %v3004 = vsub.s32 0, %v3003
        %v3005 = vrot.slane %v3000, %v3004
        %v3009 = vunpack.c.l.b16 %v2998
        %v3010 = vunpack.c.l.b16 %v2999
        %v3011 = vpack.c.b16 %v3010, %v3009
        %v3014 = vsel %vm1146, %v2990, 0
        %v3017 = vsel %vm1146, %v2991, 0
        %v3020 = vsel %vm1146, %v2992, 0
        %v3023 = vsel %vm1146, %v2993, 0
        %v3026 = vsel %vm1146, %v2994, 0
        %v3029 = vsel %vm1146, %v2995, 0
        %v3032 = vsel %vm1146, %v2996, 0
        %v3035 = vsel %vm1146, %v2997, 0
        %3037 = vmatprep.subr.bf16.mxu0 0
        %3038 = vmatpush1.bf16.msra.mxu0 %v3011
        %3039 = vmatprep.subr.bf16.mxu0 0
        %3040 = vmatpush1.bf16.msra.mxu0 0
        %3041 = vmatprep.subr.bf16.mxu0 0
        %3042 = vmatpush1.bf16.msra.mxu0 0
        %3043 = vmatprep.subr.bf16.mxu0 0
        %3044 = vmatpush1.bf16.msra.mxu0 0
        %3045 = vmatprep.subr.bf16.mxu0 0
        %3046 = vmatpush1.bf16.msra.mxu0 0
        %3047 = vmatprep.subr.bf16.mxu0 0
        %3048 = vmatpush1.bf16.msra.mxu0 0
        %3049 = vmatprep.subr.bf16.mxu0 0
        %3050 = vmatpush1.bf16.msra.mxu0 0
        %3051 = vmatprep.subr.bf16.mxu0 0
        %3052 = vmatpush1.bf16.msra.mxu0 0
        %3053 = vmatprep.subr.bf16.mxu0 0
        %3054 = vmatpush1.bf16.msra.mxu0 0
        %3055 = vmatprep.subr.bf16.mxu0 0
        %3056 = vmatpush1.bf16.msra.mxu0 0
        %3057 = vmatprep.subr.bf16.mxu0 0
        %3058 = vmatpush1.bf16.msra.mxu0 0
        %3059 = vmatprep.subr.bf16.mxu0 0
        %3060 = vmatpush1.bf16.msra.mxu0 0
        %3061 = vmatprep.subr.bf16.mxu0 0
        %3062 = vmatpush1.bf16.msra.mxu0 0
        %3063 = vmatprep.subr.bf16.mxu0 0
        %3064 = vmatpush1.bf16.msra.mxu0 0
        %3065 = vmatprep.subr.bf16.mxu0 0
        %3066 = vmatpush1.bf16.msra.mxu0 0
        %3067 = vmatprep.subr.bf16.mxu0 0
        %3068 = vmatpush1.bf16.msra.mxu0 0
        %3069 = vmatprep.mubr.bf16.mxu0 0
        %3070 = vmatmul.mubr.bf16.gmra.mrb[0].mxu0 %v3014
        %v3071 = vpop.f32.mrb[0].mxu0
        %v3072 = vadd.f32 %v3005, %v3071
        %v3073 = vpop.f32.mrb[0].mxu0
        %v3074 = vpop.f32.mrb[0].mxu0
        %v3075 = vadd.f32 %v3005, %v3074
        %v3076 = vpop.f32.mrb[0].mxu0
        %3077 = vmatprep.mubr.bf16.mxu0 0
        %3078 = vmatmul.mubr.bf16.gmra.mrb[0].mxu0 %v3017
        %v3079 = vpop.f32.mrb[0].mxu0
        %v3080 = vadd.f32 %v3005, %v3079
        %v3081 = vpop.f32.mrb[0].mxu0
        %v3082 = vpop.f32.mrb[0].mxu0
        %v3083 = vadd.f32 %v3005, %v3082
        %v3084 = vpop.f32.mrb[0].mxu0
        %3085 = vmatprep.mubr.bf16.mxu0 0
        %3086 = vmatmul.mubr.bf16.gmra.mrb[0].mxu0 %v3020
        %v3087 = vpop.f32.mrb[0].mxu0
        %v3088 = vadd.f32 %v3005, %v3087
        %v3089 = vpop.f32.mrb[0].mxu0
        %v3090 = vpop.f32.mrb[0].mxu0
        %v3091 = vadd.f32 %v3005, %v3090
        %v3092 = vpop.f32.mrb[0].mxu0
        %3093 = vmatprep.mubr.bf16.mxu0 0
        %3094 = vmatmul.mubr.bf16.gmra.mrb[0].mxu0 %v3023
        %v3095 = vpop.f32.mrb[0].mxu0
        %v3096 = vadd.f32 %v3005, %v3095
        %v3097 = vpop.f32.mrb[0].mxu0
        %v3098 = vpop.f32.mrb[0].mxu0
        %v3099 = vadd.f32 %v3005, %v3098
        %v3100 = vpop.f32.mrb[0].mxu0
        %3101 = vmatprep.mubr.bf16.mxu0 0
        %3102 = vmatmul.mubr.bf16.gmra.mrb[0].mxu0 %v3026
        %v3103 = vpop.f32.mrb[0].mxu0
        %v3104 = vadd.f32 %v3005, %v3103
        %v3105 = vpop.f32.mrb[0].mxu0
        %v3106 = vpop.f32.mrb[0].mxu0
        %v3107 = vadd.f32 %v3005, %v3106
        %v3108 = vpop.f32.mrb[0].mxu0
        %3109 = vmatprep.mubr.bf16.mxu0 0
        %3110 = vmatmul.mubr.bf16.gmra.mrb[0].mxu0 %v3029
        %v3111 = vpop.f32.mrb[0].mxu0
        %v3112 = vadd.f32 %v3005, %v3111
        %v3113 = vpop.f32.mrb[0].mxu0
        %v3114 = vpop.f32.mrb[0].mxu0
        %v3115 = vadd.f32 %v3005, %v3114
        %v3116 = vpop.f32.mrb[0].mxu0
        %3117 = vmatprep.mubr.bf16.mxu0 0
        %3118 = vmatmul.mubr.bf16.gmra.mrb[0].mxu0 %v3032
        %v3119 = vpop.f32.mrb[0].mxu0
        %v3120 = vadd.f32 %v3005, %v3119
        %v3121 = vpop.f32.mrb[0].mxu0
        %v3122 = vpop.f32.mrb[0].mxu0
        %v3123 = vadd.f32 %v3005, %v3122
        %v3124 = vpop.f32.mrb[0].mxu0
        %3125 = vmatprep.mubr.bf16.mxu0 0
        %3126 = vmatmul.mubr.bf16.gmra.mrb[0].mxu0 %v3035
        %v3127 = vpop.f32.mrb[0].mxu0
        %v3128 = vadd.f32 %v3005, %v3127
        %v3129 = vpop.f32.mrb[0].mxu0
        %v3130 = vpop.f32.mrb[0].mxu0
        %v3131 = vadd.f32 %v3005, %v3130
        %v3132 = vpop.f32.mrb[0].mxu0
        %3133 = vdwg.mxu0
        %v3134 = vxor.u32 %v3072, 2147483648
        %v3135 = vxor.u32 %v3075, 2147483648
        %v3136 = vxor.u32 %v3080, 2147483648
        %v3137 = vxor.u32 %v3083, 2147483648
        %v3138 = vxor.u32 %v3088, 2147483648
        %v3139 = vxor.u32 %v3091, 2147483648
        %v3140 = vxor.u32 %v3096, 2147483648
        %v3141 = vxor.u32 %v3099, 2147483648
        %v3142 = vxor.u32 %v3104, 2147483648
        %v3143 = vxor.u32 %v3107, 2147483648
        %v3144 = vxor.u32 %v3112, 2147483648
        %v3145 = vxor.u32 %v3115, 2147483648
        %v3146 = vxor.u32 %v3120, 2147483648
        %v3147 = vxor.u32 %v3123, 2147483648
        %v3148 = vxor.u32 %v3128, 2147483648
        %v3149 = vxor.u32 %v3131, 2147483648
        %v3150 = vmul.f32 %v3134, 1.442695
        %v3151 = vpow.pop %v3150
        %v3152 = vmul.f32 %v3135, 1.442695
        %v3153 = vpow.pop %v3152
        %v3154 = vmul.f32 %v3136, 1.442695
        %v3155 = vpow.pop %v3154
        %v3156 = vmul.f32 %v3137, 1.442695
        %v3157 = vpow.pop %v3156
        %v3158 = vmul.f32 %v3138, 1.442695
        %v3159 = vpow.pop %v3158
        %v3160 = vmul.f32 %v3139, 1.442695
        %v3161 = vpow.pop %v3160
        %v3162 = vmul.f32 %v3140, 1.442695
        %v3163 = vpow.pop %v3162
        %v3164 = vmul.f32 %v3141, 1.442695
        %v3165 = vpow.pop %v3164
        %v3166 = vmul.f32 %v3142, 1.442695
        %v3167 = vpow.pop %v3166
        %v3168 = vmul.f32 %v3143, 1.442695
        %v3169 = vpow.pop %v3168
        %v3170 = vmul.f32 %v3144, 1.442695
        %v3171 = vpow.pop %v3170
        %v3172 = vmul.f32 %v3145, 1.442695
        %v3173 = vpow.pop %v3172
        %v3174 = vmul.f32 %v3146, 1.442695
        %v3175 = vpow.pop %v3174
        %v3176 = vmul.f32 %v3147, 1.442695
        %v3177 = vpow.pop %v3176
        %v3178 = vmul.f32 %v3148, 1.442695
        %v3179 = vpow.pop %v3178
        %v3180 = vmul.f32 %v3149, 1.442695
        %v3181 = vpow.pop %v3180
        %v3182 = vadd.f32 %v3151, 1.0
        %v3183 = vadd.f32 %v3153, 1.0
        %v3184 = vadd.f32 %v3155, 1.0
        %v3185 = vadd.f32 %v3157, 1.0
        %v3186 = vadd.f32 %v3159, 1.0
        %v3187 = vadd.f32 %v3161, 1.0
        %v3188 = vadd.f32 %v3163, 1.0
        %v3189 = vadd.f32 %v3165, 1.0
        %v3190 = vadd.f32 %v3167, 1.0
        %v3191 = vadd.f32 %v3169, 1.0
        %v3192 = vadd.f32 %v3171, 1.0
        %v3193 = vadd.f32 %v3173, 1.0
        %v3194 = vadd.f32 %v3175, 1.0
        %v3195 = vadd.f32 %v3177, 1.0
        %v3196 = vadd.f32 %v3179, 1.0
        %v3197 = vadd.f32 %v3181, 1.0
        %v3198 = vrcp.pop %v3182
        %v3199 = vmul.f32 1.0, %v3198
        %v3200 = vrcp.pop %v3183
        %v3201 = vmul.f32 1.0, %v3200
        %v3202 = vrcp.pop %v3184
        %v3203 = vmul.f32 1.0, %v3202
        %v3204 = vrcp.pop %v3185
        %v3205 = vmul.f32 1.0, %v3204
        %v3206 = vrcp.pop %v3186
        %v3207 = vmul.f32 1.0, %v3206
        %v3208 = vrcp.pop %v3187
        %v3209 = vmul.f32 1.0, %v3208
        %v3210 = vrcp.pop %v3188
        %v3211 = vmul.f32 1.0, %v3210
        %v3212 = vrcp.pop %v3189
        %v3213 = vmul.f32 1.0, %v3212
        %v3214 = vrcp.pop %v3190
        %v3215 = vmul.f32 1.0, %v3214
        %v3216 = vrcp.pop %v3191
        %v3217 = vmul.f32 1.0, %v3216
        %v3218 = vrcp.pop %v3192
        %v3219 = vmul.f32 1.0, %v3218
        %v3220 = vrcp.pop %v3193
        %v3221 = vmul.f32 1.0, %v3220
        %v3222 = vrcp.pop %v3194
        %v3223 = vmul.f32 1.0, %v3222
        %v3224 = vrcp.pop %v3195
        %v3225 = vmul.f32 1.0, %v3224
        %v3226 = vrcp.pop %v3196
        %v3227 = vmul.f32 1.0, %v3226
        %v3228 = vrcp.pop %v3197
        %v3229 = vmul.f32 1.0, %v3228
        %v3230 = vpack.c.bf16 %v3201, %v3199
        %v3231 = vpack.c.bf16 %v3205, %v3203
        %v3232 = vpack.c.bf16 %v3209, %v3207
        %v3233 = vpack.c.bf16 %v3213, %v3211
        %v3234 = vpack.c.bf16 %v3217, %v3215
        %v3235 = vpack.c.bf16 %v3221, %v3219
        %v3236 = vpack.c.bf16 %v3225, %v3223
        %v3237 = vpack.c.bf16 %v3229, %v3227
        %v3238 = vld [vmem:[%s15] sm:$0xf]
        %v3239 = vld [vmem:[%s15 + $0x4] sm:$0xf]
        %v3240 = vld [vmem:[%s15 + $0x8] sm:$0xf]
        %v3241 = vld [vmem:[%s15 + $0xc] sm:$0xf]
        %v3242 = vld [vmem:[%s16] sm:$0x1]
        %v3244 = vlaneseq
        %v3245 = vshrl.u32 %v3244, 7
        %v3246 = vsub.s32 0, %v3245
        %v3247 = vrot.slane %v3242, %v3246
        %v3253 = vunpack.c.l.b16 %v3238
        %v3254 = vunpack.c.l.b16 %v3239
        %v3255 = vunpack.c.l.b16 %v3240
        %v3256 = vunpack.c.l.b16 %v3241
        %v3257 = vpack.c.b16 %v3254, %v3253
        %v3258 = vpack.c.b16 %v3256, %v3255
        %v3262 = vsel %vm873, %v3230, 0
        %v3265 = vsel %vm873, %v3231, 0
        %v3268 = vsel %vm873, %v3232, 0
        %v3271 = vsel %vm873, %v3233, 0
        %v3274 = vsel %vm873, %v3234, 0
        %v3277 = vsel %vm873, %v3235, 0
        %v3280 = vsel %vm873, %v3236, 0
        %v3283 = vsel %vm873, %v3237, 0
        %3285 = vmatprep.subr.bf16.mxu0 0
        %3286 = vmatpush1.bf16.msra.mxu0 %v3257
        %3287 = vmatprep.subr.bf16.mxu0 0
        %3288 = vmatpush1.bf16.msra.mxu0 %v3258
        %3289 = vmatprep.subr.bf16.mxu0 0
        %3290 = vmatpush1.bf16.msra.mxu0 0
        %3291 = vmatprep.subr.bf16.mxu0 0
        %3292 = vmatpush1.bf16.msra.mxu0 0
        %3293 = vmatprep.subr.bf16.mxu0 0
        %3294 = vmatpush1.bf16.msra.mxu0 0
        %3295 = vmatprep.subr.bf16.mxu0 0
        %3296 = vmatpush1.bf16.msra.mxu0 0
        %3297 = vmatprep.subr.bf16.mxu0 0
        %3298 = vmatpush1.bf16.msra.mxu0 0
        %3299 = vmatprep.subr.bf16.mxu0 0
        %3300 = vmatpush1.bf16.msra.mxu0 0
        %3301 = vmatprep.subr.bf16.mxu0 0
        %3302 = vmatpush1.bf16.msra.mxu0 0
        %3303 = vmatprep.subr.bf16.mxu0 0
        %3304 = vmatpush1.bf16.msra.mxu0 0
        %3305 = vmatprep.subr.bf16.mxu0 0
        %3306 = vmatpush1.bf16.msra.mxu0 0
        %3307 = vmatprep.subr.bf16.mxu0 0
        %3308 = vmatpush1.bf16.msra.mxu0 0
        %3309 = vmatprep.subr.bf16.mxu0 0
        %3310 = vmatpush1.bf16.msra.mxu0 0
        %3311 = vmatprep.subr.bf16.mxu0 0
        %3312 = vmatpush1.bf16.msra.mxu0 0
        %3313 = vmatprep.subr.bf16.mxu0 0
        %3314 = vmatpush1.bf16.msra.mxu0 0
        %3315 = vmatprep.subr.bf16.mxu0 0
        %3316 = vmatpush1.bf16.msra.mxu0 0
        %3317 = vmatprep.mubr.bf16.mxu0 0
        %3318 = vmatmul.mubr.bf16.gmra.mrb[0].mxu0 %v3262
        %v3319 = vpop.f32.mrb[0].mxu0
        %v3320 = vadd.f32 %v3247, %v3319
        %v3321 = vpop.f32.mrb[0].mxu0
        %v3322 = vpop.f32.mrb[0].mxu0
        %v3323 = vadd.f32 %v3247, %v3322
        %v3324 = vpop.f32.mrb[0].mxu0
        %3325 = vmatprep.mubr.bf16.mxu0 0
        %3326 = vmatmul.mubr.bf16.gmra.mrb[0].mxu0 %v3265
        %v3327 = vpop.f32.mrb[0].mxu0
        %v3328 = vadd.f32 %v3247, %v3327
        %v3329 = vpop.f32.mrb[0].mxu0
        %v3330 = vpop.f32.mrb[0].mxu0
        %v3331 = vadd.f32 %v3247, %v3330
        %v3332 = vpop.f32.mrb[0].mxu0
        %3333 = vmatprep.mubr.bf16.mxu0 0
        %3334 = vmatmul.mubr.bf16.gmra.mrb[0].mxu0 %v3268
        %v3335 = vpop.f32.mrb[0].mxu0
        %v3336 = vadd.f32 %v3247, %v3335
        %v3337 = vpop.f32.mrb[0].mxu0
        %v3338 = vpop.f32.mrb[0].mxu0
        %v3339 = vadd.f32 %v3247, %v3338
        %v3340 = vpop.f32.mrb[0].mxu0
        %3341 = vmatprep.mubr.bf16.mxu0 0
        %3342 = vmatmul.mubr.bf16.gmra.mrb[0].mxu0 %v3271
        %v3343 = vpop.f32.mrb[0].mxu0
        %v3344 = vadd.f32 %v3247, %v3343
        %v3345 = vpop.f32.mrb[0].mxu0
        %v3346 = vpop.f32.mrb[0].mxu0
        %v3347 = vadd.f32 %v3247, %v3346
        %v3348 = vpop.f32.mrb[0].mxu0
        %3349 = vmatprep.mubr.bf16.mxu0 0
        %3350 = vmatmul.mubr.bf16.gmra.mrb[0].mxu0 %v3274
        %v3351 = vpop.f32.mrb[0].mxu0
        %v3352 = vadd.f32 %v3247, %v3351
        %v3353 = vpop.f32.mrb[0].mxu0
        %v3354 = vpop.f32.mrb[0].mxu0
        %v3355 = vadd.f32 %v3247, %v3354
        %v3356 = vpop.f32.mrb[0].mxu0
        %3357 = vmatprep.mubr.bf16.mxu0 0
        %3358 = vmatmul.mubr.bf16.gmra.mrb[0].mxu0 %v3277
        %v3359 = vpop.f32.mrb[0].mxu0
        %v3360 = vadd.f32 %v3247, %v3359
        %v3361 = vpop.f32.mrb[0].mxu0
        %v3362 = vpop.f32.mrb[0].mxu0
        %v3363 = vadd.f32 %v3247, %v3362
        %v3364 = vpop.f32.mrb[0].mxu0
        %3365 = vmatprep.mubr.bf16.mxu0 0
        %3366 = vmatmul.mubr.bf16.gmra.mrb[0].mxu0 %v3280
        %v3367 = vpop.f32.mrb[0].mxu0
        %v3368 = vadd.f32 %v3247, %v3367
        %v3369 = vpop.f32.mrb[0].mxu0
        %v3370 = vpop.f32.mrb[0].mxu0
        %v3371 = vadd.f32 %v3247, %v3370
        %v3372 = vpop.f32.mrb[0].mxu0
        %3373 = vmatprep.mubr.bf16.mxu0 0
        %3374 = vmatmul.mubr.bf16.gmra.mrb[0].mxu0 %v3283
        %v3375 = vpop.f32.mrb[0].mxu0
        %v3376 = vadd.f32 %v3247, %v3375
        %v3377 = vpop.f32.mrb[0].mxu0
        %v3378 = vpop.f32.mrb[0].mxu0
        %v3379 = vadd.f32 %v3247, %v3378
        %v3380 = vpop.f32.mrb[0].mxu0
        %3381 = vdwg.mxu0
        %3382 = vmatprep.subr.bf16.mxu0 0
        %3383 = vmatpush1.bf16.xpose.msra.mxu0 %v3014
        %3384 = vmatprep.subr.bf16.mxu0 0
        %3385 = vmatpush1.bf16.xpose.msra.mxu0 0
        %3386 = vmatprep.subr.bf16.mxu0 0
        %3387 = vmatpush1.bf16.xpose.msra.mxu0 0
        %3388 = vmatprep.subr.bf16.mxu0 0
        %3389 = vmatpush1.bf16.xpose.msra.mxu0 0
        %3390 = vmatprep.subr.bf16.mxu0 0
        %3391 = vmatpush1.bf16.xpose.msra.mxu0 0
        %3392 = vmatprep.subr.bf16.mxu0 0
        %3393 = vmatpush1.bf16.xpose.msra.mxu0 0
        %3394 = vmatprep.subr.bf16.mxu0 0
        %3395 = vmatpush1.bf16.xpose.msra.mxu0 0
        %3396 = vmatprep.subr.bf16.mxu0 0
        %3397 = vmatpush1.bf16.xpose.msra.mxu0 0
        %3398 = vmatprep.subr.bf16.mxu0 0
        %3399 = vmatpush1.bf16.xpose.msra.mxu0 0
        %3400 = vmatprep.subr.bf16.mxu0 0
        %3401 = vmatpush1.bf16.xpose.msra.mxu0 0
        %3402 = vmatprep.subr.bf16.mxu0 0
        %3403 = vmatpush1.bf16.xpose.msra.mxu0 0
        %3404 = vmatprep.subr.bf16.mxu0 0
        %3405 = vmatpush1.bf16.xpose.msra.mxu0 0
        %3406 = vmatprep.subr.bf16.mxu0 0
        %3407 = vmatpush1.bf16.xpose.msra.mxu0 0
        %3408 = vmatprep.subr.bf16.mxu0 0
        %3409 = vmatpush1.bf16.xpose.msra.mxu0 0
        %3410 = vmatprep.subr.bf16.mxu0 0
        %3411 = vmatpush1.bf16.xpose.msra.mxu0 0
        %3412 = vmatprep.subr.bf16.mxu0 0
        %3413 = vmatpush1.bf16.xpose.msra.mxu0 0
        %3414 = vmatprep.mubr.bf16.mxu0 0
        %3415 = vmatmul.mubr.bf16.gmra.mrb[0].mxu0 %v3014
        %v3416 = vpop.f32.mrb[0].mxu0
        %v3417 = vadd.f32 0.0, %v3416
        %v3418 = vpop.f32.mrb[0].mxu0
        %v3419 = vpop.f32.mrb[0].mxu0
        %v3420 = vadd.f32 0.0, %v3419
        %v3421 = vpop.f32.mrb[0].mxu0
        %3422 = vdwg.mxu0
        %3423 = vmatprep.subr.bf16.mxu0 0
        %3424 = vmatpush1.bf16.xpose.msra.mxu0 %v3017
        %3425 = vmatprep.subr.bf16.mxu0 0
        %3426 = vmatpush1.bf16.xpose.msra.mxu0 0
        %3427 = vmatprep.subr.bf16.mxu0 0
        %3428 = vmatpush1.bf16.xpose.msra.mxu0 0
        %3429 = vmatprep.subr.bf16.mxu0 0
        %3430 = vmatpush1.bf16.xpose.msra.mxu0 0
        %3431 = vmatprep.subr.bf16.mxu0 0
        %3432 = vmatpush1.bf16.xpose.msra.mxu0 0
        %3433 = vmatprep.subr.bf16.mxu0 0
        %3434 = vmatpush1.bf16.xpose.msra.mxu0 0
        %3435 = vmatprep.subr.bf16.mxu0 0
        %3436 = vmatpush1.bf16.xpose.msra.mxu0 0
        %3437 = vmatprep.subr.bf16.mxu0 0
        %3438 = vmatpush1.bf16.xpose.msra.mxu0 0
        %3439 = vmatprep.subr.bf16.mxu0 0
        %3440 = vmatpush1.bf16.xpose.msra.mxu0 0
        %3441 = vmatprep.subr.bf16.mxu0 0
        %3442 = vmatpush1.bf16.xpose.msra.mxu0 0
        %3443 = vmatprep.subr.bf16.mxu0 0
        %3444 = vmatpush1.bf16.xpose.msra.mxu0 0
        %3445 = vmatprep.subr.bf16.mxu0 0
        %3446 = vmatpush1.bf16.xpose.msra.mxu0 0
        %3447 = vmatprep.subr.bf16.mxu0 0
        %3448 = vmatpush1.bf16.xpose.msra.mxu0 0
        %3449 = vmatprep.subr.bf16.mxu0 0
        %3450 = vmatpush1.bf16.xpose.msra.mxu0 0
        %3451 = vmatprep.subr.bf16.mxu0 0
        %3452 = vmatpush1.bf16.xpose.msra.mxu0 0
        %3453 = vmatprep.subr.bf16.mxu0 0
        %3454 = vmatpush1.bf16.xpose.msra.mxu0 0
        %3455 = vmatprep.mubr.bf16.mxu0 0
        %3456 = vmatmul.mubr.bf16.gmra.mrb[0].mxu0 %v3017
        %v3457 = vpop.f32.mrb[0].mxu0
        %v3458 = vadd.f32 0.0, %v3457
        %v3459 = vpop.f32.mrb[0].mxu0
        %v3460 = vpop.f32.mrb[0].mxu0
        %v3461 = vadd.f32 0.0, %v3460
        %v3462 = vpop.f32.mrb[0].mxu0
        %3463 = vdwg.mxu0
        %3464 = vmatprep.subr.bf16.mxu0 0
        %3465 = vmatpush1.bf16.xpose.msra.mxu0 %v3020
        %3466 = vmatprep.subr.bf16.mxu0 0
        %3467 = vmatpush1.bf16.xpose.msra.mxu0 0
        %3468 = vmatprep.subr.bf16.mxu0 0
        %3469 = vmatpush1.bf16.xpose.msra.mxu0 0
        %3470 = vmatprep.subr.bf16.mxu0 0
        %3471 = vmatpush1.bf16.xpose.msra.mxu0 0
        %3472 = vmatprep.subr.bf16.mxu0 0
        %3473 = vmatpush1.bf16.xpose.msra.mxu0 0
        %3474 = vmatprep.subr.bf16.mxu0 0
        %3475 = vmatpush1.bf16.xpose.msra.mxu0 0
        %3476 = vmatprep.subr.bf16.mxu0 0
        %3477 = vmatpush1.bf16.xpose.msra.mxu0 0
        %3478 = vmatprep.subr.bf16.mxu0 0
        %3479 = vmatpush1.bf16.xpose.msra.mxu0 0
        %3480 = vmatprep.subr.bf16.mxu0 0
        %3481 = vmatpush1.bf16.xpose.msra.mxu0 0
        %3482 = vmatprep.subr.bf16.mxu0 0
        %3483 = vmatpush1.bf16.xpose.msra.mxu0 0
        %3484 = vmatprep.subr.bf16.mxu0 0
        %3485 = vmatpush1.bf16.xpose.msra.mxu0 0
        %3486 = vmatprep.subr.bf16.mxu0 0
        %3487 = vmatpush1.bf16.xpose.msra.mxu0 0
        %3488 = vmatprep.subr.bf16.mxu0 0
        %3489 = vmatpush1.bf16.xpose.msra.mxu0 0
        %3490 = vmatprep.subr.bf16.mxu0 0
        %3491 = vmatpush1.bf16.xpose.msra.mxu0 0
        %3492 = vmatprep.subr.bf16.mxu0 0
        %3493 = vmatpush1.bf16.xpose.msra.mxu0 0
        %3494 = vmatprep.subr.bf16.mxu0 0
        %3495 = vmatpush1.bf16.xpose.msra.mxu0 0
        %3496 = vmatprep.mubr.bf16.mxu0 0
        %3497 = vmatmul.mubr.bf16.gmra.mrb[0].mxu0 %v3020
        %v3498 = vpop.f32.mrb[0].mxu0
        %v3499 = vadd.f32 0.0, %v3498
        %v3500 = vpop.f32.mrb[0].mxu0
        %v3501 = vpop.f32.mrb[0].mxu0
        %v3502 = vadd.f32 0.0, %v3501
        %v3503 = vpop.f32.mrb[0].mxu0
        %3504 = vdwg.mxu0
        %3505 = vmatprep.subr.bf16.mxu0 0
        %3506 = vmatpush1.bf16.xpose.msra.mxu0 %v3023
        %3507 = vmatprep.subr.bf16.mxu0 0
        %3508 = vmatpush1.bf16.xpose.msra.mxu0 0
        %3509 = vmatprep.subr.bf16.mxu0 0
        %3510 = vmatpush1.bf16.xpose.msra.mxu0 0
        %3511 = vmatprep.subr.bf16.mxu0 0
        %3512 = vmatpush1.bf16.xpose.msra.mxu0 0
        %3513 = vmatprep.subr.bf16.mxu0 0
        %3514 = vmatpush1.bf16.xpose.msra.mxu0 0
        %3515 = vmatprep.subr.bf16.mxu0 0
        %3516 = vmatpush1.bf16.xpose.msra.mxu0 0
        %3517 = vmatprep.subr.bf16.mxu0 0
        %3518 = vmatpush1.bf16.xpose.msra.mxu0 0
        %3519 = vmatprep.subr.bf16.mxu0 0
        %3520 = vmatpush1.bf16.xpose.msra.mxu0 0
        %3521 = vmatprep.subr.bf16.mxu0 0
        %3522 = vmatpush1.bf16.xpose.msra.mxu0 0
        %3523 = vmatprep.subr.bf16.mxu0 0
        %3524 = vmatpush1.bf16.xpose.msra.mxu0 0
        %3525 = vmatprep.subr.bf16.mxu0 0
        %3526 = vmatpush1.bf16.xpose.msra.mxu0 0
        %3527 = vmatprep.subr.bf16.mxu0 0
        %3528 = vmatpush1.bf16.xpose.msra.mxu0 0
        %3529 = vmatprep.subr.bf16.mxu0 0
        %3530 = vmatpush1.bf16.xpose.msra.mxu0 0
        %3531 = vmatprep.subr.bf16.mxu0 0
        %3532 = vmatpush1.bf16.xpose.msra.mxu0 0
        %3533 = vmatprep.subr.bf16.mxu0 0
        %3534 = vmatpush1.bf16.xpose.msra.mxu0 0
        %3535 = vmatprep.subr.bf16.mxu0 0
        %3536 = vmatpush1.bf16.xpose.msra.mxu0 0
        %3537 = vmatprep.mubr.bf16.mxu0 0
        %3538 = vmatmul.mubr.bf16.gmra.mrb[0].mxu0 %v3023
        %v3539 = vpop.f32.mrb[0].mxu0
        %v3540 = vadd.f32 0.0, %v3539
        %v3541 = vpop.f32.mrb[0].mxu0
        %v3542 = vpop.f32.mrb[0].mxu0
        %v3543 = vadd.f32 0.0, %v3542
        %v3544 = vpop.f32.mrb[0].mxu0
        %3545 = vdwg.mxu0
        %3546 = vmatprep.subr.bf16.mxu0 0
        %3547 = vmatpush1.bf16.xpose.msra.mxu0 %v3026
        %3548 = vmatprep.subr.bf16.mxu0 0
        %3549 = vmatpush1.bf16.xpose.msra.mxu0 0
        %3550 = vmatprep.subr.bf16.mxu0 0
        %3551 = vmatpush1.bf16.xpose.msra.mxu0 0
        %3552 = vmatprep.subr.bf16.mxu0 0
        %3553 = vmatpush1.bf16.xpose.msra.mxu0 0
        %3554 = vmatprep.subr.bf16.mxu0 0
        %3555 = vmatpush1.bf16.xpose.msra.mxu0 0
        %3556 = vmatprep.subr.bf16.mxu0 0
        %3557 = vmatpush1.bf16.xpose.msra.mxu0 0
        %3558 = vmatprep.subr.bf16.mxu0 0
        %3559 = vmatpush1.bf16.xpose.msra.mxu0 0
        %3560 = vmatprep.subr.bf16.mxu0 0
        %3561 = vmatpush1.bf16.xpose.msra.mxu0 0
        %3562 = vmatprep.subr.bf16.mxu0 0
        %3563 = vmatpush1.bf16.xpose.msra.mxu0 0
        %3564 = vmatprep.subr.bf16.mxu0 0
        %3565 = vmatpush1.bf16.xpose.msra.mxu0 0
        %3566 = vmatprep.subr.bf16.mxu0 0
        %3567 = vmatpush1.bf16.xpose.msra.mxu0 0
        %3568 = vmatprep.subr.bf16.mxu0 0
        %3569 = vmatpush1.bf16.xpose.msra.mxu0 0
        %3570 = vmatprep.subr.bf16.mxu0 0
        %3571 = vmatpush1.bf16.xpose.msra.mxu0 0
        %3572 = vmatprep.subr.bf16.mxu0 0
        %3573 = vmatpush1.bf16.xpose.msra.mxu0 0
        %3574 = vmatprep.subr.bf16.mxu0 0
        %3575 = vmatpush1.bf16.xpose.msra.mxu0 0
        %3576 = vmatprep.subr.bf16.mxu0 0
        %3577 = vmatpush1.bf16.xpose.msra.mxu0 0
        %3578 = vmatprep.mubr.bf16.mxu0 0
        %3579 = vmatmul.mubr.bf16.gmra.mrb[0].mxu0 %v3026
        %v3580 = vpop.f32.mrb[0].mxu0
        %v3581 = vadd.f32 0.0, %v3580
        %v3582 = vpop.f32.mrb[0].mxu0
        %v3583 = vpop.f32.mrb[0].mxu0
        %v3584 = vadd.f32 0.0, %v3583
        %v3585 = vpop.f32.mrb[0].mxu0
        %3586 = vdwg.mxu0
        %3587 = vmatprep.subr.bf16.mxu0 0
        %3588 = vmatpush1.bf16.xpose.msra.mxu0 %v3029
        %3589 = vmatprep.subr.bf16.mxu0 0
        %3590 = vmatpush1.bf16.xpose.msra.mxu0 0
        %3591 = vmatprep.subr.bf16.mxu0 0
        %3592 = vmatpush1.bf16.xpose.msra.mxu0 0
        %3593 = vmatprep.subr.bf16.mxu0 0
        %3594 = vmatpush1.bf16.xpose.msra.mxu0 0
        %3595 = vmatprep.subr.bf16.mxu0 0
        %3596 = vmatpush1.bf16.xpose.msra.mxu0 0
        %3597 = vmatprep.subr.bf16.mxu0 0
        %3598 = vmatpush1.bf16.xpose.msra.mxu0 0
        %3599 = vmatprep.subr.bf16.mxu0 0
        %3600 = vmatpush1.bf16.xpose.msra.mxu0 0
        %3601 = vmatprep.subr.bf16.mxu0 0
        %3602 = vmatpush1.bf16.xpose.msra.mxu0 0
        %3603 = vmatprep.subr.bf16.mxu0 0
        %3604 = vmatpush1.bf16.xpose.msra.mxu0 0
        %3605 = vmatprep.subr.bf16.mxu0 0
        %3606 = vmatpush1.bf16.xpose.msra.mxu0 0
        %3607 = vmatprep.subr.bf16.mxu0 0
        %3608 = vmatpush1.bf16.xpose.msra.mxu0 0
        %3609 = vmatprep.subr.bf16.mxu0 0
        %3610 = vmatpush1.bf16.xpose.msra.mxu0 0
        %3611 = vmatprep.subr.bf16.mxu0 0
        %3612 = vmatpush1.bf16.xpose.msra.mxu0 0
        %3613 = vmatprep.subr.bf16.mxu0 0
        %3614 = vmatpush1.bf16.xpose.msra.mxu0 0
        %3615 = vmatprep.subr.bf16.mxu0 0
        %3616 = vmatpush1.bf16.xpose.msra.mxu0 0
        %3617 = vmatprep.subr.bf16.mxu0 0
        %3618 = vmatpush1.bf16.xpose.msra.mxu0 0
        %3619 = vmatprep.mubr.bf16.mxu0 0
        %3620 = vmatmul.mubr.bf16.gmra.mrb[0].mxu0 %v3029
        %v3621 = vpop.f32.mrb[0].mxu0
        %v3622 = vadd.f32 0.0, %v3621
        %v3623 = vpop.f32.mrb[0].mxu0
        %v3624 = vpop.f32.mrb[0].mxu0
        %v3625 = vadd.f32 0.0, %v3624
        %v3626 = vpop.f32.mrb[0].mxu0
        %3627 = vdwg.mxu0
        %3628 = vmatprep.subr.bf16.mxu0 0
        %3629 = vmatpush1.bf16.xpose.msra.mxu0 %v3032
        %3630 = vmatprep.subr.bf16.mxu0 0
        %3631 = vmatpush1.bf16.xpose.msra.mxu0 0
        %3632 = vmatprep.subr.bf16.mxu0 0
        %3633 = vmatpush1.bf16.xpose.msra.mxu0 0
        %3634 = vmatprep.subr.bf16.mxu0 0
        %3635 = vmatpush1.bf16.xpose.msra.mxu0 0
        %3636 = vmatprep.subr.bf16.mxu0 0
        %3637 = vmatpush1.bf16.xpose.msra.mxu0 0
        %3638 = vmatprep.subr.bf16.mxu0 0
        %3639 = vmatpush1.bf16.xpose.msra.mxu0 0
        %3640 = vmatprep.subr.bf16.mxu0 0
        %3641 = vmatpush1.bf16.xpose.msra.mxu0 0
        %3642 = vmatprep.subr.bf16.mxu0 0
        %3643 = vmatpush1.bf16.xpose.msra.mxu0 0
        %3644 = vmatprep.subr.bf16.mxu0 0
        %3645 = vmatpush1.bf16.xpose.msra.mxu0 0
        %3646 = vmatprep.subr.bf16.mxu0 0
        %3647 = vmatpush1.bf16.xpose.msra.mxu0 0
        %3648 = vmatprep.subr.bf16.mxu0 0
        %3649 = vmatpush1.bf16.xpose.msra.mxu0 0
        %3650 = vmatprep.subr.bf16.mxu0 0
        %3651 = vmatpush1.bf16.xpose.msra.mxu0 0
        %3652 = vmatprep.subr.bf16.mxu0 0
        %3653 = vmatpush1.bf16.xpose.msra.mxu0 0
        %3654 = vmatprep.subr.bf16.mxu0 0
        %3655 = vmatpush1.bf16.xpose.msra.mxu0 0
        %3656 = vmatprep.subr.bf16.mxu0 0
        %3657 = vmatpush1.bf16.xpose.msra.mxu0 0
        %3658 = vmatprep.subr.bf16.mxu0 0
        %3659 = vmatpush1.bf16.xpose.msra.mxu0 0
        %3660 = vmatprep.mubr.bf16.mxu0 0
        %3661 = vmatmul.mubr.bf16.gmra.mrb[0].mxu0 %v3032
        %v3662 = vpop.f32.mrb[0].mxu0
        %v3663 = vadd.f32 0.0, %v3662
        %v3664 = vpop.f32.mrb[0].mxu0
        %v3665 = vpop.f32.mrb[0].mxu0
        %v3666 = vadd.f32 0.0, %v3665
        %v3667 = vpop.f32.mrb[0].mxu0
        %3668 = vdwg.mxu0
        %3669 = vmatprep.subr.bf16.mxu0 0
        %3670 = vmatpush1.bf16.xpose.msra.mxu0 %v3035
        %3671 = vmatprep.subr.bf16.mxu0 0
        %3672 = vmatpush1.bf16.xpose.msra.mxu0 0
        %3673 = vmatprep.subr.bf16.mxu0 0
        %3674 = vmatpush1.bf16.xpose.msra.mxu0 0
        %3675 = vmatprep.subr.bf16.mxu0 0
        %3676 = vmatpush1.bf16.xpose.msra.mxu0 0
        %3677 = vmatprep.subr.bf16.mxu0 0
        %3678 = vmatpush1.bf16.xpose.msra.mxu0 0
        %3679 = vmatprep.subr.bf16.mxu0 0
        %3680 = vmatpush1.bf16.xpose.msra.mxu0 0
        %3681 = vmatprep.subr.bf16.mxu0 0
        %3682 = vmatpush1.bf16.xpose.msra.mxu0 0
        %3683 = vmatprep.subr.bf16.mxu0 0
        %3684 = vmatpush1.bf16.xpose.msra.mxu0 0
        %3685 = vmatprep.subr.bf16.mxu0 0
        %3686 = vmatpush1.bf16.xpose.msra.mxu0 0
        %3687 = vmatprep.subr.bf16.mxu0 0
        %3688 = vmatpush1.bf16.xpose.msra.mxu0 0
        %3689 = vmatprep.subr.bf16.mxu0 0
        %3690 = vmatpush1.bf16.xpose.msra.mxu0 0
        %3691 = vmatprep.subr.bf16.mxu0 0
        %3692 = vmatpush1.bf16.xpose.msra.mxu0 0
        %3693 = vmatprep.subr.bf16.mxu0 0
        %3694 = vmatpush1.bf16.xpose.msra.mxu0 0
        %3695 = vmatprep.subr.bf16.mxu0 0
        %3696 = vmatpush1.bf16.xpose.msra.mxu0 0
        %3697 = vmatprep.subr.bf16.mxu0 0
        %3698 = vmatpush1.bf16.xpose.msra.mxu0 0
        %3699 = vmatprep.subr.bf16.mxu0 0
        %3700 = vmatpush1.bf16.xpose.msra.mxu0 0
        %3701 = vmatprep.mubr.bf16.mxu0 0
        %3702 = vmatmul.mubr.bf16.gmra.mrb[0].mxu0 %v3035
        %v3703 = vpop.f32.mrb[0].mxu0
        %v3704 = vadd.f32 0.0, %v3703
        %v3705 = vpop.f32.mrb[0].mxu0
        %v3706 = vpop.f32.mrb[0].mxu0
        %v3707 = vadd.f32 0.0, %v3706
        %v3708 = vpop.f32.mrb[0].mxu0
        %3709 = vdwg.mxu0
        %3726 = vrot.lane.b32.xlu0 %v3417, 64
        %v3727 = vpop.permute.xlu0 %3726
        %3728 = vrot.lane.b32.xlu0 %v3420, 64
        %v3729 = vpop.permute.xlu0 %3728
        %3730 = vrot.lane.b32.xlu0 %v3458, 64
        %v3731 = vpop.permute.xlu0 %3730
        %3732 = vrot.lane.b32.xlu0 %v3461, 64
        %v3733 = vpop.permute.xlu0 %3732
        %3734 = vrot.lane.b32.xlu0 %v3499, 64
        %v3735 = vpop.permute.xlu0 %3734
        %3736 = vrot.lane.b32.xlu0 %v3502, 64
        %v3737 = vpop.permute.xlu0 %3736
        %3738 = vrot.lane.b32.xlu0 %v3540, 64
        %v3739 = vpop.permute.xlu0 %3738
        %3740 = vrot.lane.b32.xlu0 %v3543, 64
        %v3741 = vpop.permute.xlu0 %3740
        %3742 = vrot.lane.b32.xlu0 %v3581, 64
        %v3743 = vpop.permute.xlu0 %3742
        %3744 = vrot.lane.b32.xlu0 %v3584, 64
        %v3745 = vpop.permute.xlu0 %3744
        %3746 = vrot.lane.b32.xlu0 %v3622, 64
        %v3747 = vpop.permute.xlu0 %3746
        %3748 = vrot.lane.b32.xlu0 %v3625, 64
        %v3749 = vpop.permute.xlu0 %3748
        %3750 = vrot.lane.b32.xlu0 %v3663, 64
        %v3751 = vpop.permute.xlu0 %3750
        %3752 = vrot.lane.b32.xlu0 %v3666, 64
        %v3753 = vpop.permute.xlu0 %3752
        %3754 = vrot.lane.b32.xlu0 %v3704, 64
        %v3755 = vpop.permute.xlu0 %3754
        %3756 = vrot.lane.b32.xlu0 %v3707, 64
        %v3757 = vpop.permute.xlu0 %3756
        %vm3774 = vcmask 523264
        %v3775 = vsel %vm3774, 0.0, %v3727
        %v3776 = vsel %vm3774, 0.0, %v3729
        %v3777 = vsel %vm3774, 0.0, %v3731
        %v3778 = vsel %vm3774, 0.0, %v3733
        %v3779 = vsel %vm3774, 0.0, %v3735
        %v3780 = vsel %vm3774, 0.0, %v3737
        %v3781 = vsel %vm3774, 0.0, %v3739
        %v3782 = vsel %vm3774, 0.0, %v3741
        %v3783 = vsel %vm3774, 0.0, %v3743
        %v3784 = vsel %vm3774, 0.0, %v3745
        %v3785 = vsel %vm3774, 0.0, %v3747
        %v3786 = vsel %vm3774, 0.0, %v3749
        %v3787 = vsel %vm3774, 0.0, %v3751
        %v3788 = vsel %vm3774, 0.0, %v3753
        %v3789 = vsel %vm3774, 0.0, %v3755
        %v3790 = vsel %vm3774, 0.0, %v3757
        %vm3791 = vcmask 654336
        %v3792 = vsel %vm3791, %v3775, 0.0
        %v3793 = vsel %vm3791, %v3776, 0.0
        %v3794 = vsel %vm3791, %v3777, 0.0
        %v3795 = vsel %vm3791, %v3778, 0.0
        %v3796 = vsel %vm3791, %v3779, 0.0
        %v3797 = vsel %vm3791, %v3780, 0.0
        %v3798 = vsel %vm3791, %v3781, 0.0
        %v3799 = vsel %vm3791, %v3782, 0.0
        %v3800 = vsel %vm3791, %v3783, 0.0
        %v3801 = vsel %vm3791, %v3784, 0.0
        %v3802 = vsel %vm3791, %v3785, 0.0
        %v3803 = vsel %vm3791, %v3786, 0.0
        %v3804 = vsel %vm3791, %v3787, 0.0
        %v3805 = vsel %vm3791, %v3788, 0.0
        %v3806 = vsel %vm3791, %v3789, 0.0
        %v3807 = vsel %vm3791, %v3790, 0.0
        %v3808 = vadd.f32 %v2782, %v3320
        %v3809 = vadd.f32 %v2783, %v3323
        %v3810 = vadd.f32 %v2784, %v3328
        %v3811 = vadd.f32 %v2785, %v3331
        %v3812 = vadd.f32 %v2786, %v3336
        %v3813 = vadd.f32 %v2787, %v3339
        %v3814 = vadd.f32 %v2788, %v3344
        %v3815 = vadd.f32 %v2789, %v3347
        %v3816 = vadd.f32 %v2790, %v3352
        %v3817 = vadd.f32 %v2791, %v3355
        %v3818 = vadd.f32 %v2792, %v3360
        %v3819 = vadd.f32 %v2793, %v3363
        %v3820 = vadd.f32 %v2794, %v3368
        %v3821 = vadd.f32 %v2795, %v3371
        %v3822 = vadd.f32 %v2796, %v3376
        %v3823 = vadd.f32 %v2797, %v3379
        %v3824 = vadd.f32 %v3808, %v3792
        %v3825 = vadd.f32 %v3809, %v3793
        %v3826 = vadd.f32 %v3810, %v3794
        %v3827 = vadd.f32 %v3811, %v3795
        %v3828 = vadd.f32 %v3812, %v3796
        %v3829 = vadd.f32 %v3813, %v3797
        %v3830 = vadd.f32 %v3814, %v3798
        %v3831 = vadd.f32 %v3815, %v3799
        %v3832 = vadd.f32 %v3816, %v3800
        %v3833 = vadd.f32 %v3817, %v3801
        %v3834 = vadd.f32 %v3818, %v3802
        %v3835 = vadd.f32 %v3819, %v3803
        %v3836 = vadd.f32 %v3820, %v3804
        %v3837 = vadd.f32 %v3821, %v3805
        %v3838 = vadd.f32 %v3822, %v3806
        %v3839 = vadd.f32 %v3823, %v3807
        %3840 = vst [vmem:[%s756] sm:$0xff] %v3824
        %3841 = vst [vmem:[%s756 + $0x8] sm:$0xff] %v3825
        %3842 = vst [vmem:[%s756 + $0x10] sm:$0xff] %v3826
        %3843 = vst [vmem:[%s756 + $0x18] sm:$0xff] %v3827
        %3844 = vst [vmem:[%s756 + $0x20] sm:$0xff] %v3828
        %3845 = vst [vmem:[%s756 + $0x28] sm:$0xff] %v3829
        %3846 = vst [vmem:[%s756 + $0x30] sm:$0xff] %v3830
        %3847 = vst [vmem:[%s756 + $0x38] sm:$0xff] %v3831
        %3848 = vst [vmem:[%s756 + $0x40] sm:$0xff] %v3832
        %3849 = vst [vmem:[%s756 + $0x48] sm:$0xff] %v3833
        %3850 = vst [vmem:[%s756 + $0x50] sm:$0xff] %v3834
        %3851 = vst [vmem:[%s756 + $0x58] sm:$0xff] %v3835
        %3852 = vst [vmem:[%s756 + $0x60] sm:$0xff] %v3836
        %3853 = vst [vmem:[%s756 + $0x68] sm:$0xff] %v3837
        %3854 = vst [vmem:[%s756 + $0x70] sm:$0xff] %v3838
        %3855 = vst [vmem:[%s756 + $0x78] sm:$0xff] %v3839
        %s3856 = sand.u32 %s421, 1
        %s3857 = scalar_lea.sflag [#allocation4], %s3856
        %s3858 = sand.u32 %s421, 1
        %s3859 = smul.addr %s3858, 128
        %s3860 = scalar_lea.vmem [#allocation20], %s3859
        // Predicated region
        $region133: #{tpu_custom_call.1} parent=87 // pred_check
          %p3861 = pneg %p431
        $region134: #{tpu_custom_call.1} parent=87 // pred_check_branch
          %3863 = sbr.rel (%p3861) target = $region136
        $region135: #{tpu_custom_call.1} parent=87 // pred_region
          %s3864 = smul.u32 8, %s41
          %s3866 = ssub.s32 2048, 2048
          %3867 = vsyncadd %s3857, %s3866
          %s3868 = smul.addr %s3864, 2
          %s3869 = smul.addr %s3868, 128
          %s3870 = scalar_lea.hbm %s17, %s3869
          %s3871 = sshll.u32 %s3860, 4
          %s3872 = int_to_ptr.vmem [resolvable:$true] %s3871
          %3877 = dma.vmem_to_hbm [thread:$0]  %s3872, 2048, %s3870, %s3857, 128, 128, 8
        $region136: #{tpu_custom_call.1} parent=87 // pred_fallthru
          _
      $region88: #{tpu_custom_call.1} parent=5 // pred_fallthru
        _
      %p3878 = scmp.le.s32.totalorder 2, %s36
      // Predicated region
      $region137: #{tpu_custom_call.1} parent=5 // pred_check
        %p3879 = pneg %p3878
      $region138: #{tpu_custom_call.1} parent=5 // pred_check_branch
        %3881 = sbr.rel (%p3879) target = $region140
      $region139: #{tpu_custom_call.1} parent=5 // pred_region
        %s3882 = ssub.s32 %s36, 2
        // Predicated region
        $region141: #{tpu_custom_call.1} parent=139 // pred_check
          %p3883 = pneg %p437
        $region142: #{tpu_custom_call.1} parent=139 // pred_check_branch
          %3885 = sbr.rel (%p3883) target = $region144
        $region143: #{tpu_custom_call.1} parent=139 // pred_region
          %s3886 = sand.u32 %s422, 1
          %s3887 = scalar_lea.sflag [#allocation4], %s3886
          %s3888 = sand.u32 %s422, 1
          %s3889 = smul.addr %s3888, 128
          %s3890 = scalar_lea.vmem [#allocation20], %s3889
          %3891 = dma.done %s3887, 2048
        $region144: #{tpu_custom_call.1} parent=139 // pred_fallthru
          _
      $region140: #{tpu_custom_call.1} parent=5 // pred_fallthru
        _
    $region6: #{tpu_custom_call.1} parent=1 // loop_footer
      %s40 = sadd.s32 1, %s36
    $region7: #{tpu_custom_call.1} parent=1 // loop_footer_branch
      %35 = sbr.rel target = $region3
    $region8: #{tpu_custom_call.1} parent=1 // loop_exit
      _
    %3892 = vsyncpa [#allocation3], 1
    %s3893 = scalar_lea.sflag [#allocation3], 1
    %3894 = vsyncpa %s3893, 1
    %3895 = vsyncpa [#allocation6], 1
    %s3896 = scalar_lea.sflag [#allocation6], 1
    %3897 = vsyncpa %s3896, 1
    %3898 = vsyncpa [#allocation9], 1
    %3899 = vsyncpa [#allocation12], 1
    %3900 = vsyncpa [#allocation15], 1
    %3901 = vsyncpa [#allocation18], 1
    %3902 = vsyncpa [#allocation4], 1
    %s3903 = scalar_lea.sflag [#allocation4], 1
    %3904 = vsyncpa %s3903, 1

</llo_original>
